<compile_context>
chip_gen: v7x
topology: tpu7x:2x2x1
jax: 0.10.0
libtpu: 0.0.40
codegen_flags: <defaults>
</compile_context>

<pallas_src>
import functools

import jax
import jax.numpy as jnp
from jax.experimental import pallas as pl
from jax.experimental.pallas import tpu as pltpu


# ----------------------------------------------------------------------------- kernels

def _matmul_stats_kernel(a_ref, b_ref, o_ref, sum_ref, sq_ref):
    # (tm, K) @ (K, Cn) on the MXU with f32 accumulation; epilogue accumulates
    # per-column sum / sum-of-squares across the M grid axis (BatchNorm stats).
    @pl.when(pl.program_id(0) == 0)
    def _init():
        sum_ref[...] = jnp.zeros_like(sum_ref)
        sq_ref[...] = jnp.zeros_like(sq_ref)

    y = jnp.dot(a_ref[...], b_ref[...], preferred_element_type=jnp.float32)
    o_ref[...] = y
    sum_ref[...] += jnp.sum(y, axis=0, keepdims=True)
    sq_ref[...] += jnp.sum(y * y, axis=0, keepdims=True)


def _matmul_bias_act_kernel(a_ref, b_ref, bias_ref, o_ref, *, act):
    # matmul + bias + activation fused (used for the final conv -> tanh head)
    y = jnp.dot(a_ref[...], b_ref[...], preferred_element_type=jnp.float32) + bias_ref[...]
    if act == "tanh":
        y = jnp.tanh(y)
    elif act == "relu":
        y = jnp.maximum(y, 0.0)
    o_ref[...] = y


def _bn_act_kernel(x_ref, sum_ref, sq_ref, gamma_ref, beta_ref, *rest,
                   act, has_residual, inv_m, eps):
    # Train-mode BatchNorm: derive scale/shift from raw sums in-kernel, then
    # y = act(x * scale + shift [+ residual]).  All vectors are lane-tiled.
    if has_residual:
        res_ref, o_ref = rest
    else:
        (o_ref,) = rest
    mean = sum_ref[...] * inv_m
    var = jnp.maximum(sq_ref[...] * inv_m - mean * mean, 0.0)
    scale = gamma_ref[...] * jax.lax.rsqrt(var + eps)
    shift = beta_ref[...] - mean * scale
    y = x_ref[...] * scale + shift
    if has_residual:
        y = y + res_ref[...]
    if act == "relu":
        y = jnp.maximum(y, 0.0)
    elif act == "tanh":
        y = jnp.tanh(y)
    o_ref[...] = y


# ----------------------------------------------------------------------------- pallas wrappers

def _pick_tile(m):
    # Tiny tensors: a single block (grid of 1) avoids per-step pipeline overhead.
    if m <= 1024:
        return m
    for t in (1024, 512, 256, 128, 64, 32, 16, 8):
        if m % t == 0:
            return t
    return m


def matmul_stats(a, b):
    """(M,K)@(K,Cn) with fused per-column BatchNorm sum/sumsq accumulation."""
    m, k = a.shape
    _, cn = b.shape
    tm = _pick_tile(m)
    return pl.pallas_call(
        _matmul_stats_kernel,
        out_shape=(jax.ShapeDtypeStruct((m, cn), jnp.float32),
                   jax.ShapeDtypeStruct((1, cn), jnp.float32),
                   jax.ShapeDtypeStruct((1, cn), jnp.float32)),
        grid=(m // tm,),
        in_specs=[pl.BlockSpec((tm, k), lambda i: (i, 0)),
                  pl.BlockSpec((k, cn), lambda i: (0, 0))],
        out_specs=(pl.BlockSpec((tm, cn), lambda i: (i, 0)),
                   pl.BlockSpec((1, cn), lambda i: (0, 0)),
                   pl.BlockSpec((1, cn), lambda i: (0, 0))),
        # sum/sq accumulators are grid-resident -> this axis MUST stay "arbitrary"
        compiler_params=pltpu.CompilerParams(dimension_semantics=("arbitrary",)),
    )(a.astype(jnp.bfloat16), b.astype(jnp.bfloat16))


def matmul_bias_act(a, b, bias, act):
    m, k = a.shape
    _, cn = b.shape
    tm = _pick_tile(m)
    kernel = functools.partial(_matmul_bias_act_kernel, act=act)
    return pl.pallas_call(
        kernel,
        out_shape=jax.ShapeDtypeStruct((m, cn), jnp.float32),
        grid=(m // tm,),
        in_specs=[pl.BlockSpec((tm, k), lambda i: (i, 0)),
                  pl.BlockSpec((k, cn), lambda i: (0, 0)),
                  pl.BlockSpec((1, cn), lambda i: (0, 0))],
        out_specs=pl.BlockSpec((tm, cn), lambda i: (i, 0)),
        compiler_params=pltpu.CompilerParams(dimension_semantics=("parallel",)),
    )(a.astype(jnp.bfloat16), b.astype(jnp.bfloat16),
      bias.reshape(1, cn).astype(jnp.float32))


def fused_bn_act(x2d, s, sq, gamma, beta, count, act, channels, residual2d=None,
                 eps=1e-5):
    """Train-mode BatchNorm2d (batch stats, biased var) + activation (+residual).

    x2d: (M, L) where the per-channel pattern along L repeats with period
    `channels`.  When possible the tensor is repacked lane-dense to
    (M*L/128, 128) so the VPU sees full 128-lane vectors and stores are dense.
    """
    m, l = x2d.shape
    c = channels
    total = m * l
    if total % 128 == 0 and 128 % c == 0 and l % c == 0:
        rows, lanes = total // 128, 128
        xr = x2d.reshape(rows, lanes)
        rr = residual2d.reshape(rows, lanes) if residual2d is not None else None
    else:
        rows, lanes = m, l
        xr, rr = x2d, residual2d
    reps = lanes // c

    def lane_vec(v):
        return jnp.tile(v.reshape(1, c).astype(jnp.float32), (1, reps))

    tm = _pick_tile(rows)
    kernel = functools.partial(_bn_act_kernel, act=act,
                               has_residual=residual2d is not None,
                               inv_m=1.0 / float(count), eps=eps)
    in_specs = [pl.BlockSpec((tm, lanes), lambda i: (i, 0))] + \
               [pl.BlockSpec((1, lanes), lambda i: (0, 0))] * 4
    args = [xr, lane_vec(s), lane_vec(sq), lane_vec(gamma), lane_vec(beta)]
    if residual2d is not None:
        in_specs.append(pl.BlockSpec((tm, lanes), lambda i: (i, 0)))
        args.append(rr)
    y = pl.pallas_call(
        kernel,
        out_shape=jax.ShapeDtypeStruct((rows, lanes), jnp.float32),
        grid=(rows // tm,),
        in_specs=in_specs,
        out_specs=pl.BlockSpec((tm, lanes), lambda i: (i, 0)),
        compiler_params=pltpu.CompilerParams(dimension_semantics=("parallel",)),
    )(*args)
    return y.reshape(m, l)


# ----------------------------------------------------------------------------- conv / norm glue

def reflect_pad(x, p):
    return jnp.pad(x, ((0, 0), (p, p), (p, p), (0, 0)), mode="reflect")


def zero_pad(x, p):
    return jnp.pad(x, ((0, 0), (p, p), (p, p), (0, 0)))


def _im2col(x, kh, kw, stride=1, dilation=1):
    # TODO(synk): at real GlobalGenerator resolutions replace the kh*kw patch
    # blow-up in HBM with in-kernel tap accumulation (grid axis over taps); at
    # these toy sizes the XLA-side im2col in bf16 is negligible.
    n, hp, wp, cin = x.shape
    ho = (hp - (kh - 1) * dilation - 1) // stride + 1
    wo = (wp - (kw - 1) * dilation - 1) // stride + 1
    cols = []
    for i in range(kh):
        for j in range(kw):
            cols.append(
                x[:, i * dilation: i * dilation + (ho - 1) * stride + 1: stride,
                     j * dilation: j * dilation + (wo - 1) * stride + 1: stride, :])
    patches = jnp.concatenate(cols, axis=-1).reshape(n * ho * wo, kh * kw * cin)
    return patches, (n, ho, wo)


def conv_bn_act(x_padded, w, gamma, beta, stride=1, dilation=1, act="relu",
                residual=None):
    """Conv2d (bias dropped: cancels under train-mode BN) -> BatchNorm -> act."""
    cout, cin, kh, kw = w.shape
    patches, (n, ho, wo) = _im2col(x_padded.astype(jnp.bfloat16), kh, kw,
                                   stride, dilation)
    wmat = jnp.transpose(w, (2, 3, 1, 0)).reshape(kh * kw * cin, cout)
    out2d, s, sq = matmul_stats(patches, wmat)
    resf = residual.reshape(n * ho * wo, cout) if residual is not None else None
    y2d = fused_bn_act(out2d, s.reshape(cout), sq.reshape(cout), gamma, beta,
                       count=n * ho * wo, act=act, channels=cout, residual2d=resf)
    return y2d.reshape(n, ho, wo, cout)


def convt_bn_act(x, w_t, gamma, beta, act="relu"):
    """ConvTranspose2d(k=3, s=2, p=1, output_padding=1) via sub-pixel
    decomposition (single matmul over 4 input taps -> 4 interleaved output
    phases), fused with train-mode BatchNorm + activation.  Bias dropped."""
    n, h, w, cin = x.shape
    _, cout, _, _ = w_t.shape                     # torch layout (Cin, Cout, KH, KW)
    xb = x.astype(jnp.bfloat16)
    xp = jnp.pad(xb, ((0, 0), (0, 1), (0, 1), (0, 0)))
    taps = [xb,                                   # x[i,   j  ]
            xp[:, :h, 1:w + 1, :],                # x[i,   j+1]
            xp[:, 1:h + 1, :w, :],                # x[i+1, j  ]
            xp[:, 1:h + 1, 1:w + 1, :]]           # x[i+1, j+1]
    patches = jnp.concatenate(taps, axis=-1).reshape(n * h * w, 4 * cin)

    def W(a, b):
        return w_t[:, :, a, b]                    # (cin, cout)
    Z = jnp.zeros((cin, cout), w_t.dtype)
    # column groups = output phases (dh, dw) in order (0,0),(0,1),(1,0),(1,1)
    B = jnp.concatenate([
        jnp.concatenate([W(1, 1), W(1, 2), W(2, 1), W(2, 2)], axis=1),
        jnp.concatenate([Z,       W(1, 0), Z,       W(2, 0)], axis=1),
        jnp.concatenate([Z,       Z,       W(0, 1), W(0, 2)], axis=1),
        jnp.concatenate([Z,       Z,       Z,       W(0, 0)], axis=1),
    ], axis=0)                                    # (4*cin, 4*cout)

    out2d, s, sq = matmul_stats(patches, B)       # (M, 4*cout)
    s_c = s.reshape(4, cout).sum(axis=0)          # fold the 4 phase groups
    sq_c = sq.reshape(4, cout).sum(axis=0)
    y2d = fused_bn_act(out2d, s_c, sq_c, gamma, beta, count=4 * n * h * w,
                       act=act, channels=cout)
    # interleave the 4 phases into the (2H, 2W) output grid
    y = y2d.reshape(n, h, w, 2, 2, cout).transpose(0, 1, 3, 2, 4, 5)
    return y.reshape(n, 2 * h, 2 * w, cout)


def conv_bias_act(x_padded, w, b, act):
    """Final conv: bias + activation fused into the matmul epilogue."""
    cout, cin, kh, kw = w.shape
    patches, (n, ho, wo) = _im2col(x_padded.astype(jnp.bfloat16), kh, kw)
    wmat = jnp.transpose(w, (2, 3, 1, 0)).reshape(kh * kw * cin, cout)
    out = matmul_bias_act(patches, wmat, b, act=act)
    return out.reshape(n, ho, wo, cout)


# ----------------------------------------------------------------------------- model

def init_params(key, input_nc=4, output_nc=3, ngf=8, n_downsampling=2, n_blocks=2,
                max_features=1024):
    keys = iter(jax.random.split(key, 128))

    def conv_w(cin, cout, k):
        return 0.02 * jax.random.normal(next(keys), (cout, cin, k, k), jnp.float32)

    def convt_w(cin, cout, k):
        return 0.02 * jax.random.normal(next(keys), (cin, cout, k, k), jnp.float32)

    def bn_p(c):
        return {"gamma": 1.0 + 0.02 * jax.random.normal(next(keys), (c,), jnp.float32),
                "beta": jnp.zeros((c,), jnp.float32)}

    # NOTE: conv biases that precede train-mode BatchNorm cancel exactly in
    # shift = beta - mean*scale, so they are omitted from the parameters.
    params = {"stem": {"w": conv_w(input_nc, ngf, 7), **bn_p(ngf)}}

    params["down"] = []
    for i in range(n_downsampling):
        mult = 2 ** i
        cin = min(max_features, ngf * mult)
        cout = min(max_features, ngf * mult * 2)
        params["down"].append({"w": conv_w(cin, cout, 3), **bn_p(cout)})

    feats = min(max_features, ngf * 2 ** n_downsampling)
    params["blocks"] = []
    for _ in range(n_blocks):
        n1, n2 = bn_p(feats), bn_p(feats)
        params["blocks"].append({
            "w1": conv_w(feats, feats, 3), "g1": n1["gamma"], "be1": n1["beta"],
            "w2": conv_w(feats, feats, 3), "g2": n2["gamma"], "be2": n2["beta"]})

    params["up"] = []
    for i in range(n_downsampling):
        mult = 2 ** (n_downsampling - i)
        cin = min(max_features, ngf * mult)
        cout = min(max_features, int(ngf * mult / 2))
        params["up"].append({"w": convt_w(cin, cout, 3), **bn_p(cout)})

    params["out"] = {"w": conv_w(ngf, output_nc, 7),
                     "b": jnp.zeros((output_nc,), jnp.float32)}
    return params


def global_generator_forward(params, x_nchw):
    # layout: NCHW in / NCHW out (PyTorch convention); NHWC inside.
    x = jnp.transpose(x_nchw, (0, 2, 3, 1)).astype(jnp.float32)

    # stem: ReflectionPad2d(3) -> Conv 7x7 -> BN -> ReLU
    p = params["stem"]
    x = conv_bn_act(reflect_pad(x, 3), p["w"], p["gamma"], p["beta"], act="relu")

    # downsampling: Conv 3x3 s2 p1 -> BN -> ReLU
    for p in params["down"]:
        x = conv_bn_act(zero_pad(x, 1), p["w"], p["gamma"], p["beta"],
                        stride=2, act="relu")

    # resnet blocks: x + BN(Conv(ReflPad(ReLU(BN(Conv(ReflPad(x)))))))
    for p in params["blocks"]:
        r = conv_bn_act(reflect_pad(x, 1), p["w1"], p["g1"], p["be1"], act="relu")
        x = conv_bn_act(reflect_pad(r, 1), p["w2"], p["g2"], p["be2"],
                        act="none", residual=x)

    # upsampling: ConvTranspose 3x3 s2 p1 op1 -> BN -> ReLU
    for p in params["up"]:
        x = convt_bn_act(x, p["w"], p["gamma"], p["beta"], act="relu")

    # out: ReflectionPad2d(3) -> Conv 7x7 (+bias) -> tanh (fused epilogue)
    p = params["out"]
    x = conv_bias_act(reflect_pad(x, 3), p["w"], p["b"], act="tanh")

    return jnp.transpose(x, (0, 3, 1, 2))


# ----------------------------------------------------------------------------- main

if __name__ == "__main__":
    key = jax.random.PRNGKey(0)
    k_param, k_input = jax.random.split(key)

    input_nc, output_nc = 4, 3
    batch, spatial = 2, 16

    params = init_params(k_param, input_nc=input_nc, output_nc=output_nc,
                         ngf=8, n_downsampling=2, n_blocks=2)
    x = jax.random.normal(k_input, (batch, input_nc, spatial, spatial), jnp.float32)

    fwd = jax.jit(global_generator_forward)
    out = jax.block_until_ready(fwd(params, x))

    assert out.shape == (batch, output_nc, spatial, spatial), out.shape
    assert bool(jnp.all(jnp.isfinite(out)))
    print("KERNEL_OK")
</pallas_src>

<mosaic_0001>
module attributes {stable_mosaic.version = 11 : i64} {
  func.func @_matmul_stats_kernel(%arg0: i32, %arg1: memref<512x196xbf16, #tpu.memory_space<vmem>>, %arg2: memref<196x8xbf16, #tpu.memory_space<vmem>>, %arg3: memref<512x8xf32, #tpu.memory_space<vmem>>, %arg4: memref<1x8xf32, #tpu.memory_space<vmem>>, %arg5: memref<1x8xf32, #tpu.memory_space<vmem>>) attributes {dimension_semantics = [#tpu.dimension_semantics<arbitrary>], iteration_bounds = array<i64: 1>, scalar_prefetch = 0 : i64, scratch_operands = 0 : i64, tpu.core_type = #tpu.core_type<tc>, window_params = [{transform_indices = @transform_0, window_bounds = array<i64: 512, 196>}, {pipeline_mode = #tpu.pipeline_mode<synchronous>, transform_indices = @transform_1, window_bounds = array<i64: 196, 8>}, {transform_indices = @transform_2, window_bounds = array<i64: 512, 8>}, {pipeline_mode = #tpu.pipeline_mode<synchronous>, transform_indices = @transform_3, window_bounds = array<i64: 1, 8>}, {pipeline_mode = #tpu.pipeline_mode<synchronous>, transform_indices = @transform_4, window_bounds = array<i64: 1, 8>}]} {
    %c0_i32 = arith.constant 0 : i32
    %0 = arith.cmpi eq, %arg0, %c0_i32 : i32
    %1 = arith.extui %0 : i1 to i32
    %c0_i32_0 = arith.constant 0 : i32
    %2 = arith.cmpi ne, %1, %c0_i32_0 : i32
    scf.if %2 {
      %cst_16 = arith.constant 0.000000e+00 : f32
      %18 = vector.broadcast %cst_16 : f32 to vector<1x8xf32>
      %c0_17 = arith.constant 0 : index
      %c0_18 = arith.constant 0 : index
      %19 = vector.load %arg4[%c0_17, %c0_18] : memref<1x8xf32, #tpu.memory_space<vmem>>, vector<1x8xf32>
      tpu.vector_store %arg4[%c0_17, %c0_18], %18 {strides = array<i32>} : memref<1x8xf32, #tpu.memory_space<vmem>>, vector<1x8xf32>,
      %cst_19 = arith.constant 0.000000e+00 : f32
      %20 = vector.broadcast %cst_19 : f32 to vector<1x8xf32>
      %c0_20 = arith.constant 0 : index
      %c0_21 = arith.constant 0 : index
      %21 = vector.load %arg5[%c0_20, %c0_21] : memref<1x8xf32, #tpu.memory_space<vmem>>, vector<1x8xf32>
      tpu.vector_store %arg5[%c0_20, %c0_21], %20 {strides = array<i32>} : memref<1x8xf32, #tpu.memory_space<vmem>>, vector<1x8xf32>,
    } else {
    }
    %c0 = arith.constant 0 : index
    %c0_1 = arith.constant 0 : index
    %3 = vector.load %arg1[%c0, %c0_1] : memref<512x196xbf16, #tpu.memory_space<vmem>>, vector<512x196xbf16>
    %c0_2 = arith.constant 0 : index
    %c0_3 = arith.constant 0 : index
    %4 = vector.load %arg2[%c0_2, %c0_3] : memref<196x8xbf16, #tpu.memory_space<vmem>>, vector<196x8xbf16>
    %cst = arith.constant dense<0.000000e+00> : vector<512x8xf32>
    %5 = tpu.matmul %3, %4, %cst {dimension_numbers = #tpu.dot_dimension_numbers<[1], [0], [0], [1], [0, 0, 1, 1], [], []>} : vector<512x196xbf16>, vector<196x8xbf16>, vector<512x8xf32> -> vector<512x8xf32>
    %c0_4 = arith.constant 0 : index
    %c0_5 = arith.constant 0 : index
    %6 = vector.load %arg3[%c0_4, %c0_5] : memref<512x8xf32, #tpu.memory_space<vmem>>, vector<512x8xf32>
    tpu.vector_store %arg3[%c0_4, %c0_5], %5 {strides = array<i32>} : memref<512x8xf32, #tpu.memory_space<vmem>>, vector<512x8xf32>,
    %c0_6 = arith.constant 0 : index
    %c0_7 = arith.constant 0 : index
    %7 = vector.load %arg4[%c0_6, %c0_7] : memref<1x8xf32, #tpu.memory_space<vmem>>, vector<1x8xf32>
    %cst_8 = arith.constant dense<0.000000e+00> : vector<8xf32>
    %8 = vector.multi_reduction <add>, %5, %cst_8 [0] : vector<512x8xf32> to vector<8xf32>
    %9 = vector.shape_cast %8 : vector<8xf32> to vector<1x8xf32>
    %10 = arith.addf %7, %9 : vector<1x8xf32>
    %c0_9 = arith.constant 0 : index
    %c0_10 = arith.constant 0 : index
    %11 = vector.load %arg4[%c0_9, %c0_10] : memref<1x8xf32, #tpu.memory_space<vmem>>, vector<1x8xf32>
    tpu.vector_store %arg4[%c0_9, %c0_10], %10 {strides = array<i32>} : memref<1x8xf32, #tpu.memory_space<vmem>>, vector<1x8xf32>,
    %c0_11 = arith.constant 0 : index
    %c0_12 = arith.constant 0 : index
    %12 = vector.load %arg5[%c0_11, %c0_12] : memref<1x8xf32, #tpu.memory_space<vmem>>, vector<1x8xf32>
    %13 = arith.mulf %5, %5 : vector<512x8xf32>
    %cst_13 = arith.constant dense<0.000000e+00> : vector<8xf32>
    %14 = vector.multi_reduction <add>, %13, %cst_13 [0] : vector<512x8xf32> to vector<8xf32>
    %15 = vector.shape_cast %14 : vector<8xf32> to vector<1x8xf32>
    %16 = arith.addf %12, %15 : vector<1x8xf32>
    %c0_14 = arith.constant 0 : index
    %c0_15 = arith.constant 0 : index
    %17 = vector.load %arg5[%c0_14, %c0_15] : memref<1x8xf32, #tpu.memory_space<vmem>>, vector<1x8xf32>
    tpu.vector_store %arg5[%c0_14, %c0_15], %16 {strides = array<i32>} : memref<1x8xf32, #tpu.memory_space<vmem>>, vector<1x8xf32>,
    return
  }
  func.func @transform_0(%arg0: i32) -> (i32, i32) {
    %c0_i32 = arith.constant 0 : i32
    %c0_i32_0 = arith.constant 0 : i32
    return %arg0, %c0_i32 : i32, i32
  }
  func.func @transform_1(%arg0: i32) -> (i32, i32) {
    %c0_i32 = arith.constant 0 : i32
    %c0_i32_0 = arith.constant 0 : i32
    %c0_i32_1 = arith.constant 0 : i32
    return %c0_i32, %c0_i32_0 : i32, i32
  }
  func.func @transform_2(%arg0: i32) -> (i32, i32) {
    %c0_i32 = arith.constant 0 : i32
    %c0_i32_0 = arith.constant 0 : i32
    return %arg0, %c0_i32 : i32, i32
  }
  func.func @transform_3(%arg0: i32) -> (i32, i32) {
    %c0_i32 = arith.constant 0 : i32
    %c0_i32_0 = arith.constant 0 : i32
    %c0_i32_1 = arith.constant 0 : i32
    return %c0_i32, %c0_i32_0 : i32, i32
  }
  func.func @transform_4(%arg0: i32) -> (i32, i32) {
    %c0_i32 = arith.constant 0 : i32
    %c0_i32_0 = arith.constant 0 : i32
    %c0_i32_1 = arith.constant 0 : i32
    return %c0_i32, %c0_i32_0 : i32, i32
  }
}

module attributes {stable_mosaic.version = 11 : i64} {
  func.func @_bn_act_kernel(%arg0: i32, %arg1: memref<32x128xf32, #tpu.memory_space<vmem>>, %arg2: memref<1x128xf32, #tpu.memory_space<vmem>>, %arg3: memref<1x128xf32, #tpu.memory_space<vmem>>, %arg4: memref<1x128xf32, #tpu.memory_space<vmem>>, %arg5: memref<1x128xf32, #tpu.memory_space<vmem>>, %arg6: memref<32x128xf32, #tpu.memory_space<vmem>>) attributes {dimension_semantics = [#tpu.dimension_semantics<parallel>], iteration_bounds = array<i64: 1>, scalar_prefetch = 0 : i64, scratch_operands = 0 : i64, tpu.core_type = #tpu.core_type<tc>, window_params = [{transform_indices = @transform_0, window_bounds = array<i64: 32, 128>}, {pipeline_mode = #tpu.pipeline_mode<synchronous>, transform_indices = @transform_1, window_bounds = array<i64: 1, 128>}, {pipeline_mode = #tpu.pipeline_mode<synchronous>, transform_indices = @transform_2, window_bounds = array<i64: 1, 128>}, {pipeline_mode = #tpu.pipeline_mode<synchronous>, transform_indices = @transform_3, window_bounds = array<i64: 1, 128>}, {pipeline_mode = #tpu.pipeline_mode<synchronous>, transform_indices = @transform_4, window_bounds = array<i64: 1, 128>}, {transform_indices = @transform_5, window_bounds = array<i64: 32, 128>}]} {
    %c0 = arith.constant 0 : index
    %c0_0 = arith.constant 0 : index
    %0 = vector.load %arg2[%c0, %c0_0] : memref<1x128xf32, #tpu.memory_space<vmem>>, vector<1x128xf32>
    %cst = arith.constant 0.001953125 : f32
    %1 = vector.broadcast %cst : f32 to vector<1x128xf32>
    %2 = arith.mulf %0, %1 : vector<1x128xf32>
    %c0_1 = arith.constant 0 : index
    %c0_2 = arith.constant 0 : index
    %3 = vector.load %arg3[%c0_1, %c0_2] : memref<1x128xf32, #tpu.memory_space<vmem>>, vector<1x128xf32>
    %cst_3 = arith.constant 0.001953125 : f32
    %4 = vector.broadcast %cst_3 : f32 to vector<1x128xf32>
    %5 = arith.mulf %3, %4 : vector<1x128xf32>
    %6 = arith.mulf %2, %2 : vector<1x128xf32>
    %7 = arith.subf %5, %6 : vector<1x128xf32>
    %cst_4 = arith.constant 0.000000e+00 : f32
    %8 = vector.broadcast %cst_4 : f32 to vector<1x128xf32>
    %9 = arith.maximumf %7, %8 : vector<1x128xf32>
    %c0_5 = arith.constant 0 : index
    %c0_6 = arith.constant 0 : index
    %10 = vector.load %arg4[%c0_5, %c0_6] : memref<1x128xf32, #tpu.memory_space<vmem>>, vector<1x128xf32>
    %cst_7 = arith.constant 9.99999974E-6 : f32
    %11 = vector.broadcast %cst_7 : f32 to vector<1x128xf32>
    %12 = arith.addf %9, %11 : vector<1x128xf32>
    %13 = math.rsqrt %12 : vector<1x128xf32>
    %14 = arith.mulf %10, %13 : vector<1x128xf32>
    %c0_8 = arith.constant 0 : index
    %c0_9 = arith.constant 0 : index
    %15 = vector.load %arg5[%c0_8, %c0_9] : memref<1x128xf32, #tpu.memory_space<vmem>>, vector<1x128xf32>
    %16 = arith.mulf %2, %14 : vector<1x128xf32>
    %17 = arith.subf %15, %16 : vector<1x128xf32>
    %c0_10 = arith.constant 0 : index
    %c0_11 = arith.constant 0 : index
    %18 = vector.load %arg1[%c0_10, %c0_11] : memref<32x128xf32, #tpu.memory_space<vmem>>, vector<32x128xf32>
    %19 = vector.broadcast %14 : vector<1x128xf32> to vector<32x128xf32>
    %20 = arith.mulf %18, %19 : vector<32x128xf32>
    %21 = vector.broadcast %17 : vector<1x128xf32> to vector<32x128xf32>
    %22 = arith.addf %20, %21 : vector<32x128xf32>
    %cst_12 = arith.constant 0.000000e+00 : f32
    %23 = vector.broadcast %cst_12 : f32 to vector<32x128xf32>
    %24 = arith.maximumf %22, %23 : vector<32x128xf32>
    %c0_13 = arith.constant 0 : index
    %c0_14 = arith.constant 0 : index
    %25 = vector.load %arg6[%c0_13, %c0_14] : memref<32x128xf32, #tpu.memory_space<vmem>>, vector<32x128xf32>
    tpu.vector_store %arg6[%c0_13, %c0_14], %24 {strides = array<i32>} : memref<32x128xf32, #tpu.memory_space<vmem>>, vector<32x128xf32>,
    return
  }
  func.func @transform_0(%arg0: i32) -> (i32, i32) {
    %c0_i32 = arith.constant 0 : i32
    %c0_i32_0 = arith.constant 0 : i32
    return %arg0, %c0_i32 : i32, i32
  }
  func.func @transform_1(%arg0: i32) -> (i32, i32) {
    %c0_i32 = arith.constant 0 : i32
    %c0_i32_0 = arith.constant 0 : i32
    %c0_i32_1 = arith.constant 0 : i32
    return %c0_i32, %c0_i32_0 : i32, i32
  }
  func.func @transform_2(%arg0: i32) -> (i32, i32) {
    %c0_i32 = arith.constant 0 : i32
    %c0_i32_0 = arith.constant 0 : i32
    %c0_i32_1 = arith.constant 0 : i32
    return %c0_i32, %c0_i32_0 : i32, i32
  }
  func.func @transform_3(%arg0: i32) -> (i32, i32) {
    %c0_i32 = arith.constant 0 : i32
    %c0_i32_0 = arith.constant 0 : i32
    %c0_i32_1 = arith.constant 0 : i32
    return %c0_i32, %c0_i32_0 : i32, i32
  }
  func.func @transform_4(%arg0: i32) -> (i32, i32) {
    %c0_i32 = arith.constant 0 : i32
    %c0_i32_0 = arith.constant 0 : i32
    %c0_i32_1 = arith.constant 0 : i32
    return %c0_i32, %c0_i32_0 : i32, i32
  }
  func.func @transform_5(%arg0: i32) -> (i32, i32) {
    %c0_i32 = arith.constant 0 : i32
    %c0_i32_0 = arith.constant 0 : i32
    return %arg0, %c0_i32 : i32, i32
  }
}

module attributes {stable_mosaic.version = 11 : i64} {
  func.func @_matmul_stats_kernel(%arg0: i32, %arg1: memref<128x72xbf16, #tpu.memory_space<vmem>>, %arg2: memref<72x16xbf16, #tpu.memory_space<vmem>>, %arg3: memref<128x16xf32, #tpu.memory_space<vmem>>, %arg4: memref<1x16xf32, #tpu.memory_space<vmem>>, %arg5: memref<1x16xf32, #tpu.memory_space<vmem>>) attributes {dimension_semantics = [#tpu.dimension_semantics<arbitrary>], iteration_bounds = array<i64: 1>, scalar_prefetch = 0 : i64, scratch_operands = 0 : i64, tpu.core_type = #tpu.core_type<tc>, window_params = [{transform_indices = @transform_0, window_bounds = array<i64: 128, 72>}, {pipeline_mode = #tpu.pipeline_mode<synchronous>, transform_indices = @transform_1, window_bounds = array<i64: 72, 16>}, {transform_indices = @transform_2, window_bounds = array<i64: 128, 16>}, {pipeline_mode = #tpu.pipeline_mode<synchronous>, transform_indices = @transform_3, window_bounds = array<i64: 1, 16>}, {pipeline_mode = #tpu.pipeline_mode<synchronous>, transform_indices = @transform_4, window_bounds = array<i64: 1, 16>}]} {
    %c0_i32 = arith.constant 0 : i32
    %0 = arith.cmpi eq, %arg0, %c0_i32 : i32
    %1 = arith.extui %0 : i1 to i32
    %c0_i32_0 = arith.constant 0 : i32
    %2 = arith.cmpi ne, %1, %c0_i32_0 : i32
    scf.if %2 {
      %cst_16 = arith.constant 0.000000e+00 : f32
      %18 = vector.broadcast %cst_16 : f32 to vector<1x16xf32>
      %c0_17 = arith.constant 0 : index
      %c0_18 = arith.constant 0 : index
      %19 = vector.load %arg4[%c0_17, %c0_18] : memref<1x16xf32, #tpu.memory_space<vmem>>, vector<1x16xf32>
      tpu.vector_store %arg4[%c0_17, %c0_18], %18 {strides = array<i32>} : memref<1x16xf32, #tpu.memory_space<vmem>>, vector<1x16xf32>,
      %cst_19 = arith.constant 0.000000e+00 : f32
      %20 = vector.broadcast %cst_19 : f32 to vector<1x16xf32>
      %c0_20 = arith.constant 0 : index
      %c0_21 = arith.constant 0 : index
      %21 = vector.load %arg5[%c0_20, %c0_21] : memref<1x16xf32, #tpu.memory_space<vmem>>, vector<1x16xf32>
      tpu.vector_store %arg5[%c0_20, %c0_21], %20 {strides = array<i32>} : memref<1x16xf32, #tpu.memory_space<vmem>>, vector<1x16xf32>,
    } else {
    }
    %c0 = arith.constant 0 : index
    %c0_1 = arith.constant 0 : index
    %3 = vector.load %arg1[%c0, %c0_1] : memref<128x72xbf16, #tpu.memory_space<vmem>>, vector<128x72xbf16>
    %c0_2 = arith.constant 0 : index
    %c0_3 = arith.constant 0 : index
    %4 = vector.load %arg2[%c0_2, %c0_3] : memref<72x16xbf16, #tpu.memory_space<vmem>>, vector<72x16xbf16>
    %cst = arith.constant dense<0.000000e+00> : vector<128x16xf32>
    %5 = tpu.matmul %3, %4, %cst {dimension_numbers = #tpu.dot_dimension_numbers<[1], [0], [0], [1], [0, 0, 1, 1], [], []>} : vector<128x72xbf16>, vector<72x16xbf16>, vector<128x16xf32> -> vector<128x16xf32>
    %c0_4 = arith.constant 0 : index
    %c0_5 = arith.constant 0 : index
    %6 = vector.load %arg3[%c0_4, %c0_5] : memref<128x16xf32, #tpu.memory_space<vmem>>, vector<128x16xf32>
    tpu.vector_store %arg3[%c0_4, %c0_5], %5 {strides = array<i32>} : memref<128x16xf32, #tpu.memory_space<vmem>>, vector<128x16xf32>,
    %c0_6 = arith.constant 0 : index
    %c0_7 = arith.constant 0 : index
    %7 = vector.load %arg4[%c0_6, %c0_7] : memref<1x16xf32, #tpu.memory_space<vmem>>, vector<1x16xf32>
    %cst_8 = arith.constant dense<0.000000e+00> : vector<16xf32>
    %8 = vector.multi_reduction <add>, %5, %cst_8 [0] : vector<128x16xf32> to vector<16xf32>
    %9 = vector.shape_cast %8 : vector<16xf32> to vector<1x16xf32>
    %10 = arith.addf %7, %9 : vector<1x16xf32>
    %c0_9 = arith.constant 0 : index
    %c0_10 = arith.constant 0 : index
    %11 = vector.load %arg4[%c0_9, %c0_10] : memref<1x16xf32, #tpu.memory_space<vmem>>, vector<1x16xf32>
    tpu.vector_store %arg4[%c0_9, %c0_10], %10 {strides = array<i32>} : memref<1x16xf32, #tpu.memory_space<vmem>>, vector<1x16xf32>,
    %c0_11 = arith.constant 0 : index
    %c0_12 = arith.constant 0 : index
    %12 = vector.load %arg5[%c0_11, %c0_12] : memref<1x16xf32, #tpu.memory_space<vmem>>, vector<1x16xf32>
    %13 = arith.mulf %5, %5 : vector<128x16xf32>
    %cst_13 = arith.constant dense<0.000000e+00> : vector<16xf32>
    %14 = vector.multi_reduction <add>, %13, %cst_13 [0] : vector<128x16xf32> to vector<16xf32>
    %15 = vector.shape_cast %14 : vector<16xf32> to vector<1x16xf32>
    %16 = arith.addf %12, %15 : vector<1x16xf32>
    %c0_14 = arith.constant 0 : index
    %c0_15 = arith.constant 0 : index
    %17 = vector.load %arg5[%c0_14, %c0_15] : memref<1x16xf32, #tpu.memory_space<vmem>>, vector<1x16xf32>
    tpu.vector_store %arg5[%c0_14, %c0_15], %16 {strides = array<i32>} : memref<1x16xf32, #tpu.memory_space<vmem>>, vector<1x16xf32>,
    return
  }
  func.func @transform_0(%arg0: i32) -> (i32, i32) {
    %c0_i32 = arith.constant 0 : i32
    %c0_i32_0 = arith.constant 0 : i32
    return %arg0, %c0_i32 : i32, i32
  }
  func.func @transform_1(%arg0: i32) -> (i32, i32) {
    %c0_i32 = arith.constant 0 : i32
    %c0_i32_0 = arith.constant 0 : i32
    %c0_i32_1 = arith.constant 0 : i32
    return %c0_i32, %c0_i32_0 : i32, i32
  }
  func.func @transform_2(%arg0: i32) -> (i32, i32) {
    %c0_i32 = arith.constant 0 : i32
    %c0_i32_0 = arith.constant 0 : i32
    return %arg0, %c0_i32 : i32, i32
  }
  func.func @transform_3(%arg0: i32) -> (i32, i32) {
    %c0_i32 = arith.constant 0 : i32
    %c0_i32_0 = arith.constant 0 : i32
    %c0_i32_1 = arith.constant 0 : i32
    return %c0_i32, %c0_i32_0 : i32, i32
  }
  func.func @transform_4(%arg0: i32) -> (i32, i32) {
    %c0_i32 = arith.constant 0 : i32
    %c0_i32_0 = arith.constant 0 : i32
    %c0_i32_1 = arith.constant 0 : i32
    return %c0_i32, %c0_i32_0 : i32, i32
  }
}

module attributes {stable_mosaic.version = 11 : i64} {
  func.func @_bn_act_kernel(%arg0: i32, %arg1: memref<16x128xf32, #tpu.memory_space<vmem>>, %arg2: memref<1x128xf32, #tpu.memory_space<vmem>>, %arg3: memref<1x128xf32, #tpu.memory_space<vmem>>, %arg4: memref<1x128xf32, #tpu.memory_space<vmem>>, %arg5: memref<1x128xf32, #tpu.memory_space<vmem>>, %arg6: memref<16x128xf32, #tpu.memory_space<vmem>>) attributes {dimension_semantics = [#tpu.dimension_semantics<parallel>], iteration_bounds = array<i64: 1>, scalar_prefetch = 0 : i64, scratch_operands = 0 : i64, tpu.core_type = #tpu.core_type<tc>, window_params = [{transform_indices = @transform_0, window_bounds = array<i64: 16, 128>}, {pipeline_mode = #tpu.pipeline_mode<synchronous>, transform_indices = @transform_1, window_bounds = array<i64: 1, 128>}, {pipeline_mode = #tpu.pipeline_mode<synchronous>, transform_indices = @transform_2, window_bounds = array<i64: 1, 128>}, {pipeline_mode = #tpu.pipeline_mode<synchronous>, transform_indices = @transform_3, window_bounds = array<i64: 1, 128>}, {pipeline_mode = #tpu.pipeline_mode<synchronous>, transform_indices = @transform_4, window_bounds = array<i64: 1, 128>}, {transform_indices = @transform_5, window_bounds = array<i64: 16, 128>}]} {
    %c0 = arith.constant 0 : index
    %c0_0 = arith.constant 0 : index
    %0 = vector.load %arg2[%c0, %c0_0] : memref<1x128xf32, #tpu.memory_space<vmem>>, vector<1x128xf32>
    %cst = arith.constant 7.812500e-03 : f32
    %1 = vector.broadcast %cst : f32 to vector<1x128xf32>
    %2 = arith.mulf %0, %1 : vector<1x128xf32>
    %c0_1 = arith.constant 0 : index
    %c0_2 = arith.constant 0 : index
    %3 = vector.load %arg3[%c0_1, %c0_2] : memref<1x128xf32, #tpu.memory_space<vmem>>, vector<1x128xf32>
    %cst_3 = arith.constant 7.812500e-03 : f32
    %4 = vector.broadcast %cst_3 : f32 to vector<1x128xf32>
    %5 = arith.mulf %3, %4 : vector<1x128xf32>
    %6 = arith.mulf %2, %2 : vector<1x128xf32>
    %7 = arith.subf %5, %6 : vector<1x128xf32>
    %cst_4 = arith.constant 0.000000e+00 : f32
    %8 = vector.broadcast %cst_4 : f32 to vector<1x128xf32>
    %9 = arith.maximumf %7, %8 : vector<1x128xf32>
    %c0_5 = arith.constant 0 : index
    %c0_6 = arith.constant 0 : index
    %10 = vector.load %arg4[%c0_5, %c0_6] : memref<1x128xf32, #tpu.memory_space<vmem>>, vector<1x128xf32>
    %cst_7 = arith.constant 9.99999974E-6 : f32
    %11 = vector.broadcast %cst_7 : f32 to vector<1x128xf32>
    %12 = arith.addf %9, %11 : vector<1x128xf32>
    %13 = math.rsqrt %12 : vector<1x128xf32>
    %14 = arith.mulf %10, %13 : vector<1x128xf32>
    %c0_8 = arith.constant 0 : index
    %c0_9 = arith.constant 0 : index
    %15 = vector.load %arg5[%c0_8, %c0_9] : memref<1x128xf32, #tpu.memory_space<vmem>>, vector<1x128xf32>
    %16 = arith.mulf %2, %14 : vector<1x128xf32>
    %17 = arith.subf %15, %16 : vector<1x128xf32>
    %c0_10 = arith.constant 0 : index
    %c0_11 = arith.constant 0 : index
    %18 = vector.load %arg1[%c0_10, %c0_11] : memref<16x128xf32, #tpu.memory_space<vmem>>, vector<16x128xf32>
    %19 = vector.broadcast %14 : vector<1x128xf32> to vector<16x128xf32>
    %20 = arith.mulf %18, %19 : vector<16x128xf32>
    %21 = vector.broadcast %17 : vector<1x128xf32> to vector<16x128xf32>
    %22 = arith.addf %20, %21 : vector<16x128xf32>
    %cst_12 = arith.constant 0.000000e+00 : f32
    %23 = vector.broadcast %cst_12 : f32 to vector<16x128xf32>
    %24 = arith.maximumf %22, %23 : vector<16x128xf32>
    %c0_13 = arith.constant 0 : index
    %c0_14 = arith.constant 0 : index
    %25 = vector.load %arg6[%c0_13, %c0_14] : memref<16x128xf32, #tpu.memory_space<vmem>>, vector<16x128xf32>
    tpu.vector_store %arg6[%c0_13, %c0_14], %24 {strides = array<i32>} : memref<16x128xf32, #tpu.memory_space<vmem>>, vector<16x128xf32>,
    return
  }
  func.func @transform_0(%arg0: i32) -> (i32, i32) {
    %c0_i32 = arith.constant 0 : i32
    %c0_i32_0 = arith.constant 0 : i32
    return %arg0, %c0_i32 : i32, i32
  }
  func.func @transform_1(%arg0: i32) -> (i32, i32) {
    %c0_i32 = arith.constant 0 : i32
    %c0_i32_0 = arith.constant 0 : i32
    %c0_i32_1 = arith.constant 0 : i32
    return %c0_i32, %c0_i32_0 : i32, i32
  }
  func.func @transform_2(%arg0: i32) -> (i32, i32) {
    %c0_i32 = arith.constant 0 : i32
    %c0_i32_0 = arith.constant 0 : i32
    %c0_i32_1 = arith.constant 0 : i32
    return %c0_i32, %c0_i32_0 : i32, i32
  }
  func.func @transform_3(%arg0: i32) -> (i32, i32) {
    %c0_i32 = arith.constant 0 : i32
    %c0_i32_0 = arith.constant 0 : i32
    %c0_i32_1 = arith.constant 0 : i32
    return %c0_i32, %c0_i32_0 : i32, i32
  }
  func.func @transform_4(%arg0: i32) -> (i32, i32) {
    %c0_i32 = arith.constant 0 : i32
    %c0_i32_0 = arith.constant 0 : i32
    %c0_i32_1 = arith.constant 0 : i32
    return %c0_i32, %c0_i32_0 : i32, i32
  }
  func.func @transform_5(%arg0: i32) -> (i32, i32) {
    %c0_i32 = arith.constant 0 : i32
    %c0_i32_0 = arith.constant 0 : i32
    return %arg0, %c0_i32 : i32, i32
  }
}

module attributes {stable_mosaic.version = 11 : i64} {
  func.func @_matmul_stats_kernel(%arg0: i32, %arg1: memref<32x144xbf16, #tpu.memory_space<vmem>>, %arg2: memref<144x32xbf16, #tpu.memory_space<vmem>>, %arg3: memref<32x32xf32, #tpu.memory_space<vmem>>, %arg4: memref<1x32xf32, #tpu.memory_space<vmem>>, %arg5: memref<1x32xf32, #tpu.memory_space<vmem>>) attributes {dimension_semantics = [#tpu.dimension_semantics<arbitrary>], iteration_bounds = array<i64: 1>, scalar_prefetch = 0 : i64, scratch_operands = 0 : i64, tpu.core_type = #tpu.core_type<tc>, window_params = [{transform_indices = @transform_0, window_bounds = array<i64: 32, 144>}, {pipeline_mode = #tpu.pipeline_mode<synchronous>, transform_indices = @transform_1, window_bounds = array<i64: 144, 32>}, {transform_indices = @transform_2, window_bounds = array<i64: 32, 32>}, {pipeline_mode = #tpu.pipeline_mode<synchronous>, transform_indices = @transform_3, window_bounds = array<i64: 1, 32>}, {pipeline_mode = #tpu.pipeline_mode<synchronous>, transform_indices = @transform_4, window_bounds = array<i64: 1, 32>}]} {
    %c0_i32 = arith.constant 0 : i32
    %0 = arith.cmpi eq, %arg0, %c0_i32 : i32
    %1 = arith.extui %0 : i1 to i32
    %c0_i32_0 = arith.constant 0 : i32
    %2 = arith.cmpi ne, %1, %c0_i32_0 : i32
    scf.if %2 {
      %cst_16 = arith.constant 0.000000e+00 : f32
      %18 = vector.broadcast %cst_16 : f32 to vector<1x32xf32>
      %c0_17 = arith.constant 0 : index
      %c0_18 = arith.constant 0 : index
      %19 = vector.load %arg4[%c0_17, %c0_18] : memref<1x32xf32, #tpu.memory_space<vmem>>, vector<1x32xf32>
      tpu.vector_store %arg4[%c0_17, %c0_18], %18 {strides = array<i32>} : memref<1x32xf32, #tpu.memory_space<vmem>>, vector<1x32xf32>,
      %cst_19 = arith.constant 0.000000e+00 : f32
      %20 = vector.broadcast %cst_19 : f32 to vector<1x32xf32>
      %c0_20 = arith.constant 0 : index
      %c0_21 = arith.constant 0 : index
      %21 = vector.load %arg5[%c0_20, %c0_21] : memref<1x32xf32, #tpu.memory_space<vmem>>, vector<1x32xf32>
      tpu.vector_store %arg5[%c0_20, %c0_21], %20 {strides = array<i32>} : memref<1x32xf32, #tpu.memory_space<vmem>>, vector<1x32xf32>,
    } else {
    }
    %c0 = arith.constant 0 : index
    %c0_1 = arith.constant 0 : index
    %3 = vector.load %arg1[%c0, %c0_1] : memref<32x144xbf16, #tpu.memory_space<vmem>>, vector<32x144xbf16>
    %c0_2 = arith.constant 0 : index
    %c0_3 = arith.constant 0 : index
    %4 = vector.load %arg2[%c0_2, %c0_3] : memref<144x32xbf16, #tpu.memory_space<vmem>>, vector<144x32xbf16>
    %cst = arith.constant dense<0.000000e+00> : vector<32x32xf32>
    %5 = tpu.matmul %3, %4, %cst {dimension_numbers = #tpu.dot_dimension_numbers<[1], [0], [0], [1], [0, 0, 1, 1], [], []>} : vector<32x144xbf16>, vector<144x32xbf16>, vector<32x32xf32> -> vector<32x32xf32>
    %c0_4 = arith.constant 0 : index
    %c0_5 = arith.constant 0 : index
    %6 = vector.load %arg3[%c0_4, %c0_5] : memref<32x32xf32, #tpu.memory_space<vmem>>, vector<32x32xf32>
    tpu.vector_store %arg3[%c0_4, %c0_5], %5 {strides = array<i32>} : memref<32x32xf32, #tpu.memory_space<vmem>>, vector<32x32xf32>,
    %c0_6 = arith.constant 0 : index
    %c0_7 = arith.constant 0 : index
    %7 = vector.load %arg4[%c0_6, %c0_7] : memref<1x32xf32, #tpu.memory_space<vmem>>, vector<1x32xf32>
    %cst_8 = arith.constant dense<0.000000e+00> : vector<32xf32>
    %8 = vector.multi_reduction <add>, %5, %cst_8 [0] : vector<32x32xf32> to vector<32xf32>
    %9 = vector.shape_cast %8 : vector<32xf32> to vector<1x32xf32>
    %10 = arith.addf %7, %9 : vector<1x32xf32>
    %c0_9 = arith.constant 0 : index
    %c0_10 = arith.constant 0 : index
    %11 = vector.load %arg4[%c0_9, %c0_10] : memref<1x32xf32, #tpu.memory_space<vmem>>, vector<1x32xf32>
    tpu.vector_store %arg4[%c0_9, %c0_10], %10 {strides = array<i32>} : memref<1x32xf32, #tpu.memory_space<vmem>>, vector<1x32xf32>,
    %c0_11 = arith.constant 0 : index
    %c0_12 = arith.constant 0 : index
    %12 = vector.load %arg5[%c0_11, %c0_12] : memref<1x32xf32, #tpu.memory_space<vmem>>, vector<1x32xf32>
    %13 = arith.mulf %5, %5 : vector<32x32xf32>
    %cst_13 = arith.constant dense<0.000000e+00> : vector<32xf32>
    %14 = vector.multi_reduction <add>, %13, %cst_13 [0] : vector<32x32xf32> to vector<32xf32>
    %15 = vector.shape_cast %14 : vector<32xf32> to vector<1x32xf32>
    %16 = arith.addf %12, %15 : vector<1x32xf32>
    %c0_14 = arith.constant 0 : index
    %c0_15 = arith.constant 0 : index
    %17 = vector.load %arg5[%c0_14, %c0_15] : memref<1x32xf32, #tpu.memory_space<vmem>>, vector<1x32xf32>
    tpu.vector_store %arg5[%c0_14, %c0_15], %16 {strides = array<i32>} : memref<1x32xf32, #tpu.memory_space<vmem>>, vector<1x32xf32>,
    return
  }
  func.func @transform_0(%arg0: i32) -> (i32, i32) {
    %c0_i32 = arith.constant 0 : i32
    %c0_i32_0 = arith.constant 0 : i32
    return %arg0, %c0_i32 : i32, i32
  }
  func.func @transform_1(%arg0: i32) -> (i32, i32) {
    %c0_i32 = arith.constant 0 : i32
    %c0_i32_0 = arith.constant 0 : i32
    %c0_i32_1 = arith.constant 0 : i32
    return %c0_i32, %c0_i32_0 : i32, i32
  }
  func.func @transform_2(%arg0: i32) -> (i32, i32) {
    %c0_i32 = arith.constant 0 : i32
    %c0_i32_0 = arith.constant 0 : i32
    return %arg0, %c0_i32 : i32, i32
  }
  func.func @transform_3(%arg0: i32) -> (i32, i32) {
    %c0_i32 = arith.constant 0 : i32
    %c0_i32_0 = arith.constant 0 : i32
    %c0_i32_1 = arith.constant 0 : i32
    return %c0_i32, %c0_i32_0 : i32, i32
  }
  func.func @transform_4(%arg0: i32) -> (i32, i32) {
    %c0_i32 = arith.constant 0 : i32
    %c0_i32_0 = arith.constant 0 : i32
    %c0_i32_1 = arith.constant 0 : i32
    return %c0_i32, %c0_i32_0 : i32, i32
  }
}

module attributes {stable_mosaic.version = 11 : i64} {
  func.func @_bn_act_kernel(%arg0: i32, %arg1: memref<8x128xf32, #tpu.memory_space<vmem>>, %arg2: memref<1x128xf32, #tpu.memory_space<vmem>>, %arg3: memref<1x128xf32, #tpu.memory_space<vmem>>, %arg4: memref<1x128xf32, #tpu.memory_space<vmem>>, %arg5: memref<1x128xf32, #tpu.memory_space<vmem>>, %arg6: memref<8x128xf32, #tpu.memory_space<vmem>>) attributes {dimension_semantics = [#tpu.dimension_semantics<parallel>], iteration_bounds = array<i64: 1>, scalar_prefetch = 0 : i64, scratch_operands = 0 : i64, tpu.core_type = #tpu.core_type<tc>, window_params = [{transform_indices = @transform_0, window_bounds = array<i64: 8, 128>}, {pipeline_mode = #tpu.pipeline_mode<synchronous>, transform_indices = @transform_1, window_bounds = array<i64: 1, 128>}, {pipeline_mode = #tpu.pipeline_mode<synchronous>, transform_indices = @transform_2, window_bounds = array<i64: 1, 128>}, {pipeline_mode = #tpu.pipeline_mode<synchronous>, transform_indices = @transform_3, window_bounds = array<i64: 1, 128>}, {pipeline_mode = #tpu.pipeline_mode<synchronous>, transform_indices = @transform_4, window_bounds = array<i64: 1, 128>}, {transform_indices = @transform_5, window_bounds = array<i64: 8, 128>}]} {
    %c0 = arith.constant 0 : index
    %c0_0 = arith.constant 0 : index
    %0 = vector.load %arg2[%c0, %c0_0] : memref<1x128xf32, #tpu.memory_space<vmem>>, vector<1x128xf32>
    %cst = arith.constant 3.125000e-02 : f32
    %1 = vector.broadcast %cst : f32 to vector<1x128xf32>
    %2 = arith.mulf %0, %1 : vector<1x128xf32>
    %c0_1 = arith.constant 0 : index
    %c0_2 = arith.constant 0 : index
    %3 = vector.load %arg3[%c0_1, %c0_2] : memref<1x128xf32, #tpu.memory_space<vmem>>, vector<1x128xf32>
    %cst_3 = arith.constant 3.125000e-02 : f32
    %4 = vector.broadcast %cst_3 : f32 to vector<1x128xf32>
    %5 = arith.mulf %3, %4 : vector<1x128xf32>
    %6 = arith.mulf %2, %2 : vector<1x128xf32>
    %7 = arith.subf %5, %6 : vector<1x128xf32>
    %cst_4 = arith.constant 0.000000e+00 : f32
    %8 = vector.broadcast %cst_4 : f32 to vector<1x128xf32>
    %9 = arith.maximumf %7, %8 : vector<1x128xf32>
    %c0_5 = arith.constant 0 : index
    %c0_6 = arith.constant 0 : index
    %10 = vector.load %arg4[%c0_5, %c0_6] : memref<1x128xf32, #tpu.memory_space<vmem>>, vector<1x128xf32>
    %cst_7 = arith.constant 9.99999974E-6 : f32
    %11 = vector.broadcast %cst_7 : f32 to vector<1x128xf32>
    %12 = arith.addf %9, %11 : vector<1x128xf32>
    %13 = math.rsqrt %12 : vector<1x128xf32>
    %14 = arith.mulf %10, %13 : vector<1x128xf32>
    %c0_8 = arith.constant 0 : index
    %c0_9 = arith.constant 0 : index
    %15 = vector.load %arg5[%c0_8, %c0_9] : memref<1x128xf32, #tpu.memory_space<vmem>>, vector<1x128xf32>
    %16 = arith.mulf %2, %14 : vector<1x128xf32>
    %17 = arith.subf %15, %16 : vector<1x128xf32>
    %c0_10 = arith.constant 0 : index
    %c0_11 = arith.constant 0 : index
    %18 = vector.load %arg1[%c0_10, %c0_11] : memref<8x128xf32, #tpu.memory_space<vmem>>, vector<8x128xf32>
    %19 = vector.broadcast %14 : vector<1x128xf32> to vector<8x128xf32>
    %20 = arith.mulf %18, %19 : vector<8x128xf32>
    %21 = vector.broadcast %17 : vector<1x128xf32> to vector<8x128xf32>
    %22 = arith.addf %20, %21 : vector<8x128xf32>
    %cst_12 = arith.constant 0.000000e+00 : f32
    %23 = vector.broadcast %cst_12 : f32 to vector<8x128xf32>
    %24 = arith.maximumf %22, %23 : vector<8x128xf32>
    %c0_13 = arith.constant 0 : index
    %c0_14 = arith.constant 0 : index
    %25 = vector.load %arg6[%c0_13, %c0_14] : memref<8x128xf32, #tpu.memory_space<vmem>>, vector<8x128xf32>
    tpu.vector_store %arg6[%c0_13, %c0_14], %24 {strides = array<i32>} : memref<8x128xf32, #tpu.memory_space<vmem>>, vector<8x128xf32>,
    return
  }
  func.func @transform_0(%arg0: i32) -> (i32, i32) {
    %c0_i32 = arith.constant 0 : i32
    %c0_i32_0 = arith.constant 0 : i32
    return %arg0, %c0_i32 : i32, i32
  }
  func.func @transform_1(%arg0: i32) -> (i32, i32) {
    %c0_i32 = arith.constant 0 : i32
    %c0_i32_0 = arith.constant 0 : i32
    %c0_i32_1 = arith.constant 0 : i32
    return %c0_i32, %c0_i32_0 : i32, i32
  }
  func.func @transform_2(%arg0: i32) -> (i32, i32) {
    %c0_i32 = arith.constant 0 : i32
    %c0_i32_0 = arith.constant 0 : i32
    %c0_i32_1 = arith.constant 0 : i32
    return %c0_i32, %c0_i32_0 : i32, i32
  }
  func.func @transform_3(%arg0: i32) -> (i32, i32) {
    %c0_i32 = arith.constant 0 : i32
    %c0_i32_0 = arith.constant 0 : i32
    %c0_i32_1 = arith.constant 0 : i32
    return %c0_i32, %c0_i32_0 : i32, i32
  }
  func.func @transform_4(%arg0: i32) -> (i32, i32) {
    %c0_i32 = arith.constant 0 : i32
    %c0_i32_0 = arith.constant 0 : i32
    %c0_i32_1 = arith.constant 0 : i32
    return %c0_i32, %c0_i32_0 : i32, i32
  }
  func.func @transform_5(%arg0: i32) -> (i32, i32) {
    %c0_i32 = arith.constant 0 : i32
    %c0_i32_0 = arith.constant 0 : i32
    return %arg0, %c0_i32 : i32, i32
  }
}

module attributes {stable_mosaic.version = 11 : i64} {
  func.func @_matmul_stats_kernel(%arg0: i32, %arg1: memref<32x288xbf16, #tpu.memory_space<vmem>>, %arg2: memref<288x32xbf16, #tpu.memory_space<vmem>>, %arg3: memref<32x32xf32, #tpu.memory_space<vmem>>, %arg4: memref<1x32xf32, #tpu.memory_space<vmem>>, %arg5: memref<1x32xf32, #tpu.memory_space<vmem>>) attributes {dimension_semantics = [#tpu.dimension_semantics<arbitrary>], iteration_bounds = array<i64: 1>, scalar_prefetch = 0 : i64, scratch_operands = 0 : i64, tpu.core_type = #tpu.core_type<tc>, window_params = [{transform_indices = @transform_0, window_bounds = array<i64: 32, 288>}, {pipeline_mode = #tpu.pipeline_mode<synchronous>, transform_indices = @transform_1, window_bounds = array<i64: 288, 32>}, {transform_indices = @transform_2, window_bounds = array<i64: 32, 32>}, {pipeline_mode = #tpu.pipeline_mode<synchronous>, transform_indices = @transform_3, window_bounds = array<i64: 1, 32>}, {pipeline_mode = #tpu.pipeline_mode<synchronous>, transform_indices = @transform_4, window_bounds = array<i64: 1, 32>}]} {
    %c0_i32 = arith.constant 0 : i32
    %0 = arith.cmpi eq, %arg0, %c0_i32 : i32
    %1 = arith.extui %0 : i1 to i32
    %c0_i32_0 = arith.constant 0 : i32
    %2 = arith.cmpi ne, %1, %c0_i32_0 : i32
    scf.if %2 {
      %cst_16 = arith.constant 0.000000e+00 : f32
      %18 = vector.broadcast %cst_16 : f32 to vector<1x32xf32>
      %c0_17 = arith.constant 0 : index
      %c0_18 = arith.constant 0 : index
      %19 = vector.load %arg4[%c0_17, %c0_18] : memref<1x32xf32, #tpu.memory_space<vmem>>, vector<1x32xf32>
      tpu.vector_store %arg4[%c0_17, %c0_18], %18 {strides = array<i32>} : memref<1x32xf32, #tpu.memory_space<vmem>>, vector<1x32xf32>,
      %cst_19 = arith.constant 0.000000e+00 : f32
      %20 = vector.broadcast %cst_19 : f32 to vector<1x32xf32>
      %c0_20 = arith.constant 0 : index
      %c0_21 = arith.constant 0 : index
      %21 = vector.load %arg5[%c0_20, %c0_21] : memref<1x32xf32, #tpu.memory_space<vmem>>, vector<1x32xf32>
      tpu.vector_store %arg5[%c0_20, %c0_21], %20 {strides = array<i32>} : memref<1x32xf32, #tpu.memory_space<vmem>>, vector<1x32xf32>,
    } else {
    }
    %c0 = arith.constant 0 : index
    %c0_1 = arith.constant 0 : index
    %3 = vector.load %arg1[%c0, %c0_1] : memref<32x288xbf16, #tpu.memory_space<vmem>>, vector<32x288xbf16>
    %c0_2 = arith.constant 0 : index
    %c0_3 = arith.constant 0 : index
    %4 = vector.load %arg2[%c0_2, %c0_3] : memref<288x32xbf16, #tpu.memory_space<vmem>>, vector<288x32xbf16>
    %cst = arith.constant dense<0.000000e+00> : vector<32x32xf32>
    %5 = tpu.matmul %3, %4, %cst {dimension_numbers = #tpu.dot_dimension_numbers<[1], [0], [0], [1], [0, 0, 1, 1], [], []>} : vector<32x288xbf16>, vector<288x32xbf16>, vector<32x32xf32> -> vector<32x32xf32>
    %c0_4 = arith.constant 0 : index
    %c0_5 = arith.constant 0 : index
    %6 = vector.load %arg3[%c0_4, %c0_5] : memref<32x32xf32, #tpu.memory_space<vmem>>, vector<32x32xf32>
    tpu.vector_store %arg3[%c0_4, %c0_5], %5 {strides = array<i32>} : memref<32x32xf32, #tpu.memory_space<vmem>>, vector<32x32xf32>,
    %c0_6 = arith.constant 0 : index
    %c0_7 = arith.constant 0 : index
    %7 = vector.load %arg4[%c0_6, %c0_7] : memref<1x32xf32, #tpu.memory_space<vmem>>, vector<1x32xf32>
    %cst_8 = arith.constant dense<0.000000e+00> : vector<32xf32>
    %8 = vector.multi_reduction <add>, %5, %cst_8 [0] : vector<32x32xf32> to vector<32xf32>
    %9 = vector.shape_cast %8 : vector<32xf32> to vector<1x32xf32>
    %10 = arith.addf %7, %9 : vector<1x32xf32>
    %c0_9 = arith.constant 0 : index
    %c0_10 = arith.constant 0 : index
    %11 = vector.load %arg4[%c0_9, %c0_10] : memref<1x32xf32, #tpu.memory_space<vmem>>, vector<1x32xf32>
    tpu.vector_store %arg4[%c0_9, %c0_10], %10 {strides = array<i32>} : memref<1x32xf32, #tpu.memory_space<vmem>>, vector<1x32xf32>,
    %c0_11 = arith.constant 0 : index
    %c0_12 = arith.constant 0 : index
    %12 = vector.load %arg5[%c0_11, %c0_12] : memref<1x32xf32, #tpu.memory_space<vmem>>, vector<1x32xf32>
    %13 = arith.mulf %5, %5 : vector<32x32xf32>
    %cst_13 = arith.constant dense<0.000000e+00> : vector<32xf32>
    %14 = vector.multi_reduction <add>, %13, %cst_13 [0] : vector<32x32xf32> to vector<32xf32>
    %15 = vector.shape_cast %14 : vector<32xf32> to vector<1x32xf32>
    %16 = arith.addf %12, %15 : vector<1x32xf32>
    %c0_14 = arith.constant 0 : index
    %c0_15 = arith.constant 0 : index
    %17 = vector.load %arg5[%c0_14, %c0_15] : memref<1x32xf32, #tpu.memory_space<vmem>>, vector<1x32xf32>
    tpu.vector_store %arg5[%c0_14, %c0_15], %16 {strides = array<i32>} : memref<1x32xf32, #tpu.memory_space<vmem>>, vector<1x32xf32>,
    return
  }
  func.func @transform_0(%arg0: i32) -> (i32, i32) {
    %c0_i32 = arith.constant 0 : i32
    %c0_i32_0 = arith.constant 0 : i32
    return %arg0, %c0_i32 : i32, i32
  }
  func.func @transform_1(%arg0: i32) -> (i32, i32) {
    %c0_i32 = arith.constant 0 : i32
    %c0_i32_0 = arith.constant 0 : i32
    %c0_i32_1 = arith.constant 0 : i32
    return %c0_i32, %c0_i32_0 : i32, i32
  }
  func.func @transform_2(%arg0: i32) -> (i32, i32) {
    %c0_i32 = arith.constant 0 : i32
    %c0_i32_0 = arith.constant 0 : i32
    return %arg0, %c0_i32 : i32, i32
  }
  func.func @transform_3(%arg0: i32) -> (i32, i32) {
    %c0_i32 = arith.constant 0 : i32
    %c0_i32_0 = arith.constant 0 : i32
    %c0_i32_1 = arith.constant 0 : i32
    return %c0_i32, %c0_i32_0 : i32, i32
  }
  func.func @transform_4(%arg0: i32) -> (i32, i32) {
    %c0_i32 = arith.constant 0 : i32
    %c0_i32_0 = arith.constant 0 : i32
    %c0_i32_1 = arith.constant 0 : i32
    return %c0_i32, %c0_i32_0 : i32, i32
  }
}

module attributes {stable_mosaic.version = 11 : i64} {
  func.func @_bn_act_kernel(%arg0: i32, %arg1: memref<8x128xf32, #tpu.memory_space<vmem>>, %arg2: memref<1x128xf32, #tpu.memory_space<vmem>>, %arg3: memref<1x128xf32, #tpu.memory_space<vmem>>, %arg4: memref<1x128xf32, #tpu.memory_space<vmem>>, %arg5: memref<1x128xf32, #tpu.memory_space<vmem>>, %arg6: memref<8x128xf32, #tpu.memory_space<vmem>>, %arg7: memref<8x128xf32, #tpu.memory_space<vmem>>) attributes {dimension_semantics = [#tpu.dimension_semantics<parallel>], iteration_bounds = array<i64: 1>, scalar_prefetch = 0 : i64, scratch_operands = 0 : i64, tpu.core_type = #tpu.core_type<tc>, window_params = [{transform_indices = @transform_0, window_bounds = array<i64: 8, 128>}, {pipeline_mode = #tpu.pipeline_mode<synchronous>, transform_indices = @transform_1, window_bounds = array<i64: 1, 128>}, {pipeline_mode = #tpu.pipeline_mode<synchronous>, transform_indices = @transform_2, window_bounds = array<i64: 1, 128>}, {pipeline_mode = #tpu.pipeline_mode<synchronous>, transform_indices = @transform_3, window_bounds = array<i64: 1, 128>}, {pipeline_mode = #tpu.pipeline_mode<synchronous>, transform_indices = @transform_4, window_bounds = array<i64: 1, 128>}, {transform_indices = @transform_5, window_bounds = array<i64: 8, 128>}, {transform_indices = @transform_6, window_bounds = array<i64: 8, 128>}]} {
    %c0 = arith.constant 0 : index
    %c0_0 = arith.constant 0 : index
    %0 = vector.load %arg2[%c0, %c0_0] : memref<1x128xf32, #tpu.memory_space<vmem>>, vector<1x128xf32>
    %cst = arith.constant 3.125000e-02 : f32
    %1 = vector.broadcast %cst : f32 to vector<1x128xf32>
    %2 = arith.mulf %0, %1 : vector<1x128xf32>
    %c0_1 = arith.constant 0 : index
    %c0_2 = arith.constant 0 : index
    %3 = vector.load %arg3[%c0_1, %c0_2] : memref<1x128xf32, #tpu.memory_space<vmem>>, vector<1x128xf32>
    %cst_3 = arith.constant 3.125000e-02 : f32
    %4 = vector.broadcast %cst_3 : f32 to vector<1x128xf32>
    %5 = arith.mulf %3, %4 : vector<1x128xf32>
    %6 = arith.mulf %2, %2 : vector<1x128xf32>
    %7 = arith.subf %5, %6 : vector<1x128xf32>
    %cst_4 = arith.constant 0.000000e+00 : f32
    %8 = vector.broadcast %cst_4 : f32 to vector<1x128xf32>
    %9 = arith.maximumf %7, %8 : vector<1x128xf32>
    %c0_5 = arith.constant 0 : index
    %c0_6 = arith.constant 0 : index
    %10 = vector.load %arg4[%c0_5, %c0_6] : memref<1x128xf32, #tpu.memory_space<vmem>>, vector<1x128xf32>
    %cst_7 = arith.constant 9.99999974E-6 : f32
    %11 = vector.broadcast %cst_7 : f32 to vector<1x128xf32>
    %12 = arith.addf %9, %11 : vector<1x128xf32>
    %13 = math.rsqrt %12 : vector<1x128xf32>
    %14 = arith.mulf %10, %13 : vector<1x128xf32>
    %c0_8 = arith.constant 0 : index
    %c0_9 = arith.constant 0 : index
    %15 = vector.load %arg5[%c0_8, %c0_9] : memref<1x128xf32, #tpu.memory_space<vmem>>, vector<1x128xf32>
    %16 = arith.mulf %2, %14 : vector<1x128xf32>
    %17 = arith.subf %15, %16 : vector<1x128xf32>
    %c0_10 = arith.constant 0 : index
    %c0_11 = arith.constant 0 : index
    %18 = vector.load %arg1[%c0_10, %c0_11] : memref<8x128xf32, #tpu.memory_space<vmem>>, vector<8x128xf32>
    %19 = vector.broadcast %14 : vector<1x128xf32> to vector<8x128xf32>
    %20 = arith.mulf %18, %19 : vector<8x128xf32>
    %21 = vector.broadcast %17 : vector<1x128xf32> to vector<8x128xf32>
    %22 = arith.addf %20, %21 : vector<8x128xf32>
    %c0_12 = arith.constant 0 : index
    %c0_13 = arith.constant 0 : index
    %23 = vector.load %arg6[%c0_12, %c0_13] : memref<8x128xf32, #tpu.memory_space<vmem>>, vector<8x128xf32>
    %24 = arith.addf %22, %23 : vector<8x128xf32>
    %c0_14 = arith.constant 0 : index
    %c0_15 = arith.constant 0 : index
    %25 = vector.load %arg7[%c0_14, %c0_15] : memref<8x128xf32, #tpu.memory_space<vmem>>, vector<8x128xf32>
    tpu.vector_store %arg7[%c0_14, %c0_15], %24 {strides = array<i32>} : memref<8x128xf32, #tpu.memory_space<vmem>>, vector<8x128xf32>,
    return
  }
  func.func @transform_0(%arg0: i32) -> (i32, i32) {
    %c0_i32 = arith.constant 0 : i32
    %c0_i32_0 = arith.constant 0 : i32
    return %arg0, %c0_i32 : i32, i32
  }
  func.func @transform_1(%arg0: i32) -> (i32, i32) {
    %c0_i32 = arith.constant 0 : i32
    %c0_i32_0 = arith.constant 0 : i32
    %c0_i32_1 = arith.constant 0 : i32
    return %c0_i32, %c0_i32_0 : i32, i32
  }
  func.func @transform_2(%arg0: i32) -> (i32, i32) {
    %c0_i32 = arith.constant 0 : i32
    %c0_i32_0 = arith.constant 0 : i32
    %c0_i32_1 = arith.constant 0 : i32
    return %c0_i32, %c0_i32_0 : i32, i32
  }
  func.func @transform_3(%arg0: i32) -> (i32, i32) {
    %c0_i32 = arith.constant 0 : i32
    %c0_i32_0 = arith.constant 0 : i32
    %c0_i32_1 = arith.constant 0 : i32
    return %c0_i32, %c0_i32_0 : i32, i32
  }
  func.func @transform_4(%arg0: i32) -> (i32, i32) {
    %c0_i32 = arith.constant 0 : i32
    %c0_i32_0 = arith.constant 0 : i32
    %c0_i32_1 = arith.constant 0 : i32
    return %c0_i32, %c0_i32_0 : i32, i32
  }
  func.func @transform_5(%arg0: i32) -> (i32, i32) {
    %c0_i32 = arith.constant 0 : i32
    %c0_i32_0 = arith.constant 0 : i32
    return %arg0, %c0_i32 : i32, i32
  }
  func.func @transform_6(%arg0: i32) -> (i32, i32) {
    %c0_i32 = arith.constant 0 : i32
    %c0_i32_0 = arith.constant 0 : i32
    return %arg0, %c0_i32 : i32, i32
  }
}

module attributes {stable_mosaic.version = 11 : i64} {
  func.func @_matmul_stats_kernel(%arg0: i32, %arg1: memref<32x128xbf16, #tpu.memory_space<vmem>>, %arg2: memref<128x64xbf16, #tpu.memory_space<vmem>>, %arg3: memref<32x64xf32, #tpu.memory_space<vmem>>, %arg4: memref<1x64xf32, #tpu.memory_space<vmem>>, %arg5: memref<1x64xf32, #tpu.memory_space<vmem>>) attributes {dimension_semantics = [#tpu.dimension_semantics<arbitrary>], iteration_bounds = array<i64: 1>, scalar_prefetch = 0 : i64, scratch_operands = 0 : i64, tpu.core_type = #tpu.core_type<tc>, window_params = [{transform_indices = @transform_0, window_bounds = array<i64: 32, 128>}, {pipeline_mode = #tpu.pipeline_mode<synchronous>, transform_indices = @transform_1, window_bounds = array<i64: 128, 64>}, {transform_indices = @transform_2, window_bounds = array<i64: 32, 64>}, {pipeline_mode = #tpu.pipeline_mode<synchronous>, transform_indices = @transform_3, window_bounds = array<i64: 1, 64>}, {pipeline_mode = #tpu.pipeline_mode<synchronous>, transform_indices = @transform_4, window_bounds = array<i64: 1, 64>}]} {
    %c0_i32 = arith.constant 0 : i32
    %0 = arith.cmpi eq, %arg0, %c0_i32 : i32
    %1 = arith.extui %0 : i1 to i32
    %c0_i32_0 = arith.constant 0 : i32
    %2 = arith.cmpi ne, %1, %c0_i32_0 : i32
    scf.if %2 {
      %cst_16 = arith.constant 0.000000e+00 : f32
      %18 = vector.broadcast %cst_16 : f32 to vector<1x64xf32>
      %c0_17 = arith.constant 0 : index
      %c0_18 = arith.constant 0 : index
      %19 = vector.load %arg4[%c0_17, %c0_18] : memref<1x64xf32, #tpu.memory_space<vmem>>, vector<1x64xf32>
      tpu.vector_store %arg4[%c0_17, %c0_18], %18 {strides = array<i32>} : memref<1x64xf32, #tpu.memory_space<vmem>>, vector<1x64xf32>,
      %cst_19 = arith.constant 0.000000e+00 : f32
      %20 = vector.broadcast %cst_19 : f32 to vector<1x64xf32>
      %c0_20 = arith.constant 0 : index
      %c0_21 = arith.constant 0 : index
      %21 = vector.load %arg5[%c0_20, %c0_21] : memref<1x64xf32, #tpu.memory_space<vmem>>, vector<1x64xf32>
      tpu.vector_store %arg5[%c0_20, %c0_21], %20 {strides = array<i32>} : memref<1x64xf32, #tpu.memory_space<vmem>>, vector<1x64xf32>,
    } else {
    }
    %c0 = arith.constant 0 : index
    %c0_1 = arith.constant 0 : index
    %3 = vector.load %arg1[%c0, %c0_1] : memref<32x128xbf16, #tpu.memory_space<vmem>>, vector<32x128xbf16>
    %c0_2 = arith.constant 0 : index
    %c0_3 = arith.constant 0 : index
    %4 = vector.load %arg2[%c0_2, %c0_3] : memref<128x64xbf16, #tpu.memory_space<vmem>>, vector<128x64xbf16>
    %cst = arith.constant dense<0.000000e+00> : vector<32x64xf32>
    %5 = tpu.matmul %3, %4, %cst {dimension_numbers = #tpu.dot_dimension_numbers<[1], [0], [0], [1], [0, 0, 1, 1], [], []>} : vector<32x128xbf16>, vector<128x64xbf16>, vector<32x64xf32> -> vector<32x64xf32>
    %c0_4 = arith.constant 0 : index
    %c0_5 = arith.constant 0 : index
    %6 = vector.load %arg3[%c0_4, %c0_5] : memref<32x64xf32, #tpu.memory_space<vmem>>, vector<32x64xf32>
    tpu.vector_store %arg3[%c0_4, %c0_5], %5 {strides = array<i32>} : memref<32x64xf32, #tpu.memory_space<vmem>>, vector<32x64xf32>,
    %c0_6 = arith.constant 0 : index
    %c0_7 = arith.constant 0 : index
    %7 = vector.load %arg4[%c0_6, %c0_7] : memref<1x64xf32, #tpu.memory_space<vmem>>, vector<1x64xf32>
    %cst_8 = arith.constant dense<0.000000e+00> : vector<64xf32>
    %8 = vector.multi_reduction <add>, %5, %cst_8 [0] : vector<32x64xf32> to vector<64xf32>
    %9 = vector.shape_cast %8 : vector<64xf32> to vector<1x64xf32>
    %10 = arith.addf %7, %9 : vector<1x64xf32>
    %c0_9 = arith.constant 0 : index
    %c0_10 = arith.constant 0 : index
    %11 = vector.load %arg4[%c0_9, %c0_10] : memref<1x64xf32, #tpu.memory_space<vmem>>, vector<1x64xf32>
    tpu.vector_store %arg4[%c0_9, %c0_10], %10 {strides = array<i32>} : memref<1x64xf32, #tpu.memory_space<vmem>>, vector<1x64xf32>,
    %c0_11 = arith.constant 0 : index
    %c0_12 = arith.constant 0 : index
    %12 = vector.load %arg5[%c0_11, %c0_12] : memref<1x64xf32, #tpu.memory_space<vmem>>, vector<1x64xf32>
    %13 = arith.mulf %5, %5 : vector<32x64xf32>
    %cst_13 = arith.constant dense<0.000000e+00> : vector<64xf32>
    %14 = vector.multi_reduction <add>, %13, %cst_13 [0] : vector<32x64xf32> to vector<64xf32>
    %15 = vector.shape_cast %14 : vector<64xf32> to vector<1x64xf32>
    %16 = arith.addf %12, %15 : vector<1x64xf32>
    %c0_14 = arith.constant 0 : index
    %c0_15 = arith.constant 0 : index
    %17 = vector.load %arg5[%c0_14, %c0_15] : memref<1x64xf32, #tpu.memory_space<vmem>>, vector<1x64xf32>
    tpu.vector_store %arg5[%c0_14, %c0_15], %16 {strides = array<i32>} : memref<1x64xf32, #tpu.memory_space<vmem>>, vector<1x64xf32>,
    return
  }
  func.func @transform_0(%arg0: i32) -> (i32, i32) {
    %c0_i32 = arith.constant 0 : i32
    %c0_i32_0 = arith.constant 0 : i32
    return %arg0, %c0_i32 : i32, i32
  }
  func.func @transform_1(%arg0: i32) -> (i32, i32) {
    %c0_i32 = arith.constant 0 : i32
    %c0_i32_0 = arith.constant 0 : i32
    %c0_i32_1 = arith.constant 0 : i32
    return %c0_i32, %c0_i32_0 : i32, i32
  }
  func.func @transform_2(%arg0: i32) -> (i32, i32) {
    %c0_i32 = arith.constant 0 : i32
    %c0_i32_0 = arith.constant 0 : i32
    return %arg0, %c0_i32 : i32, i32
  }
  func.func @transform_3(%arg0: i32) -> (i32, i32) {
    %c0_i32 = arith.constant 0 : i32
    %c0_i32_0 = arith.constant 0 : i32
    %c0_i32_1 = arith.constant 0 : i32
    return %c0_i32, %c0_i32_0 : i32, i32
  }
  func.func @transform_4(%arg0: i32) -> (i32, i32) {
    %c0_i32 = arith.constant 0 : i32
    %c0_i32_0 = arith.constant 0 : i32
    %c0_i32_1 = arith.constant 0 : i32
    return %c0_i32, %c0_i32_0 : i32, i32
  }
}

module attributes {stable_mosaic.version = 11 : i64} {
  func.func @_matmul_stats_kernel(%arg0: i32, %arg1: memref<128x64xbf16, #tpu.memory_space<vmem>>, %arg2: memref<64x32xbf16, #tpu.memory_space<vmem>>, %arg3: memref<128x32xf32, #tpu.memory_space<vmem>>, %arg4: memref<1x32xf32, #tpu.memory_space<vmem>>, %arg5: memref<1x32xf32, #tpu.memory_space<vmem>>) attributes {dimension_semantics = [#tpu.dimension_semantics<arbitrary>], iteration_bounds = array<i64: 1>, scalar_prefetch = 0 : i64, scratch_operands = 0 : i64, tpu.core_type = #tpu.core_type<tc>, window_params = [{transform_indices = @transform_0, window_bounds = array<i64: 128, 64>}, {pipeline_mode = #tpu.pipeline_mode<synchronous>, transform_indices = @transform_1, window_bounds = array<i64: 64, 32>}, {transform_indices = @transform_2, window_bounds = array<i64: 128, 32>}, {pipeline_mode = #tpu.pipeline_mode<synchronous>, transform_indices = @transform_3, window_bounds = array<i64: 1, 32>}, {pipeline_mode = #tpu.pipeline_mode<synchronous>, transform_indices = @transform_4, window_bounds = array<i64: 1, 32>}]} {
    %c0_i32 = arith.constant 0 : i32
    %0 = arith.cmpi eq, %arg0, %c0_i32 : i32
    %1 = arith.extui %0 : i1 to i32
    %c0_i32_0 = arith.constant 0 : i32
    %2 = arith.cmpi ne, %1, %c0_i32_0 : i32
    scf.if %2 {
      %cst_16 = arith.constant 0.000000e+00 : f32
      %18 = vector.broadcast %cst_16 : f32 to vector<1x32xf32>
      %c0_17 = arith.constant 0 : index
      %c0_18 = arith.constant 0 : index
      %19 = vector.load %arg4[%c0_17, %c0_18] : memref<1x32xf32, #tpu.memory_space<vmem>>, vector<1x32xf32>
      tpu.vector_store %arg4[%c0_17, %c0_18], %18 {strides = array<i32>} : memref<1x32xf32, #tpu.memory_space<vmem>>, vector<1x32xf32>,
      %cst_19 = arith.constant 0.000000e+00 : f32
      %20 = vector.broadcast %cst_19 : f32 to vector<1x32xf32>
      %c0_20 = arith.constant 0 : index
      %c0_21 = arith.constant 0 : index
      %21 = vector.load %arg5[%c0_20, %c0_21] : memref<1x32xf32, #tpu.memory_space<vmem>>, vector<1x32xf32>
      tpu.vector_store %arg5[%c0_20, %c0_21], %20 {strides = array<i32>} : memref<1x32xf32, #tpu.memory_space<vmem>>, vector<1x32xf32>,
    } else {
    }
    %c0 = arith.constant 0 : index
    %c0_1 = arith.constant 0 : index
    %3 = vector.load %arg1[%c0, %c0_1] : memref<128x64xbf16, #tpu.memory_space<vmem>>, vector<128x64xbf16>
    %c0_2 = arith.constant 0 : index
    %c0_3 = arith.constant 0 : index
    %4 = vector.load %arg2[%c0_2, %c0_3] : memref<64x32xbf16, #tpu.memory_space<vmem>>, vector<64x32xbf16>
    %cst = arith.constant dense<0.000000e+00> : vector<128x32xf32>
    %5 = tpu.matmul %3, %4, %cst {dimension_numbers = #tpu.dot_dimension_numbers<[1], [0], [0], [1], [0, 0, 1, 1], [], []>} : vector<128x64xbf16>, vector<64x32xbf16>, vector<128x32xf32> -> vector<128x32xf32>
    %c0_4 = arith.constant 0 : index
    %c0_5 = arith.constant 0 : index
    %6 = vector.load %arg3[%c0_4, %c0_5] : memref<128x32xf32, #tpu.memory_space<vmem>>, vector<128x32xf32>
    tpu.vector_store %arg3[%c0_4, %c0_5], %5 {strides = array<i32>} : memref<128x32xf32, #tpu.memory_space<vmem>>, vector<128x32xf32>,
    %c0_6 = arith.constant 0 : index
    %c0_7 = arith.constant 0 : index
    %7 = vector.load %arg4[%c0_6, %c0_7] : memref<1x32xf32, #tpu.memory_space<vmem>>, vector<1x32xf32>
    %cst_8 = arith.constant dense<0.000000e+00> : vector<32xf32>
    %8 = vector.multi_reduction <add>, %5, %cst_8 [0] : vector<128x32xf32> to vector<32xf32>
    %9 = vector.shape_cast %8 : vector<32xf32> to vector<1x32xf32>
    %10 = arith.addf %7, %9 : vector<1x32xf32>
    %c0_9 = arith.constant 0 : index
    %c0_10 = arith.constant 0 : index
    %11 = vector.load %arg4[%c0_9, %c0_10] : memref<1x32xf32, #tpu.memory_space<vmem>>, vector<1x32xf32>
    tpu.vector_store %arg4[%c0_9, %c0_10], %10 {strides = array<i32>} : memref<1x32xf32, #tpu.memory_space<vmem>>, vector<1x32xf32>,
    %c0_11 = arith.constant 0 : index
    %c0_12 = arith.constant 0 : index
    %12 = vector.load %arg5[%c0_11, %c0_12] : memref<1x32xf32, #tpu.memory_space<vmem>>, vector<1x32xf32>
    %13 = arith.mulf %5, %5 : vector<128x32xf32>
    %cst_13 = arith.constant dense<0.000000e+00> : vector<32xf32>
    %14 = vector.multi_reduction <add>, %13, %cst_13 [0] : vector<128x32xf32> to vector<32xf32>
    %15 = vector.shape_cast %14 : vector<32xf32> to vector<1x32xf32>
    %16 = arith.addf %12, %15 : vector<1x32xf32>
    %c0_14 = arith.constant 0 : index
    %c0_15 = arith.constant 0 : index
    %17 = vector.load %arg5[%c0_14, %c0_15] : memref<1x32xf32, #tpu.memory_space<vmem>>, vector<1x32xf32>
    tpu.vector_store %arg5[%c0_14, %c0_15], %16 {strides = array<i32>} : memref<1x32xf32, #tpu.memory_space<vmem>>, vector<1x32xf32>,
    return
  }
  func.func @transform_0(%arg0: i32) -> (i32, i32) {
    %c0_i32 = arith.constant 0 : i32
    %c0_i32_0 = arith.constant 0 : i32
    return %arg0, %c0_i32 : i32, i32
  }
  func.func @transform_1(%arg0: i32) -> (i32, i32) {
    %c0_i32 = arith.constant 0 : i32
    %c0_i32_0 = arith.constant 0 : i32
    %c0_i32_1 = arith.constant 0 : i32
    return %c0_i32, %c0_i32_0 : i32, i32
  }
  func.func @transform_2(%arg0: i32) -> (i32, i32) {
    %c0_i32 = arith.constant 0 : i32
    %c0_i32_0 = arith.constant 0 : i32
    return %arg0, %c0_i32 : i32, i32
  }
  func.func @transform_3(%arg0: i32) -> (i32, i32) {
    %c0_i32 = arith.constant 0 : i32
    %c0_i32_0 = arith.constant 0 : i32
    %c0_i32_1 = arith.constant 0 : i32
    return %c0_i32, %c0_i32_0 : i32, i32
  }
  func.func @transform_4(%arg0: i32) -> (i32, i32) {
    %c0_i32 = arith.constant 0 : i32
    %c0_i32_0 = arith.constant 0 : i32
    %c0_i32_1 = arith.constant 0 : i32
    return %c0_i32, %c0_i32_0 : i32, i32
  }
}

module attributes {stable_mosaic.version = 11 : i64} {
  func.func @_matmul_bias_act_kernel(%arg0: i32, %arg1: memref<512x392xbf16, #tpu.memory_space<vmem>>, %arg2: memref<392x3xbf16, #tpu.memory_space<vmem>>, %arg3: memref<1x3xf32, #tpu.memory_space<vmem>>, %arg4: memref<512x3xf32, #tpu.memory_space<vmem>>) attributes {dimension_semantics = [#tpu.dimension_semantics<parallel>], iteration_bounds = array<i64: 1>, scalar_prefetch = 0 : i64, scratch_operands = 0 : i64, tpu.core_type = #tpu.core_type<tc>, window_params = [{transform_indices = @transform_0, window_bounds = array<i64: 512, 392>}, {pipeline_mode = #tpu.pipeline_mode<synchronous>, transform_indices = @transform_1, window_bounds = array<i64: 392, 3>}, {pipeline_mode = #tpu.pipeline_mode<synchronous>, transform_indices = @transform_2, window_bounds = array<i64: 1, 3>}, {transform_indices = @transform_3, window_bounds = array<i64: 512, 3>}]} {
    %c0 = arith.constant 0 : index
    %c0_0 = arith.constant 0 : index
    %0 = vector.load %arg1[%c0, %c0_0] : memref<512x392xbf16, #tpu.memory_space<vmem>>, vector<512x392xbf16>
    %c0_1 = arith.constant 0 : index
    %c0_2 = arith.constant 0 : index
    %1 = vector.load %arg2[%c0_1, %c0_2] : memref<392x3xbf16, #tpu.memory_space<vmem>>, vector<392x3xbf16>
    %cst = arith.constant dense<0.000000e+00> : vector<512x3xf32>
    %2 = tpu.matmul %0, %1, %cst {dimension_numbers = #tpu.dot_dimension_numbers<[1], [0], [0], [1], [0, 0, 1, 1], [], []>} : vector<512x392xbf16>, vector<392x3xbf16>, vector<512x3xf32> -> vector<512x3xf32>
    %c0_3 = arith.constant 0 : index
    %c0_4 = arith.constant 0 : index
    %3 = vector.load %arg3[%c0_3, %c0_4] : memref<1x3xf32, #tpu.memory_space<vmem>>, vector<1x3xf32>
    %4 = vector.broadcast %3 : vector<1x3xf32> to vector<512x3xf32>
    %5 = arith.addf %2, %4 : vector<512x3xf32>
    %6 = math.tanh %5 : vector<512x3xf32>
    %c0_5 = arith.constant 0 : index
    %c0_6 = arith.constant 0 : index
    %7 = vector.load %arg4[%c0_5, %c0_6] : memref<512x3xf32, #tpu.memory_space<vmem>>, vector<512x3xf32>
    tpu.vector_store %arg4[%c0_5, %c0_6], %6 {strides = array<i32>} : memref<512x3xf32, #tpu.memory_space<vmem>>, vector<512x3xf32>,
    return
  }
  func.func @transform_0(%arg0: i32) -> (i32, i32) {
    %c0_i32 = arith.constant 0 : i32
    %c0_i32_0 = arith.constant 0 : i32
    return %arg0, %c0_i32 : i32, i32
  }
  func.func @transform_1(%arg0: i32) -> (i32, i32) {
    %c0_i32 = arith.constant 0 : i32
    %c0_i32_0 = arith.constant 0 : i32
    %c0_i32_1 = arith.constant 0 : i32
    return %c0_i32, %c0_i32_0 : i32, i32
  }
  func.func @transform_2(%arg0: i32) -> (i32, i32) {
    %c0_i32 = arith.constant 0 : i32
    %c0_i32_0 = arith.constant 0 : i32
    %c0_i32_1 = arith.constant 0 : i32
    return %c0_i32, %c0_i32_0 : i32, i32
  }
  func.func @transform_3(%arg0: i32) -> (i32, i32) {
    %c0_i32 = arith.constant 0 : i32
    %c0_i32_0 = arith.constant 0 : i32
    return %arg0, %c0_i32 : i32, i32
  }
}

</mosaic_0001>

<llo_original>
// kernel: global_generator_forward.20
$region0: #{global_generator_forward.20}
  #allocation0 [shape = 'u32[]', space=smem, size = 0x4, offset = 0x4, fixed_abs, tag = 'smem constant byte address 0x4 - core index']
  #allocation1 [shape = 'u32[144,128]{1,0:T(1,128)}', space=vmem, size = 0x12000, scoped, tag = 'internal scratch']
  %s0 = inlined_call_operand.vmem [shape: f32[32,128], index: 0, kind: input, shape index: {}]
  %s1 = inlined_call_operand.vmem [shape: f32[1,128], index: 1, kind: input, shape index: {}]
  %s2 = inlined_call_operand.vmem [shape: f32[1,128], index: 2, kind: input, shape index: {}]
  %s3 = inlined_call_operand.vmem [shape: f32[1,128], index: 3, kind: input, shape index: {}]
  %s4 = inlined_call_operand.vmem [shape: f32[1,128], index: 4, kind: input, shape index: {}]
  %s5 = inlined_call_operand.vmem [shape: f32[32,128], index: 5, kind: output, shape index: {}]
  %s6 = sld [smem:[#allocation0]]
  $region30: #{global_generator_forward.20} parent=0
    _
  %s8 = ssub.s32 1, %s6
  %s9 = scalar_select 0, %s8, %s6
  // Predicated region
  $region2: #{global_generator_forward.20} parent=0 // pred_check
    _
  $region3: #{global_generator_forward.20} parent=0 // pred_check_branch
    %11 = sbr.rel (0) target = $region5
  $region4: #{global_generator_forward.20} parent=0 // pred_region
    _
  $region5: #{global_generator_forward.20} parent=0 // pred_fallthru
    _
  // Predicated region
  $region6: #{global_generator_forward.20} parent=0 // pred_check
    _
  $region7: #{global_generator_forward.20} parent=0 // pred_check_branch
    %13 = sbr.rel (0) target = $region9
  $region8: #{global_generator_forward.20} parent=0 // pred_region
    _
  $region9: #{global_generator_forward.20} parent=0 // pred_fallthru
    _
  // Predicated region
  $region10: #{global_generator_forward.20} parent=0 // pred_check
    _
  $region11: #{global_generator_forward.20} parent=0 // pred_check_branch
    %15 = sbr.rel (0) target = $region13
  $region12: #{global_generator_forward.20} parent=0 // pred_region
    _
  $region13: #{global_generator_forward.20} parent=0 // pred_fallthru
    _
  // Predicated region
  $region14: #{global_generator_forward.20} parent=0 // pred_check
    _
  $region15: #{global_generator_forward.20} parent=0 // pred_check_branch
    %17 = sbr.rel (0) target = $region17
  $region16: #{global_generator_forward.20} parent=0 // pred_region
    _
  $region17: #{global_generator_forward.20} parent=0 // pred_fallthru
    _
  // Predicated region
  $region18: #{global_generator_forward.20} parent=0 // pred_check
    _
  $region19: #{global_generator_forward.20} parent=0 // pred_check_branch
    %19 = sbr.rel (0) target = $region21
  $region20: #{global_generator_forward.20} parent=0 // pred_region
    _
  $region21: #{global_generator_forward.20} parent=0 // pred_fallthru
    _
  %v20 = vld [vmem:[%s1] sm:$0x1]
  %v21 = vmul.f32 %v20, 0.001953125
  %v22 = vld [vmem:[%s2] sm:$0x1]
  %v23 = vmul.f32 %v22, 0.001953125
  %v24 = vmul.f32 %v21, %v21
  %v25 = vsub.f32 %v23, %v24
  %v26 = vmax.f32 %v25, 0.0
  %v27 = vld [vmem:[%s3] sm:$0x1]
  %v28 = vadd.f32 %v26, 1e-05
  %v29 = vrsqrt.pop %v28
  %v30 = vmul.f32 %v27, %v29
  %v31 = vld [vmem:[%s4] sm:$0x1]
  %v32 = vmul.f32 %v21, %v30
  %v33 = vsub.f32 %v31, %v32
  %v34 = vld [vmem:[%s0] sm:$0xff]
  %v35 = vld [vmem:[%s0 + $0x8] sm:$0xff]
  %v36 = vld [vmem:[%s0 + $0x10] sm:$0xff]
  %v37 = vld [vmem:[%s0 + $0x18] sm:$0xff]
  %v39 = vlaneseq
  %v40 = vshrl.u32 %v39, 7
  %v41 = vsub.s32 0, %v40
  %v42 = vrot.slane %v30, %v41
  %v44 = vmul.f32 %v34, %v42
  %v45 = vmul.f32 %v35, %v42
  %v46 = vmul.f32 %v36, %v42
  %v47 = vmul.f32 %v37, %v42
  %v49 = vlaneseq
  %v50 = vshrl.u32 %v49, 7
  %v51 = vsub.s32 0, %v50
  %v52 = vrot.slane %v33, %v51
  %v54 = vadd.f32 %v44, %v52
  %v55 = vadd.f32 %v45, %v52
  %v56 = vadd.f32 %v46, %v52
  %v57 = vadd.f32 %v47, %v52
  %v58 = vmax.f32 %v54, 0.0
  %v59 = vmax.f32 %v55, 0.0
  %v60 = vmax.f32 %v56, 0.0
  %v61 = vmax.f32 %v57, 0.0
  %62 = vst [vmem:[%s5] sm:$0xff] %v58
  %63 = vst [vmem:[%s5 + $0x8] sm:$0xff] %v59
  %64 = vst [vmem:[%s5 + $0x10] sm:$0xff] %v60
  %65 = vst [vmem:[%s5 + $0x18] sm:$0xff] %v61
  // Predicated region
  $region22: #{global_generator_forward.20} parent=0 // pred_check
    _
  $region23: #{global_generator_forward.20} parent=0 // pred_check_branch
    %67 = sbr.rel (0) target = $region25
  $region24: #{global_generator_forward.20} parent=0 // pred_region
    _
  $region25: #{global_generator_forward.20} parent=0 // pred_fallthru
    _
  // Predicated region
  $region26: #{global_generator_forward.20} parent=0 // pred_check
    _
  $region27: #{global_generator_forward.20} parent=0 // pred_check_branch
    %69 = sbr.rel (0) target = $region29
  $region28: #{global_generator_forward.20} parent=0 // pred_region
    _
  $region29: #{global_generator_forward.20} parent=0 // pred_fallthru
    _

// kernel: global_generator_forward.19
$region0: #{global_generator_forward.19}
  #allocation0 [shape = 'u32[]', space=smem, size = 0x4, offset = 0x4, fixed_abs, tag = 'smem constant byte address 0x4 - core index']
  #allocation1 [shape = 'u32[144,128]{1,0:T(1,128)}', space=vmem, size = 0x12000, scoped, tag = 'internal scratch']
  %s0 = inlined_call_operand.vmem [shape: bf16[512,196], index: 0, kind: input, shape index: {}]
  %s1 = inlined_call_operand.vmem [shape: bf16[196,8], index: 1, kind: input, shape index: {}]
  %s2 = inlined_call_operand.vmem [shape: f32[512,8], index: 2, kind: output, shape index: {0}]
  %s3 = inlined_call_operand.vmem [shape: f32[1,8], index: 3, kind: output, shape index: {1}]
  %s4 = inlined_call_operand.vmem [shape: f32[1,8], index: 4, kind: output, shape index: {2}]
  %5 = xla_tuple %s2, %s3, %s4
  %s6 = sld [smem:[#allocation0]]
  $region38: #{global_generator_forward.19} parent=0
    _
  %s8 = ssub.s32 1, %s6
  %s9 = scalar_select 0, %s8, %s6
  // Predicated region
  $region2: #{global_generator_forward.19} parent=0 // pred_check
    _
  $region3: #{global_generator_forward.19} parent=0 // pred_check_branch
    %11 = sbr.rel (0) target = $region5
  $region4: #{global_generator_forward.19} parent=0 // pred_region
    _
  $region5: #{global_generator_forward.19} parent=0 // pred_fallthru
    _
  // Predicated region
  $region6: #{global_generator_forward.19} parent=0 // pred_check
    _
  $region7: #{global_generator_forward.19} parent=0 // pred_check_branch
    %13 = sbr.rel (0) target = $region9
  $region8: #{global_generator_forward.19} parent=0 // pred_region
    _
  $region9: #{global_generator_forward.19} parent=0 // pred_fallthru
    _
  %p15 = scmp.eq.s32.totalorder 0, 0
  // Predicated region
  $region10: #{global_generator_forward.19} parent=0 // pred_check
    %p16 = pneg %p15
  $region11: #{global_generator_forward.19} parent=0 // pred_check_branch
    %18 = sbr.rel (%p16) target = $region13
  $region12: #{global_generator_forward.19} parent=0 // pred_region
    %vm19 = vcmask 57344
    %20 = vst.msk [vmem:[%s3] sm:$0x1] %vm19, 0.0
    %21 = vst.msk [vmem:[%s4] sm:$0x1] %vm19, 0.0
  $region13: #{global_generator_forward.19} parent=0 // pred_fallthru
    _
  %v22 = vld [vmem:[%s0] sm:$0xff]
  %v23 = vld [vmem:[%s0 + $0x8] sm:$0xff]
  %v24 = vld [vmem:[%s0 + $0x10] sm:$0xff]
  %v25 = vld [vmem:[%s0 + $0x18] sm:$0xff]
  %v26 = vld [vmem:[%s0 + $0x20] sm:$0xff]
  %v27 = vld [vmem:[%s0 + $0x28] sm:$0xff]
  %v28 = vld [vmem:[%s0 + $0x30] sm:$0xff]
  %v29 = vld [vmem:[%s0 + $0x38] sm:$0xff]
  %v30 = vld [vmem:[%s0 + $0x40] sm:$0xff]
  %v31 = vld [vmem:[%s0 + $0x48] sm:$0xff]
  %v32 = vld [vmem:[%s0 + $0x50] sm:$0xff]
  %v33 = vld [vmem:[%s0 + $0x58] sm:$0xff]
  %v34 = vld [vmem:[%s0 + $0x60] sm:$0xff]
  %v35 = vld [vmem:[%s0 + $0x68] sm:$0xff]
  %v36 = vld [vmem:[%s0 + $0x70] sm:$0xff]
  %v37 = vld [vmem:[%s0 + $0x78] sm:$0xff]
  %v38 = vld [vmem:[%s0 + $0x80] sm:$0xff]
  %v39 = vld [vmem:[%s0 + $0x88] sm:$0xff]
  %v40 = vld [vmem:[%s0 + $0x90] sm:$0xff]
  %v41 = vld [vmem:[%s0 + $0x98] sm:$0xff]
  %v42 = vld [vmem:[%s0 + $0xa0] sm:$0xff]
  %v43 = vld [vmem:[%s0 + $0xa8] sm:$0xff]
  %v44 = vld [vmem:[%s0 + $0xb0] sm:$0xff]
  %v45 = vld [vmem:[%s0 + $0xb8] sm:$0xff]
  %v46 = vld [vmem:[%s0 + $0xc0] sm:$0xff]
  %v47 = vld [vmem:[%s0 + $0xc8] sm:$0xff]
  %v48 = vld [vmem:[%s0 + $0xd0] sm:$0xff]
  %v49 = vld [vmem:[%s0 + $0xd8] sm:$0xff]
  %v50 = vld [vmem:[%s0 + $0xe0] sm:$0xff]
  %v51 = vld [vmem:[%s0 + $0xe8] sm:$0xff]
  %v52 = vld [vmem:[%s0 + $0xf0] sm:$0xff]
  %v53 = vld [vmem:[%s0 + $0xf8] sm:$0xff]
  %v54 = vld [vmem:[%s0 + $0x100] sm:$0xff]
  %v55 = vld [vmem:[%s0 + $0x108] sm:$0xff]
  %v56 = vld [vmem:[%s0 + $0x110] sm:$0xff]
  %v57 = vld [vmem:[%s0 + $0x118] sm:$0xff]
  %v58 = vld [vmem:[%s0 + $0x120] sm:$0xff]
  %v59 = vld [vmem:[%s0 + $0x128] sm:$0xff]
  %v60 = vld [vmem:[%s0 + $0x130] sm:$0xff]
  %v61 = vld [vmem:[%s0 + $0x138] sm:$0xff]
  %v62 = vld [vmem:[%s0 + $0x140] sm:$0xff]
  %v63 = vld [vmem:[%s0 + $0x148] sm:$0xff]
  %v64 = vld [vmem:[%s0 + $0x150] sm:$0xff]
  %v65 = vld [vmem:[%s0 + $0x158] sm:$0xff]
  %v66 = vld [vmem:[%s0 + $0x160] sm:$0xff]
  %v67 = vld [vmem:[%s0 + $0x168] sm:$0xff]
  %v68 = vld [vmem:[%s0 + $0x170] sm:$0xff]
  %v69 = vld [vmem:[%s0 + $0x178] sm:$0xff]
  %v70 = vld [vmem:[%s0 + $0x180] sm:$0xff]
  %v71 = vld [vmem:[%s0 + $0x188] sm:$0xff]
  %v72 = vld [vmem:[%s0 + $0x190] sm:$0xff]
  %v73 = vld [vmem:[%s0 + $0x198] sm:$0xff]
  %v74 = vld [vmem:[%s0 + $0x1a0] sm:$0xff]
  %v75 = vld [vmem:[%s0 + $0x1a8] sm:$0xff]
  %v76 = vld [vmem:[%s0 + $0x1b0] sm:$0xff]
  %v77 = vld [vmem:[%s0 + $0x1b8] sm:$0xff]
  %v78 = vld [vmem:[%s0 + $0x1c0] sm:$0xff]
  %v79 = vld [vmem:[%s0 + $0x1c8] sm:$0xff]
  %v80 = vld [vmem:[%s0 + $0x1d0] sm:$0xff]
  %v81 = vld [vmem:[%s0 + $0x1d8] sm:$0xff]
  %v82 = vld [vmem:[%s0 + $0x1e0] sm:$0xff]
  %v83 = vld [vmem:[%s0 + $0x1e8] sm:$0xff]
  %v84 = vld [vmem:[%s0 + $0x1f0] sm:$0xff]
  %v85 = vld [vmem:[%s0 + $0x1f8] sm:$0xff]
  %v86 = vld [vmem:[%s1] sm:$0xf]
  %v87 = vld [vmem:[%s1 + $0x4] sm:$0xf]
  %v88 = vld [vmem:[%s1 + $0x8] sm:$0xf]
  %v89 = vld [vmem:[%s1 + $0xc] sm:$0xf]
  %v90 = vld [vmem:[%s1 + $0x10] sm:$0xf]
  %v91 = vld [vmem:[%s1 + $0x14] sm:$0xf]
  %v92 = vld [vmem:[%s1 + $0x18] sm:$0xf]
  %v93 = vld [vmem:[%s1 + $0x1c] sm:$0xf]
  %v94 = vld [vmem:[%s1 + $0x20] sm:$0xf]
  %v95 = vld [vmem:[%s1 + $0x24] sm:$0xf]
  %v96 = vld [vmem:[%s1 + $0x28] sm:$0xf]
  %v97 = vld [vmem:[%s1 + $0x2c] sm:$0xf]
  %v98 = vld [vmem:[%s1 + $0x30] sm:$0xf]
  %v99 = vld [vmem:[%s1 + $0x34] sm:$0xf]
  %v100 = vld [vmem:[%s1 + $0x38] sm:$0xf]
  %v101 = vld [vmem:[%s1 + $0x3c] sm:$0xf]
  %v102 = vld [vmem:[%s1 + $0x40] sm:$0xf]
  %v103 = vld [vmem:[%s1 + $0x44] sm:$0xf]
  %v104 = vld [vmem:[%s1 + $0x48] sm:$0xf]
  %v105 = vld [vmem:[%s1 + $0x4c] sm:$0xf]
  %v106 = vld [vmem:[%s1 + $0x50] sm:$0xf]
  %v107 = vld [vmem:[%s1 + $0x54] sm:$0xf]
  %v108 = vld [vmem:[%s1 + $0x58] sm:$0xf]
  %v109 = vld [vmem:[%s1 + $0x5c] sm:$0xf]
  %v110 = vld [vmem:[%s1 + $0x60] sm:$0x3]
  %v175 = vunpack.c.l.b16 %v22
  %v176 = vunpack.c.h.b16 %v22
  %v177 = vunpack.c.l.b16 %v23
  %v178 = vunpack.c.h.b16 %v23
  %v179 = vunpack.c.l.b16 %v24
  %v180 = vunpack.c.h.b16 %v24
  %v181 = vunpack.c.l.b16 %v25
  %v182 = vunpack.c.h.b16 %v25
  %v183 = vunpack.c.l.b16 %v26
  %v184 = vunpack.c.h.b16 %v26
  %v185 = vunpack.c.l.b16 %v27
  %v186 = vunpack.c.h.b16 %v27
  %v187 = vunpack.c.l.b16 %v28
  %v188 = vunpack.c.h.b16 %v28
  %v189 = vunpack.c.l.b16 %v29
  %v190 = vunpack.c.h.b16 %v29
  %v191 = vunpack.c.l.b16 %v30
  %v192 = vunpack.c.h.b16 %v30
  %v193 = vunpack.c.l.b16 %v31
  %v194 = vunpack.c.h.b16 %v31
  %v195 = vunpack.c.l.b16 %v32
  %v196 = vunpack.c.h.b16 %v32
  %v197 = vunpack.c.l.b16 %v33
  %v198 = vunpack.c.h.b16 %v33
  %v199 = vunpack.c.l.b16 %v34
  %v200 = vunpack.c.h.b16 %v34
  %v201 = vunpack.c.l.b16 %v35
  %v202 = vunpack.c.h.b16 %v35
  %v203 = vunpack.c.l.b16 %v36
  %v204 = vunpack.c.h.b16 %v36
  %v205 = vunpack.c.l.b16 %v37
  %v206 = vunpack.c.h.b16 %v37
  %v207 = vunpack.c.l.b16 %v38
  %v208 = vunpack.c.h.b16 %v38
  %v209 = vunpack.c.l.b16 %v39
  %v210 = vunpack.c.h.b16 %v39
  %v211 = vunpack.c.l.b16 %v40
  %v212 = vunpack.c.h.b16 %v40
  %v213 = vunpack.c.l.b16 %v41
  %v214 = vunpack.c.h.b16 %v41
  %v215 = vunpack.c.l.b16 %v42
  %v216 = vunpack.c.h.b16 %v42
  %v217 = vunpack.c.l.b16 %v43
  %v218 = vunpack.c.h.b16 %v43
  %v219 = vunpack.c.l.b16 %v44
  %v220 = vunpack.c.h.b16 %v44
  %v221 = vunpack.c.l.b16 %v45
  %v222 = vunpack.c.h.b16 %v45
  %v223 = vunpack.c.l.b16 %v46
  %v224 = vunpack.c.h.b16 %v46
  %v225 = vunpack.c.l.b16 %v47
  %v226 = vunpack.c.h.b16 %v47
  %v227 = vunpack.c.l.b16 %v48
  %v228 = vunpack.c.h.b16 %v48
  %v229 = vunpack.c.l.b16 %v49
  %v230 = vunpack.c.h.b16 %v49
  %v231 = vunpack.c.l.b16 %v50
  %v232 = vunpack.c.h.b16 %v50
  %v233 = vunpack.c.l.b16 %v51
  %v234 = vunpack.c.h.b16 %v51
  %v235 = vunpack.c.l.b16 %v52
  %v236 = vunpack.c.h.b16 %v52
  %v237 = vunpack.c.l.b16 %v53
  %v238 = vunpack.c.h.b16 %v53
  %v239 = vunpack.c.l.b16 %v54
  %v240 = vunpack.c.h.b16 %v54
  %v241 = vunpack.c.l.b16 %v55
  %v242 = vunpack.c.h.b16 %v55
  %v243 = vunpack.c.l.b16 %v56
  %v244 = vunpack.c.h.b16 %v56
  %v245 = vunpack.c.l.b16 %v57
  %v246 = vunpack.c.h.b16 %v57
  %v247 = vunpack.c.l.b16 %v58
  %v248 = vunpack.c.h.b16 %v58
  %v249 = vunpack.c.l.b16 %v59
  %v250 = vunpack.c.h.b16 %v59
  %v251 = vunpack.c.l.b16 %v60
  %v252 = vunpack.c.h.b16 %v60
  %v253 = vunpack.c.l.b16 %v61
  %v254 = vunpack.c.h.b16 %v61
  %v255 = vunpack.c.l.b16 %v62
  %v256 = vunpack.c.h.b16 %v62
  %v257 = vunpack.c.l.b16 %v63
  %v258 = vunpack.c.h.b16 %v63
  %v259 = vunpack.c.l.b16 %v64
  %v260 = vunpack.c.h.b16 %v64
  %v261 = vunpack.c.l.b16 %v65
  %v262 = vunpack.c.h.b16 %v65
  %v263 = vunpack.c.l.b16 %v66
  %v264 = vunpack.c.h.b16 %v66
  %v265 = vunpack.c.l.b16 %v67
  %v266 = vunpack.c.h.b16 %v67
  %v267 = vunpack.c.l.b16 %v68
  %v268 = vunpack.c.h.b16 %v68
  %v269 = vunpack.c.l.b16 %v69
  %v270 = vunpack.c.h.b16 %v69
  %v271 = vunpack.c.l.b16 %v70
  %v272 = vunpack.c.h.b16 %v70
  %v273 = vunpack.c.l.b16 %v71
  %v274 = vunpack.c.h.b16 %v71
  %v275 = vunpack.c.l.b16 %v72
  %v276 = vunpack.c.h.b16 %v72
  %v277 = vunpack.c.l.b16 %v73
  %v278 = vunpack.c.h.b16 %v73
  %v279 = vunpack.c.l.b16 %v74
  %v280 = vunpack.c.h.b16 %v74
  %v281 = vunpack.c.l.b16 %v75
  %v282 = vunpack.c.h.b16 %v75
  %v283 = vunpack.c.l.b16 %v76
  %v284 = vunpack.c.h.b16 %v76
  %v285 = vunpack.c.l.b16 %v77
  %v286 = vunpack.c.h.b16 %v77
  %v287 = vunpack.c.l.b16 %v78
  %v288 = vunpack.c.h.b16 %v78
  %v289 = vunpack.c.l.b16 %v79
  %v290 = vunpack.c.h.b16 %v79
  %v291 = vunpack.c.l.b16 %v80
  %v292 = vunpack.c.h.b16 %v80
  %v293 = vunpack.c.l.b16 %v81
  %v294 = vunpack.c.h.b16 %v81
  %v295 = vunpack.c.l.b16 %v82
  %v296 = vunpack.c.h.b16 %v82
  %v297 = vunpack.c.l.b16 %v83
  %v298 = vunpack.c.h.b16 %v83
  %v299 = vunpack.c.l.b16 %v84
  %v300 = vunpack.c.h.b16 %v84
  %v301 = vunpack.c.l.b16 %v85
  %v302 = vunpack.c.h.b16 %v85
  %v303 = vpack.c.b16 %v177, %v175
  %v304 = vpack.c.b16 %v178, %v176
  %v305 = vpack.c.b16 %v181, %v179
  %v306 = vpack.c.b16 %v182, %v180
  %v307 = vpack.c.b16 %v185, %v183
  %v308 = vpack.c.b16 %v186, %v184
  %v309 = vpack.c.b16 %v189, %v187
  %v310 = vpack.c.b16 %v190, %v188
  %v311 = vpack.c.b16 %v193, %v191
  %v312 = vpack.c.b16 %v194, %v192
  %v313 = vpack.c.b16 %v197, %v195
  %v314 = vpack.c.b16 %v198, %v196
  %v315 = vpack.c.b16 %v201, %v199
  %v316 = vpack.c.b16 %v202, %v200
  %v317 = vpack.c.b16 %v205, %v203
  %v318 = vpack.c.b16 %v206, %v204
  %v319 = vpack.c.b16 %v209, %v207
  %v320 = vpack.c.b16 %v210, %v208
  %v321 = vpack.c.b16 %v213, %v211
  %v322 = vpack.c.b16 %v214, %v212
  %v323 = vpack.c.b16 %v217, %v215
  %v324 = vpack.c.b16 %v218, %v216
  %v325 = vpack.c.b16 %v221, %v219
  %v326 = vpack.c.b16 %v222, %v220
  %v327 = vpack.c.b16 %v225, %v223
  %v328 = vpack.c.b16 %v226, %v224
  %v329 = vpack.c.b16 %v229, %v227
  %v330 = vpack.c.b16 %v230, %v228
  %v331 = vpack.c.b16 %v233, %v231
  %v332 = vpack.c.b16 %v234, %v232
  %v333 = vpack.c.b16 %v237, %v235
  %v334 = vpack.c.b16 %v238, %v236
  %v335 = vpack.c.b16 %v241, %v239
  %v336 = vpack.c.b16 %v242, %v240
  %v337 = vpack.c.b16 %v245, %v243
  %v338 = vpack.c.b16 %v246, %v244
  %v339 = vpack.c.b16 %v249, %v247
  %v340 = vpack.c.b16 %v250, %v248
  %v341 = vpack.c.b16 %v253, %v251
  %v342 = vpack.c.b16 %v254, %v252
  %v343 = vpack.c.b16 %v257, %v255
  %v344 = vpack.c.b16 %v258, %v256
  %v345 = vpack.c.b16 %v261, %v259
  %v346 = vpack.c.b16 %v262, %v260
  %v347 = vpack.c.b16 %v265, %v263
  %v348 = vpack.c.b16 %v266, %v264
  %v349 = vpack.c.b16 %v269, %v267
  %v350 = vpack.c.b16 %v270, %v268
  %v351 = vpack.c.b16 %v273, %v271
  %v352 = vpack.c.b16 %v274, %v272
  %v353 = vpack.c.b16 %v277, %v275
  %v354 = vpack.c.b16 %v278, %v276
  %v355 = vpack.c.b16 %v281, %v279
  %v356 = vpack.c.b16 %v282, %v280
  %v357 = vpack.c.b16 %v285, %v283
  %v358 = vpack.c.b16 %v286, %v284
  %v359 = vpack.c.b16 %v289, %v287
  %v360 = vpack.c.b16 %v290, %v288
  %v361 = vpack.c.b16 %v293, %v291
  %v362 = vpack.c.b16 %v294, %v292
  %v363 = vpack.c.b16 %v297, %v295
  %v364 = vpack.c.b16 %v298, %v296
  %v365 = vpack.c.b16 %v301, %v299
  %v366 = vpack.c.b16 %v302, %v300
  %v424 = vunpack.c.l.b16 %v86
  %v425 = vunpack.c.l.b16 %v87
  %v426 = vunpack.c.l.b16 %v88
  %v427 = vunpack.c.l.b16 %v89
  %v428 = vunpack.c.l.b16 %v90
  %v429 = vunpack.c.l.b16 %v91
  %v430 = vunpack.c.l.b16 %v92
  %v431 = vunpack.c.l.b16 %v93
  %v432 = vunpack.c.l.b16 %v94
  %v433 = vunpack.c.l.b16 %v95
  %v434 = vunpack.c.l.b16 %v96
  %v435 = vunpack.c.l.b16 %v97
  %v436 = vunpack.c.l.b16 %v98
  %v437 = vunpack.c.l.b16 %v99
  %v438 = vunpack.c.l.b16 %v100
  %v439 = vunpack.c.l.b16 %v101
  %v440 = vunpack.c.l.b16 %v102
  %v441 = vunpack.c.l.b16 %v103
  %v442 = vunpack.c.l.b16 %v104
  %v443 = vunpack.c.l.b16 %v105
  %v444 = vunpack.c.l.b16 %v106
  %v445 = vunpack.c.l.b16 %v107
  %v446 = vunpack.c.l.b16 %v108
  %v447 = vunpack.c.l.b16 %v109
  %v448 = vunpack.c.l.b16 %v110
  %v449 = vpack.c.b16 %v425, %v424
  %v450 = vpack.c.b16 %v427, %v426
  %v451 = vpack.c.b16 %v429, %v428
  %v452 = vpack.c.b16 %v431, %v430
  %v453 = vpack.c.b16 %v433, %v432
  %v454 = vpack.c.b16 %v435, %v434
  %v455 = vpack.c.b16 %v437, %v436
  %v456 = vpack.c.b16 %v439, %v438
  %v457 = vpack.c.b16 %v441, %v440
  %v458 = vpack.c.b16 %v443, %v442
  %v459 = vpack.c.b16 %v445, %v444
  %v460 = vpack.c.b16 %v447, %v446
  %v461 = vpack.c.b16 %v448, %v448
  %vm474 = vcmask 556032
  %v476 = vsel %vm474, %v304, 0
  %v479 = vsel %vm474, %v306, 0
  %v482 = vsel %vm474, %v308, 0
  %v485 = vsel %vm474, %v310, 0
  %v488 = vsel %vm474, %v312, 0
  %v491 = vsel %vm474, %v314, 0
  %v494 = vsel %vm474, %v316, 0
  %v497 = vsel %vm474, %v318, 0
  %v500 = vsel %vm474, %v320, 0
  %v503 = vsel %vm474, %v322, 0
  %v506 = vsel %vm474, %v324, 0
  %v509 = vsel %vm474, %v326, 0
  %v512 = vsel %vm474, %v328, 0
  %v515 = vsel %vm474, %v330, 0
  %v518 = vsel %vm474, %v332, 0
  %v521 = vsel %vm474, %v334, 0
  %v524 = vsel %vm474, %v336, 0
  %v527 = vsel %vm474, %v338, 0
  %v530 = vsel %vm474, %v340, 0
  %v533 = vsel %vm474, %v342, 0
  %v536 = vsel %vm474, %v344, 0
  %v539 = vsel %vm474, %v346, 0
  %v542 = vsel %vm474, %v348, 0
  %v545 = vsel %vm474, %v350, 0
  %v548 = vsel %vm474, %v352, 0
  %v551 = vsel %vm474, %v354, 0
  %v554 = vsel %vm474, %v356, 0
  %v557 = vsel %vm474, %v358, 0
  %v560 = vsel %vm474, %v360, 0
  %v563 = vsel %vm474, %v362, 0
  %v566 = vsel %vm474, %v364, 0
  %v569 = vsel %vm474, %v366, 0
  %vm571 = vcmask 1041408
  %v573 = vsel %vm571, %v461, 0
  %575 = vmatprep.subr.bf16.mxu0 0
  %576 = vmatpush1.bf16.msra.mxu0 %v449
  %577 = vmatprep.subr.bf16.mxu0 0
  %578 = vmatpush1.bf16.msra.mxu0 %v450
  %579 = vmatprep.subr.bf16.mxu0 0
  %580 = vmatpush1.bf16.msra.mxu0 %v451
  %581 = vmatprep.subr.bf16.mxu0 0
  %582 = vmatpush1.bf16.msra.mxu0 %v452
  %583 = vmatprep.subr.bf16.mxu0 0
  %584 = vmatpush1.bf16.msra.mxu0 %v453
  %585 = vmatprep.subr.bf16.mxu0 0
  %586 = vmatpush1.bf16.msra.mxu0 %v454
  %587 = vmatprep.subr.bf16.mxu0 0
  %588 = vmatpush1.bf16.msra.mxu0 %v455
  %589 = vmatprep.subr.bf16.mxu0 0
  %590 = vmatpush1.bf16.msra.mxu0 %v456
  %591 = vmatprep.subr.bf16.mxu0 0
  %592 = vmatpush1.bf16.msra.mxu0 %v457
  %593 = vmatprep.subr.bf16.mxu0 0
  %594 = vmatpush1.bf16.msra.mxu0 %v458
  %595 = vmatprep.subr.bf16.mxu0 0
  %596 = vmatpush1.bf16.msra.mxu0 %v459
  %597 = vmatprep.subr.bf16.mxu0 0
  %598 = vmatpush1.bf16.msra.mxu0 %v460
  %599 = vmatprep.subr.bf16.mxu0 0
  %600 = vmatpush1.bf16.msra.mxu0 %v573
  %601 = vmatprep.subr.bf16.mxu0 0
  %602 = vmatpush1.bf16.msra.mxu0 0
  %603 = vmatprep.subr.bf16.mxu0 0
  %604 = vmatpush1.bf16.msra.mxu0 0
  %605 = vmatprep.subr.bf16.mxu0 0
  %606 = vmatpush1.bf16.msra.mxu0 0
  %607 = vmatprep.mubr.bf16.mxu0 %v476
  %608 = vmatmul.mubr.bf16.gmra.mrb[0].mxu0 %v303
  %v609 = vpop.f32.mrb[0].mxu0
  %v610 = vadd.f32 0.0, %v609
  %v611 = vpop.f32.mrb[0].mxu0
  %v612 = vpop.f32.mrb[0].mxu0
  %v613 = vadd.f32 0.0, %v612
  %v614 = vpop.f32.mrb[0].mxu0
  %615 = vmatprep.mubr.bf16.mxu0 %v479
  %616 = vmatmul.mubr.bf16.gmra.mrb[0].mxu0 %v305
  %v617 = vpop.f32.mrb[0].mxu0
  %v618 = vadd.f32 0.0, %v617
  %v619 = vpop.f32.mrb[0].mxu0
  %v620 = vpop.f32.mrb[0].mxu0
  %v621 = vadd.f32 0.0, %v620
  %v622 = vpop.f32.mrb[0].mxu0
  %623 = vmatprep.mubr.bf16.mxu0 %v482
  %624 = vmatmul.mubr.bf16.gmra.mrb[0].mxu0 %v307
  %v625 = vpop.f32.mrb[0].mxu0
  %v626 = vadd.f32 0.0, %v625
  %v627 = vpop.f32.mrb[0].mxu0
  %v628 = vpop.f32.mrb[0].mxu0
  %v629 = vadd.f32 0.0, %v628
  %v630 = vpop.f32.mrb[0].mxu0
  %631 = vmatprep.mubr.bf16.mxu0 %v485
  %632 = vmatmul.mubr.bf16.gmra.mrb[0].mxu0 %v309
  %v633 = vpop.f32.mrb[0].mxu0
  %v634 = vadd.f32 0.0, %v633
  %v635 = vpop.f32.mrb[0].mxu0
  %v636 = vpop.f32.mrb[0].mxu0
  %v637 = vadd.f32 0.0, %v636
  %v638 = vpop.f32.mrb[0].mxu0
  %639 = vmatprep.mubr.bf16.mxu0 %v488
  %640 = vmatmul.mubr.bf16.gmra.mrb[0].mxu0 %v311
  %v641 = vpop.f32.mrb[0].mxu0
  %v642 = vadd.f32 0.0, %v641
  %v643 = vpop.f32.mrb[0].mxu0
  %v644 = vpop.f32.mrb[0].mxu0
  %v645 = vadd.f32 0.0, %v644
  %v646 = vpop.f32.mrb[0].mxu0
  %647 = vmatprep.mubr.bf16.mxu0 %v491
  %648 = vmatmul.mubr.bf16.gmra.mrb[0].mxu0 %v313
  %v649 = vpop.f32.mrb[0].mxu0
  %v650 = vadd.f32 0.0, %v649
  %v651 = vpop.f32.mrb[0].mxu0
  %v652 = vpop.f32.mrb[0].mxu0
  %v653 = vadd.f32 0.0, %v652
  %v654 = vpop.f32.mrb[0].mxu0
  %655 = vmatprep.mubr.bf16.mxu0 %v494
  %656 = vmatmul.mubr.bf16.gmra.mrb[0].mxu0 %v315
  %v657 = vpop.f32.mrb[0].mxu0
  %v658 = vadd.f32 0.0, %v657
  %v659 = vpop.f32.mrb[0].mxu0
  %v660 = vpop.f32.mrb[0].mxu0
  %v661 = vadd.f32 0.0, %v660
  %v662 = vpop.f32.mrb[0].mxu0
  %663 = vmatprep.mubr.bf16.mxu0 %v497
  %664 = vmatmul.mubr.bf16.gmra.mrb[0].mxu0 %v317
  %v665 = vpop.f32.mrb[0].mxu0
  %v666 = vadd.f32 0.0, %v665
  %v667 = vpop.f32.mrb[0].mxu0
  %v668 = vpop.f32.mrb[0].mxu0
  %v669 = vadd.f32 0.0, %v668
  %v670 = vpop.f32.mrb[0].mxu0
  %671 = vmatprep.mubr.bf16.mxu0 %v500
  %672 = vmatmul.mubr.bf16.gmra.mrb[0].mxu0 %v319
  %v673 = vpop.f32.mrb[0].mxu0
  %v674 = vadd.f32 0.0, %v673
  %v675 = vpop.f32.mrb[0].mxu0
  %v676 = vpop.f32.mrb[0].mxu0
  %v677 = vadd.f32 0.0, %v676
  %v678 = vpop.f32.mrb[0].mxu0
  %679 = vmatprep.mubr.bf16.mxu0 %v503
  %680 = vmatmul.mubr.bf16.gmra.mrb[0].mxu0 %v321
  %v681 = vpop.f32.mrb[0].mxu0
  %v682 = vadd.f32 0.0, %v681
  %v683 = vpop.f32.mrb[0].mxu0
  %v684 = vpop.f32.mrb[0].mxu0
  %v685 = vadd.f32 0.0, %v684
  %v686 = vpop.f32.mrb[0].mxu0
  %687 = vmatprep.mubr.bf16.mxu0 %v506
  %688 = vmatmul.mubr.bf16.gmra.mrb[0].mxu0 %v323
  %v689 = vpop.f32.mrb[0].mxu0
  %v690 = vadd.f32 0.0, %v689
  %v691 = vpop.f32.mrb[0].mxu0
  %v692 = vpop.f32.mrb[0].mxu0
  %v693 = vadd.f32 0.0, %v692
  %v694 = vpop.f32.mrb[0].mxu0
  %695 = vmatprep.mubr.bf16.mxu0 %v509
  %696 = vmatmul.mubr.bf16.gmra.mrb[0].mxu0 %v325
  %v697 = vpop.f32.mrb[0].mxu0
  %v698 = vadd.f32 0.0, %v697
  %v699 = vpop.f32.mrb[0].mxu0
  %v700 = vpop.f32.mrb[0].mxu0
  %v701 = vadd.f32 0.0, %v700
  %v702 = vpop.f32.mrb[0].mxu0
  %703 = vmatprep.mubr.bf16.mxu0 %v512
  %704 = vmatmul.mubr.bf16.gmra.mrb[0].mxu0 %v327
  %v705 = vpop.f32.mrb[0].mxu0
  %v706 = vadd.f32 0.0, %v705
  %v707 = vpop.f32.mrb[0].mxu0
  %v708 = vpop.f32.mrb[0].mxu0
  %v709 = vadd.f32 0.0, %v708
  %v710 = vpop.f32.mrb[0].mxu0
  %711 = vmatprep.mubr.bf16.mxu0 %v515
  %712 = vmatmul.mubr.bf16.gmra.mrb[0].mxu0 %v329
  %v713 = vpop.f32.mrb[0].mxu0
  %v714 = vadd.f32 0.0, %v713
  %v715 = vpop.f32.mrb[0].mxu0
  %v716 = vpop.f32.mrb[0].mxu0
  %v717 = vadd.f32 0.0, %v716
  %v718 = vpop.f32.mrb[0].mxu0
  %719 = vmatprep.mubr.bf16.mxu0 %v518
  %720 = vmatmul.mubr.bf16.gmra.mrb[0].mxu0 %v331
  %v721 = vpop.f32.mrb[0].mxu0
  %v722 = vadd.f32 0.0, %v721
  %v723 = vpop.f32.mrb[0].mxu0
  %v724 = vpop.f32.mrb[0].mxu0
  %v725 = vadd.f32 0.0, %v724
  %v726 = vpop.f32.mrb[0].mxu0
  %727 = vmatprep.mubr.bf16.mxu0 %v521
  %728 = vmatmul.mubr.bf16.gmra.mrb[0].mxu0 %v333
  %v729 = vpop.f32.mrb[0].mxu0
  %v730 = vadd.f32 0.0, %v729
  %v731 = vpop.f32.mrb[0].mxu0
  %v732 = vpop.f32.mrb[0].mxu0
  %v733 = vadd.f32 0.0, %v732
  %v734 = vpop.f32.mrb[0].mxu0
  %735 = vmatprep.mubr.bf16.mxu0 %v524
  %736 = vmatmul.mubr.bf16.gmra.mrb[0].mxu0 %v335
  %v737 = vpop.f32.mrb[0].mxu0
  %v738 = vadd.f32 0.0, %v737
  %v739 = vpop.f32.mrb[0].mxu0
  %v740 = vpop.f32.mrb[0].mxu0
  %v741 = vadd.f32 0.0, %v740
  %v742 = vpop.f32.mrb[0].mxu0
  %743 = vmatprep.mubr.bf16.mxu0 %v527
  %744 = vmatmul.mubr.bf16.gmra.mrb[0].mxu0 %v337
  %v745 = vpop.f32.mrb[0].mxu0
  %v746 = vadd.f32 0.0, %v745
  %v747 = vpop.f32.mrb[0].mxu0
  %v748 = vpop.f32.mrb[0].mxu0
  %v749 = vadd.f32 0.0, %v748
  %v750 = vpop.f32.mrb[0].mxu0
  %751 = vmatprep.mubr.bf16.mxu0 %v530
  %752 = vmatmul.mubr.bf16.gmra.mrb[0].mxu0 %v339
  %v753 = vpop.f32.mrb[0].mxu0
  %v754 = vadd.f32 0.0, %v753
  %v755 = vpop.f32.mrb[0].mxu0
  %v756 = vpop.f32.mrb[0].mxu0
  %v757 = vadd.f32 0.0, %v756
  %v758 = vpop.f32.mrb[0].mxu0
  %759 = vmatprep.mubr.bf16.mxu0 %v533
  %760 = vmatmul.mubr.bf16.gmra.mrb[0].mxu0 %v341
  %v761 = vpop.f32.mrb[0].mxu0
  %v762 = vadd.f32 0.0, %v761
  %v763 = vpop.f32.mrb[0].mxu0
  %v764 = vpop.f32.mrb[0].mxu0
  %v765 = vadd.f32 0.0, %v764
  %v766 = vpop.f32.mrb[0].mxu0
  %767 = vmatprep.mubr.bf16.mxu0 %v536
  %768 = vmatmul.mubr.bf16.gmra.mrb[0].mxu0 %v343
  %v769 = vpop.f32.mrb[0].mxu0
  %v770 = vadd.f32 0.0, %v769
  %v771 = vpop.f32.mrb[0].mxu0
  %v772 = vpop.f32.mrb[0].mxu0
  %v773 = vadd.f32 0.0, %v772
  %v774 = vpop.f32.mrb[0].mxu0
  %775 = vmatprep.mubr.bf16.mxu0 %v539
  %776 = vmatmul.mubr.bf16.gmra.mrb[0].mxu0 %v345
  %v777 = vpop.f32.mrb[0].mxu0
  %v778 = vadd.f32 0.0, %v777
  %v779 = vpop.f32.mrb[0].mxu0
  %v780 = vpop.f32.mrb[0].mxu0
  %v781 = vadd.f32 0.0, %v780
  %v782 = vpop.f32.mrb[0].mxu0
  %783 = vmatprep.mubr.bf16.mxu0 %v542
  %784 = vmatmul.mubr.bf16.gmra.mrb[0].mxu0 %v347
  %v785 = vpop.f32.mrb[0].mxu0
  %v786 = vadd.f32 0.0, %v785
  %v787 = vpop.f32.mrb[0].mxu0
  %v788 = vpop.f32.mrb[0].mxu0
  %v789 = vadd.f32 0.0, %v788
  %v790 = vpop.f32.mrb[0].mxu0
  %791 = vmatprep.mubr.bf16.mxu0 %v545
  %792 = vmatmul.mubr.bf16.gmra.mrb[0].mxu0 %v349
  %v793 = vpop.f32.mrb[0].mxu0
  %v794 = vadd.f32 0.0, %v793
  %v795 = vpop.f32.mrb[0].mxu0
  %v796 = vpop.f32.mrb[0].mxu0
  %v797 = vadd.f32 0.0, %v796
  %v798 = vpop.f32.mrb[0].mxu0
  %799 = vmatprep.mubr.bf16.mxu0 %v548
  %800 = vmatmul.mubr.bf16.gmra.mrb[0].mxu0 %v351
  %v801 = vpop.f32.mrb[0].mxu0
  %v802 = vadd.f32 0.0, %v801
  %v803 = vpop.f32.mrb[0].mxu0
  %v804 = vpop.f32.mrb[0].mxu0
  %v805 = vadd.f32 0.0, %v804
  %v806 = vpop.f32.mrb[0].mxu0
  %807 = vmatprep.mubr.bf16.mxu0 %v551
  %808 = vmatmul.mubr.bf16.gmra.mrb[0].mxu0 %v353
  %v809 = vpop.f32.mrb[0].mxu0
  %v810 = vadd.f32 0.0, %v809
  %v811 = vpop.f32.mrb[0].mxu0
  %v812 = vpop.f32.mrb[0].mxu0
  %v813 = vadd.f32 0.0, %v812
  %v814 = vpop.f32.mrb[0].mxu0
  %815 = vmatprep.mubr.bf16.mxu0 %v554
  %816 = vmatmul.mubr.bf16.gmra.mrb[0].mxu0 %v355
  %v817 = vpop.f32.mrb[0].mxu0
  %v818 = vadd.f32 0.0, %v817
  %v819 = vpop.f32.mrb[0].mxu0
  %v820 = vpop.f32.mrb[0].mxu0
  %v821 = vadd.f32 0.0, %v820
  %v822 = vpop.f32.mrb[0].mxu0
  %823 = vmatprep.mubr.bf16.mxu0 %v557
  %824 = vmatmul.mubr.bf16.gmra.mrb[0].mxu0 %v357
  %v825 = vpop.f32.mrb[0].mxu0
  %v826 = vadd.f32 0.0, %v825
  %v827 = vpop.f32.mrb[0].mxu0
  %v828 = vpop.f32.mrb[0].mxu0
  %v829 = vadd.f32 0.0, %v828
  %v830 = vpop.f32.mrb[0].mxu0
  %831 = vmatprep.mubr.bf16.mxu0 %v560
  %832 = vmatmul.mubr.bf16.gmra.mrb[0].mxu0 %v359
  %v833 = vpop.f32.mrb[0].mxu0
  %v834 = vadd.f32 0.0, %v833
  %v835 = vpop.f32.mrb[0].mxu0
  %v836 = vpop.f32.mrb[0].mxu0
  %v837 = vadd.f32 0.0, %v836
  %v838 = vpop.f32.mrb[0].mxu0
  %839 = vmatprep.mubr.bf16.mxu0 %v563
  %840 = vmatmul.mubr.bf16.gmra.mrb[0].mxu0 %v361
  %v841 = vpop.f32.mrb[0].mxu0
  %v842 = vadd.f32 0.0, %v841
  %v843 = vpop.f32.mrb[0].mxu0
  %v844 = vpop.f32.mrb[0].mxu0
  %v845 = vadd.f32 0.0, %v844
  %v846 = vpop.f32.mrb[0].mxu0
  %847 = vmatprep.mubr.bf16.mxu0 %v566
  %848 = vmatmul.mubr.bf16.gmra.mrb[0].mxu0 %v363
  %v849 = vpop.f32.mrb[0].mxu0
  %v850 = vadd.f32 0.0, %v849
  %v851 = vpop.f32.mrb[0].mxu0
  %v852 = vpop.f32.mrb[0].mxu0
  %v853 = vadd.f32 0.0, %v852
  %v854 = vpop.f32.mrb[0].mxu0
  %855 = vmatprep.mubr.bf16.mxu0 %v569
  %856 = vmatmul.mubr.bf16.gmra.mrb[0].mxu0 %v365
  %v857 = vpop.f32.mrb[0].mxu0
  %v858 = vadd.f32 0.0, %v857
  %v859 = vpop.f32.mrb[0].mxu0
  %v860 = vpop.f32.mrb[0].mxu0
  %v861 = vadd.f32 0.0, %v860
  %v862 = vpop.f32.mrb[0].mxu0
  %863 = vdwg.mxu0
  %vm864 = vcmask 64512
  %865 = vst.msk [vmem:[%s2] sm:$0xff] %vm864, %v610
  %866 = vst.msk [vmem:[%s2 + $0x8] sm:$0xff] %vm864, %v613
  %867 = vst.msk [vmem:[%s2 + $0x10] sm:$0xff] %vm864, %v618
  %868 = vst.msk [vmem:[%s2 + $0x18] sm:$0xff] %vm864, %v621
  %869 = vst.msk [vmem:[%s2 + $0x20] sm:$0xff] %vm864, %v626
  %870 = vst.msk [vmem:[%s2 + $0x28] sm:$0xff] %vm864, %v629
  %871 = vst.msk [vmem:[%s2 + $0x30] sm:$0xff] %vm864, %v634
  %872 = vst.msk [vmem:[%s2 + $0x38] sm:$0xff] %vm864, %v637
  %873 = vst.msk [vmem:[%s2 + $0x40] sm:$0xff] %vm864, %v642
  %874 = vst.msk [vmem:[%s2 + $0x48] sm:$0xff] %vm864, %v645
  %875 = vst.msk [vmem:[%s2 + $0x50] sm:$0xff] %vm864, %v650
  %876 = vst.msk [vmem:[%s2 + $0x58] sm:$0xff] %vm864, %v653
  %877 = vst.msk [vmem:[%s2 + $0x60] sm:$0xff] %vm864, %v658
  %878 = vst.msk [vmem:[%s2 + $0x68] sm:$0xff] %vm864, %v661
  %879 = vst.msk [vmem:[%s2 + $0x70] sm:$0xff] %vm864, %v666
  %880 = vst.msk [vmem:[%s2 + $0x78] sm:$0xff] %vm864, %v669
  %881 = vst.msk [vmem:[%s2 + $0x80] sm:$0xff] %vm864, %v674
  %882 = vst.msk [vmem:[%s2 + $0x88] sm:$0xff] %vm864, %v677
  %883 = vst.msk [vmem:[%s2 + $0x90] sm:$0xff] %vm864, %v682
  %884 = vst.msk [vmem:[%s2 + $0x98] sm:$0xff] %vm864, %v685
  %885 = vst.msk [vmem:[%s2 + $0xa0] sm:$0xff] %vm864, %v690
  %886 = vst.msk [vmem:[%s2 + $0xa8] sm:$0xff] %vm864, %v693
  %887 = vst.msk [vmem:[%s2 + $0xb0] sm:$0xff] %vm864, %v698
  %888 = vst.msk [vmem:[%s2 + $0xb8] sm:$0xff] %vm864, %v701
  %889 = vst.msk [vmem:[%s2 + $0xc0] sm:$0xff] %vm864, %v706
  %890 = vst.msk [vmem:[%s2 + $0xc8] sm:$0xff] %vm864, %v709
  %891 = vst.msk [vmem:[%s2 + $0xd0] sm:$0xff] %vm864, %v714
  %892 = vst.msk [vmem:[%s2 + $0xd8] sm:$0xff] %vm864, %v717
  %893 = vst.msk [vmem:[%s2 + $0xe0] sm:$0xff] %vm864, %v722
  %894 = vst.msk [vmem:[%s2 + $0xe8] sm:$0xff] %vm864, %v725
  %895 = vst.msk [vmem:[%s2 + $0xf0] sm:$0xff] %vm864, %v730
  %896 = vst.msk [vmem:[%s2 + $0xf8] sm:$0xff] %vm864, %v733
  %897 = vst.msk [vmem:[%s2 + $0x100] sm:$0xff] %vm864, %v738
  %898 = vst.msk [vmem:[%s2 + $0x108] sm:$0xff] %vm864, %v741
  %899 = vst.msk [vmem:[%s2 + $0x110] sm:$0xff] %vm864, %v746
  %900 = vst.msk [vmem:[%s2 + $0x118] sm:$0xff] %vm864, %v749
  %901 = vst.msk [vmem:[%s2 + $0x120] sm:$0xff] %vm864, %v754
  %902 = vst.msk [vmem:[%s2 + $0x128] sm:$0xff] %vm864, %v757
  %903 = vst.msk [vmem:[%s2 + $0x130] sm:$0xff] %vm864, %v762
  %904 = vst.msk [vmem:[%s2 + $0x138] sm:$0xff] %vm864, %v765
  %905 = vst.msk [vmem:[%s2 + $0x140] sm:$0xff] %vm864, %v770
  %906 = vst.msk [vmem:[%s2 + $0x148] sm:$0xff] %vm864, %v773
  %907 = vst.msk [vmem:[%s2 + $0x150] sm:$0xff] %vm864, %v778
  %908 = vst.msk [vmem:[%s2 + $0x158] sm:$0xff] %vm864, %v781
  %909 = vst.msk [vmem:[%s2 + $0x160] sm:$0xff] %vm864, %v786
  %910 = vst.msk [vmem:[%s2 + $0x168] sm:$0xff] %vm864, %v789
  %911 = vst.msk [vmem:[%s2 + $0x170] sm:$0xff] %vm864, %v794
  %912 = vst.msk [vmem:[%s2 + $0x178] sm:$0xff] %vm864, %v797
  %913 = vst.msk [vmem:[%s2 + $0x180] sm:$0xff] %vm864, %v802
  %914 = vst.msk [vmem:[%s2 + $0x188] sm:$0xff] %vm864, %v805
  %915 = vst.msk [vmem:[%s2 + $0x190] sm:$0xff] %vm864, %v810
  %916 = vst.msk [vmem:[%s2 + $0x198] sm:$0xff] %vm864, %v813
  %917 = vst.msk [vmem:[%s2 + $0x1a0] sm:$0xff] %vm864, %v818
  %918 = vst.msk [vmem:[%s2 + $0x1a8] sm:$0xff] %vm864, %v821
  %919 = vst.msk [vmem:[%s2 + $0x1b0] sm:$0xff] %vm864, %v826
  %920 = vst.msk [vmem:[%s2 + $0x1b8] sm:$0xff] %vm864, %v829
  %921 = vst.msk [vmem:[%s2 + $0x1c0] sm:$0xff] %vm864, %v834
  %922 = vst.msk [vmem:[%s2 + $0x1c8] sm:$0xff] %vm864, %v837
  %923 = vst.msk [vmem:[%s2 + $0x1d0] sm:$0xff] %vm864, %v842
  %924 = vst.msk [vmem:[%s2 + $0x1d8] sm:$0xff] %vm864, %v845
  %925 = vst.msk [vmem:[%s2 + $0x1e0] sm:$0xff] %vm864, %v850
  %926 = vst.msk [vmem:[%s2 + $0x1e8] sm:$0xff] %vm864, %v853
  %927 = vst.msk [vmem:[%s2 + $0x1f0] sm:$0xff] %vm864, %v858
  %928 = vst.msk [vmem:[%s2 + $0x1f8] sm:$0xff] %vm864, %v861
  %v929 = vld [vmem:[%s3] sm:$0x1]
  %v930 = vsel %vm864, %v610, 0.0
  %v931 = vsel %vm864, %v613, 0.0
  %v932 = vadd.f32 %v930, %v931
  %v933 = vsel %vm864, %v618, 0.0
  %v934 = vadd.f32 %v932, %v933
  %v935 = vsel %vm864, %v621, 0.0
  %v936 = vadd.f32 %v934, %v935
  %v937 = vsel %vm864, %v626, 0.0
  %v938 = vadd.f32 %v936, %v937
  %v939 = vsel %vm864, %v629, 0.0
  %v940 = vadd.f32 %v938, %v939
  %v941 = vsel %vm864, %v634, 0.0
  %v942 = vadd.f32 %v940, %v941
  %v943 = vsel %vm864, %v637, 0.0
  %v944 = vadd.f32 %v942, %v943
  %v945 = vsel %vm864, %v642, 0.0
  %v946 = vadd.f32 %v944, %v945
  %v947 = vsel %vm864, %v645, 0.0
  %v948 = vadd.f32 %v946, %v947
  %v949 = vsel %vm864, %v650, 0.0
  %v950 = vadd.f32 %v948, %v949
  %v951 = vsel %vm864, %v653, 0.0
  %v952 = vadd.f32 %v950, %v951
  %v953 = vsel %vm864, %v658, 0.0
  %v954 = vadd.f32 %v952, %v953
  %v955 = vsel %vm864, %v661, 0.0
  %v956 = vadd.f32 %v954, %v955
  %v957 = vsel %vm864, %v666, 0.0
  %v958 = vadd.f32 %v956, %v957
  %v959 = vsel %vm864, %v669, 0.0
  %v960 = vadd.f32 %v958, %v959
  %v961 = vsel %vm864, %v674, 0.0
  %v962 = vadd.f32 %v960, %v961
  %v963 = vsel %vm864, %v677, 0.0
  %v964 = vadd.f32 %v962, %v963
  %v965 = vsel %vm864, %v682, 0.0
  %v966 = vadd.f32 %v964, %v965
  %v967 = vsel %vm864, %v685, 0.0
  %v968 = vadd.f32 %v966, %v967
  %v969 = vsel %vm864, %v690, 0.0
  %v970 = vadd.f32 %v968, %v969
  %v971 = vsel %vm864, %v693, 0.0
  %v972 = vadd.f32 %v970, %v971
  %v973 = vsel %vm864, %v698, 0.0
  %v974 = vadd.f32 %v972, %v973
  %v975 = vsel %vm864, %v701, 0.0
  %v976 = vadd.f32 %v974, %v975
  %v977 = vsel %vm864, %v706, 0.0
  %v978 = vadd.f32 %v976, %v977
  %v979 = vsel %vm864, %v709, 0.0
  %v980 = vadd.f32 %v978, %v979
  %v981 = vsel %vm864, %v714, 0.0
  %v982 = vadd.f32 %v980, %v981
  %v983 = vsel %vm864, %v717, 0.0
  %v984 = vadd.f32 %v982, %v983
  %v985 = vsel %vm864, %v722, 0.0
  %v986 = vadd.f32 %v984, %v985
  %v987 = vsel %vm864, %v725, 0.0
  %v988 = vadd.f32 %v986, %v987
  %v989 = vsel %vm864, %v730, 0.0
  %v990 = vadd.f32 %v988, %v989
  %v991 = vsel %vm864, %v733, 0.0
  %v992 = vadd.f32 %v990, %v991
  %v993 = vsel %vm864, %v738, 0.0
  %v994 = vadd.f32 %v992, %v993
  %v995 = vsel %vm864, %v741, 0.0
  %v996 = vadd.f32 %v994, %v995
  %v997 = vsel %vm864, %v746, 0.0
  %v998 = vadd.f32 %v996, %v997
  %v999 = vsel %vm864, %v749, 0.0
  %v1000 = vadd.f32 %v998, %v999
  %v1001 = vsel %vm864, %v754, 0.0
  %v1002 = vadd.f32 %v1000, %v1001
  %v1003 = vsel %vm864, %v757, 0.0
  %v1004 = vadd.f32 %v1002, %v1003
  %v1005 = vsel %vm864, %v762, 0.0
  %v1006 = vadd.f32 %v1004, %v1005
  %v1007 = vsel %vm864, %v765, 0.0
  %v1008 = vadd.f32 %v1006, %v1007
  %v1009 = vsel %vm864, %v770, 0.0
  %v1010 = vadd.f32 %v1008, %v1009
  %v1011 = vsel %vm864, %v773, 0.0
  %v1012 = vadd.f32 %v1010, %v1011
  %v1013 = vsel %vm864, %v778, 0.0
  %v1014 = vadd.f32 %v1012, %v1013
  %v1015 = vsel %vm864, %v781, 0.0
  %v1016 = vadd.f32 %v1014, %v1015
  %v1017 = vsel %vm864, %v786, 0.0
  %v1018 = vadd.f32 %v1016, %v1017
  %v1019 = vsel %vm864, %v789, 0.0
  %v1020 = vadd.f32 %v1018, %v1019
  %v1021 = vsel %vm864, %v794, 0.0
  %v1022 = vadd.f32 %v1020, %v1021
  %v1023 = vsel %vm864, %v797, 0.0
  %v1024 = vadd.f32 %v1022, %v1023
  %v1025 = vsel %vm864, %v802, 0.0
  %v1026 = vadd.f32 %v1024, %v1025
  %v1027 = vsel %vm864, %v805, 0.0
  %v1028 = vadd.f32 %v1026, %v1027
  %v1029 = vsel %vm864, %v810, 0.0
  %v1030 = vadd.f32 %v1028, %v1029
  %v1031 = vsel %vm864, %v813, 0.0
  %v1032 = vadd.f32 %v1030, %v1031
  %v1033 = vsel %vm864, %v818, 0.0
  %v1034 = vadd.f32 %v1032, %v1033
  %v1035 = vsel %vm864, %v821, 0.0
  %v1036 = vadd.f32 %v1034, %v1035
  %v1037 = vsel %vm864, %v826, 0.0
  %v1038 = vadd.f32 %v1036, %v1037
  %v1039 = vsel %vm864, %v829, 0.0
  %v1040 = vadd.f32 %v1038, %v1039
  %v1041 = vsel %vm864, %v834, 0.0
  %v1042 = vadd.f32 %v1040, %v1041
  %v1043 = vsel %vm864, %v837, 0.0
  %v1044 = vadd.f32 %v1042, %v1043
  %v1045 = vsel %vm864, %v842, 0.0
  %v1046 = vadd.f32 %v1044, %v1045
  %v1047 = vsel %vm864, %v845, 0.0
  %v1048 = vadd.f32 %v1046, %v1047
  %v1049 = vsel %vm864, %v850, 0.0
  %v1050 = vadd.f32 %v1048, %v1049
  %v1051 = vsel %vm864, %v853, 0.0
  %v1052 = vadd.f32 %v1050, %v1051
  %v1053 = vsel %vm864, %v858, 0.0
  %v1054 = vadd.f32 %v1052, %v1053
  %v1055 = vsel %vm864, %v861, 0.0
  %v1056 = vadd.f32 %v1054, %v1055
  %v1057 = vrot.slane %v1056, 4
  %v1058 = vadd.f32 %v1056, %v1057
  %v1059 = vrot.slane %v1058, 2
  %v1060 = vadd.f32 %v1058, %v1059
  %v1061 = vrot.slane %v1060, 1
  %v1062 = vadd.f32 %v1060, %v1061
  %v1063 = vadd.f32 %v929, %v1062
  %vm1064 = vcmask 57344
  %1065 = vst.msk [vmem:[%s3] sm:$0x1] %vm1064, %v1063
  %v1066 = vld [vmem:[%s4] sm:$0x1]
  %v1067 = vmul.f32 %v610, %v610
  %v1068 = vmul.f32 %v613, %v613
  %v1069 = vmul.f32 %v618, %v618
  %v1070 = vmul.f32 %v621, %v621
  %v1071 = vmul.f32 %v626, %v626
  %v1072 = vmul.f32 %v629, %v629
  %v1073 = vmul.f32 %v634, %v634
  %v1074 = vmul.f32 %v637, %v637
  %v1075 = vmul.f32 %v642, %v642
  %v1076 = vmul.f32 %v645, %v645
  %v1077 = vmul.f32 %v650, %v650
  %v1078 = vmul.f32 %v653, %v653
  %v1079 = vmul.f32 %v658, %v658
  %v1080 = vmul.f32 %v661, %v661
  %v1081 = vmul.f32 %v666, %v666
  %v1082 = vmul.f32 %v669, %v669
  %v1083 = vmul.f32 %v674, %v674
  %v1084 = vmul.f32 %v677, %v677
  %v1085 = vmul.f32 %v682, %v682
  %v1086 = vmul.f32 %v685, %v685
  %v1087 = vmul.f32 %v690, %v690
  %v1088 = vmul.f32 %v693, %v693
  %v1089 = vmul.f32 %v698, %v698
  %v1090 = vmul.f32 %v701, %v701
  %v1091 = vmul.f32 %v706, %v706
  %v1092 = vmul.f32 %v709, %v709
  %v1093 = vmul.f32 %v714, %v714
  %v1094 = vmul.f32 %v717, %v717
  %v1095 = vmul.f32 %v722, %v722
  %v1096 = vmul.f32 %v725, %v725
  %v1097 = vmul.f32 %v730, %v730
  %v1098 = vmul.f32 %v733, %v733
  %v1099 = vmul.f32 %v738, %v738
  %v1100 = vmul.f32 %v741, %v741
  %v1101 = vmul.f32 %v746, %v746
  %v1102 = vmul.f32 %v749, %v749
  %v1103 = vmul.f32 %v754, %v754
  %v1104 = vmul.f32 %v757, %v757
  %v1105 = vmul.f32 %v762, %v762
  %v1106 = vmul.f32 %v765, %v765
  %v1107 = vmul.f32 %v770, %v770
  %v1108 = vmul.f32 %v773, %v773
  %v1109 = vmul.f32 %v778, %v778
  %v1110 = vmul.f32 %v781, %v781
  %v1111 = vmul.f32 %v786, %v786
  %v1112 = vmul.f32 %v789, %v789
  %v1113 = vmul.f32 %v794, %v794
  %v1114 = vmul.f32 %v797, %v797
  %v1115 = vmul.f32 %v802, %v802
  %v1116 = vmul.f32 %v805, %v805
  %v1117 = vmul.f32 %v810, %v810
  %v1118 = vmul.f32 %v813, %v813
  %v1119 = vmul.f32 %v818, %v818
  %v1120 = vmul.f32 %v821, %v821
  %v1121 = vmul.f32 %v826, %v826
  %v1122 = vmul.f32 %v829, %v829
  %v1123 = vmul.f32 %v834, %v834
  %v1124 = vmul.f32 %v837, %v837
  %v1125 = vmul.f32 %v842, %v842
  %v1126 = vmul.f32 %v845, %v845
  %v1127 = vmul.f32 %v850, %v850
  %v1128 = vmul.f32 %v853, %v853
  %v1129 = vmul.f32 %v858, %v858
  %v1130 = vmul.f32 %v861, %v861
  %v1131 = vsel %vm864, %v1067, 0.0
  %v1132 = vsel %vm864, %v1068, 0.0
  %v1133 = vadd.f32 %v1131, %v1132
  %v1134 = vsel %vm864, %v1069, 0.0
  %v1135 = vadd.f32 %v1133, %v1134
  %v1136 = vsel %vm864, %v1070, 0.0
  %v1137 = vadd.f32 %v1135, %v1136
  %v1138 = vsel %vm864, %v1071, 0.0
  %v1139 = vadd.f32 %v1137, %v1138
  %v1140 = vsel %vm864, %v1072, 0.0
  %v1141 = vadd.f32 %v1139, %v1140
  %v1142 = vsel %vm864, %v1073, 0.0
  %v1143 = vadd.f32 %v1141, %v1142
  %v1144 = vsel %vm864, %v1074, 0.0
  %v1145 = vadd.f32 %v1143, %v1144
  %v1146 = vsel %vm864, %v1075, 0.0
  %v1147 = vadd.f32 %v1145, %v1146
  %v1148 = vsel %vm864, %v1076, 0.0
  %v1149 = vadd.f32 %v1147, %v1148
  %v1150 = vsel %vm864, %v1077, 0.0
  %v1151 = vadd.f32 %v1149, %v1150
  %v1152 = vsel %vm864, %v1078, 0.0
  %v1153 = vadd.f32 %v1151, %v1152
  %v1154 = vsel %vm864, %v1079, 0.0
  %v1155 = vadd.f32 %v1153, %v1154
  %v1156 = vsel %vm864, %v1080, 0.0
  %v1157 = vadd.f32 %v1155, %v1156
  %v1158 = vsel %vm864, %v1081, 0.0
  %v1159 = vadd.f32 %v1157, %v1158
  %v1160 = vsel %vm864, %v1082, 0.0
  %v1161 = vadd.f32 %v1159, %v1160
  %v1162 = vsel %vm864, %v1083, 0.0
  %v1163 = vadd.f32 %v1161, %v1162
  %v1164 = vsel %vm864, %v1084, 0.0
  %v1165 = vadd.f32 %v1163, %v1164
  %v1166 = vsel %vm864, %v1085, 0.0
  %v1167 = vadd.f32 %v1165, %v1166
  %v1168 = vsel %vm864, %v1086, 0.0
  %v1169 = vadd.f32 %v1167, %v1168
  %v1170 = vsel %vm864, %v1087, 0.0
  %v1171 = vadd.f32 %v1169, %v1170
  %v1172 = vsel %vm864, %v1088, 0.0
  %v1173 = vadd.f32 %v1171, %v1172
  %v1174 = vsel %vm864, %v1089, 0.0
  %v1175 = vadd.f32 %v1173, %v1174
  %v1176 = vsel %vm864, %v1090, 0.0
  %v1177 = vadd.f32 %v1175, %v1176
  %v1178 = vsel %vm864, %v1091, 0.0
  %v1179 = vadd.f32 %v1177, %v1178
  %v1180 = vsel %vm864, %v1092, 0.0
  %v1181 = vadd.f32 %v1179, %v1180
  %v1182 = vsel %vm864, %v1093, 0.0
  %v1183 = vadd.f32 %v1181, %v1182
  %v1184 = vsel %vm864, %v1094, 0.0
  %v1185 = vadd.f32 %v1183, %v1184
  %v1186 = vsel %vm864, %v1095, 0.0
  %v1187 = vadd.f32 %v1185, %v1186
  %v1188 = vsel %vm864, %v1096, 0.0
  %v1189 = vadd.f32 %v1187, %v1188
  %v1190 = vsel %vm864, %v1097, 0.0
  %v1191 = vadd.f32 %v1189, %v1190
  %v1192 = vsel %vm864, %v1098, 0.0
  %v1193 = vadd.f32 %v1191, %v1192
  %v1194 = vsel %vm864, %v1099, 0.0
  %v1195 = vadd.f32 %v1193, %v1194
  %v1196 = vsel %vm864, %v1100, 0.0
  %v1197 = vadd.f32 %v1195, %v1196
  %v1198 = vsel %vm864, %v1101, 0.0
  %v1199 = vadd.f32 %v1197, %v1198
  %v1200 = vsel %vm864, %v1102, 0.0
  %v1201 = vadd.f32 %v1199, %v1200
  %v1202 = vsel %vm864, %v1103, 0.0
  %v1203 = vadd.f32 %v1201, %v1202
  %v1204 = vsel %vm864, %v1104, 0.0
  %v1205 = vadd.f32 %v1203, %v1204
  %v1206 = vsel %vm864, %v1105, 0.0
  %v1207 = vadd.f32 %v1205, %v1206
  %v1208 = vsel %vm864, %v1106, 0.0
  %v1209 = vadd.f32 %v1207, %v1208
  %v1210 = vsel %vm864, %v1107, 0.0
  %v1211 = vadd.f32 %v1209, %v1210
  %v1212 = vsel %vm864, %v1108, 0.0
  %v1213 = vadd.f32 %v1211, %v1212
  %v1214 = vsel %vm864, %v1109, 0.0
  %v1215 = vadd.f32 %v1213, %v1214
  %v1216 = vsel %vm864, %v1110, 0.0
  %v1217 = vadd.f32 %v1215, %v1216
  %v1218 = vsel %vm864, %v1111, 0.0
  %v1219 = vadd.f32 %v1217, %v1218
  %v1220 = vsel %vm864, %v1112, 0.0
  %v1221 = vadd.f32 %v1219, %v1220
  %v1222 = vsel %vm864, %v1113, 0.0
  %v1223 = vadd.f32 %v1221, %v1222
  %v1224 = vsel %vm864, %v1114, 0.0
  %v1225 = vadd.f32 %v1223, %v1224
  %v1226 = vsel %vm864, %v1115, 0.0
  %v1227 = vadd.f32 %v1225, %v1226
  %v1228 = vsel %vm864, %v1116, 0.0
  %v1229 = vadd.f32 %v1227, %v1228
  %v1230 = vsel %vm864, %v1117, 0.0
  %v1231 = vadd.f32 %v1229, %v1230
  %v1232 = vsel %vm864, %v1118, 0.0
  %v1233 = vadd.f32 %v1231, %v1232
  %v1234 = vsel %vm864, %v1119, 0.0
  %v1235 = vadd.f32 %v1233, %v1234
  %v1236 = vsel %vm864, %v1120, 0.0
  %v1237 = vadd.f32 %v1235, %v1236
  %v1238 = vsel %vm864, %v1121, 0.0
  %v1239 = vadd.f32 %v1237, %v1238
  %v1240 = vsel %vm864, %v1122, 0.0
  %v1241 = vadd.f32 %v1239, %v1240
  %v1242 = vsel %vm864, %v1123, 0.0
  %v1243 = vadd.f32 %v1241, %v1242
  %v1244 = vsel %vm864, %v1124, 0.0
  %v1245 = vadd.f32 %v1243, %v1244
  %v1246 = vsel %vm864, %v1125, 0.0
  %v1247 = vadd.f32 %v1245, %v1246
  %v1248 = vsel %vm864, %v1126, 0.0
  %v1249 = vadd.f32 %v1247, %v1248
  %v1250 = vsel %vm864, %v1127, 0.0
  %v1251 = vadd.f32 %v1249, %v1250
  %v1252 = vsel %vm864, %v1128, 0.0
  %v1253 = vadd.f32 %v1251, %v1252
  %v1254 = vsel %vm864, %v1129, 0.0
  %v1255 = vadd.f32 %v1253, %v1254
  %v1256 = vsel %vm864, %v1130, 0.0
  %v1257 = vadd.f32 %v1255, %v1256
  %v1258 = vrot.slane %v1257, 4
  %v1259 = vadd.f32 %v1257, %v1258
  %v1260 = vrot.slane %v1259, 2
  %v1261 = vadd.f32 %v1259, %v1260
  %v1262 = vrot.slane %v1261, 1
  %v1263 = vadd.f32 %v1261, %v1262
  %v1264 = vadd.f32 %v1066, %v1263
  %1265 = vst.msk [vmem:[%s4] sm:$0x1] %vm1064, %v1264
  // Predicated region
  $region14: #{global_generator_forward.19} parent=0 // pred_check
    _
  $region15: #{global_generator_forward.19} parent=0 // pred_check_branch
    %1267 = sbr.rel (0) target = $region17
  $region16: #{global_generator_forward.19} parent=0 // pred_region
    _
  $region17: #{global_generator_forward.19} parent=0 // pred_fallthru
    _
  // Predicated region
  $region18: #{global_generator_forward.19} parent=0 // pred_check
    _
  $region19: #{global_generator_forward.19} parent=0 // pred_check_branch
    %1269 = sbr.rel (0) target = $region21
  $region20: #{global_generator_forward.19} parent=0 // pred_region
    _
  $region21: #{global_generator_forward.19} parent=0 // pred_fallthru
    _
  // Predicated region
  $region22: #{global_generator_forward.19} parent=0 // pred_check
    _
  $region23: #{global_generator_forward.19} parent=0 // pred_check_branch
    %1271 = sbr.rel (0) target = $region25
  $region24: #{global_generator_forward.19} parent=0 // pred_region
    _
  $region25: #{global_generator_forward.19} parent=0 // pred_fallthru
    _
  // Predicated region
  $region26: #{global_generator_forward.19} parent=0 // pred_check
    _
  $region27: #{global_generator_forward.19} parent=0 // pred_check_branch
    %1273 = sbr.rel (0) target = $region29
  $region28: #{global_generator_forward.19} parent=0 // pred_region
    _
  $region29: #{global_generator_forward.19} parent=0 // pred_fallthru
    _
  // Predicated region
  $region30: #{global_generator_forward.19} parent=0 // pred_check
    _
  $region31: #{global_generator_forward.19} parent=0 // pred_check_branch
    %1275 = sbr.rel (0) target = $region33
  $region32: #{global_generator_forward.19} parent=0 // pred_region
    _
  $region33: #{global_generator_forward.19} parent=0 // pred_fallthru
    _
  // Predicated region
  $region34: #{global_generator_forward.19} parent=0 // pred_check
    _
  $region35: #{global_generator_forward.19} parent=0 // pred_check_branch
    %1277 = sbr.rel (0) target = $region37
  $region36: #{global_generator_forward.19} parent=0 // pred_region
    _
  $region37: #{global_generator_forward.19} parent=0 // pred_fallthru
    _

// kernel: global_generator_forward.22
$region0: #{global_generator_forward.22}
  #allocation0 [shape = 'u32[]', space=smem, size = 0x4, offset = 0x4, fixed_abs, tag = 'smem constant byte address 0x4 - core index']
  #allocation1 [shape = 'u32[144,128]{1,0:T(1,128)}', space=vmem, size = 0x12000, scoped, tag = 'internal scratch']
  %s0 = inlined_call_operand.vmem [shape: f32[16,128], index: 0, kind: input, shape index: {}]
  %s1 = inlined_call_operand.vmem [shape: f32[1,128], index: 1, kind: input, shape index: {}]
  %s2 = inlined_call_operand.vmem [shape: f32[1,128], index: 2, kind: input, shape index: {}]
  %s3 = inlined_call_operand.vmem [shape: f32[1,128], index: 3, kind: input, shape index: {}]
  %s4 = inlined_call_operand.vmem [shape: f32[1,128], index: 4, kind: input, shape index: {}]
  %s5 = inlined_call_operand.vmem [shape: f32[16,128], index: 5, kind: output, shape index: {}]
  %s6 = sld [smem:[#allocation0]]
  $region30: #{global_generator_forward.22} parent=0
    _
  %s8 = ssub.s32 1, %s6
  %s9 = scalar_select 0, %s8, %s6
  // Predicated region
  $region2: #{global_generator_forward.22} parent=0 // pred_check
    _
  $region3: #{global_generator_forward.22} parent=0 // pred_check_branch
    %11 = sbr.rel (0) target = $region5
  $region4: #{global_generator_forward.22} parent=0 // pred_region
    _
  $region5: #{global_generator_forward.22} parent=0 // pred_fallthru
    _
  // Predicated region
  $region6: #{global_generator_forward.22} parent=0 // pred_check
    _
  $region7: #{global_generator_forward.22} parent=0 // pred_check_branch
    %13 = sbr.rel (0) target = $region9
  $region8: #{global_generator_forward.22} parent=0 // pred_region
    _
  $region9: #{global_generator_forward.22} parent=0 // pred_fallthru
    _
  // Predicated region
  $region10: #{global_generator_forward.22} parent=0 // pred_check
    _
  $region11: #{global_generator_forward.22} parent=0 // pred_check_branch
    %15 = sbr.rel (0) target = $region13
  $region12: #{global_generator_forward.22} parent=0 // pred_region
    _
  $region13: #{global_generator_forward.22} parent=0 // pred_fallthru
    _
  // Predicated region
  $region14: #{global_generator_forward.22} parent=0 // pred_check
    _
  $region15: #{global_generator_forward.22} parent=0 // pred_check_branch
    %17 = sbr.rel (0) target = $region17
  $region16: #{global_generator_forward.22} parent=0 // pred_region
    _
  $region17: #{global_generator_forward.22} parent=0 // pred_fallthru
    _
  // Predicated region
  $region18: #{global_generator_forward.22} parent=0 // pred_check
    _
  $region19: #{global_generator_forward.22} parent=0 // pred_check_branch
    %19 = sbr.rel (0) target = $region21
  $region20: #{global_generator_forward.22} parent=0 // pred_region
    _
  $region21: #{global_generator_forward.22} parent=0 // pred_fallthru
    _
  %v20 = vld [vmem:[%s1] sm:$0x1]
  %v21 = vmul.f32 %v20, 0.0078125
  %v22 = vld [vmem:[%s2] sm:$0x1]
  %v23 = vmul.f32 %v22, 0.0078125
  %v24 = vmul.f32 %v21, %v21
  %v25 = vsub.f32 %v23, %v24
  %v26 = vmax.f32 %v25, 0.0
  %v27 = vld [vmem:[%s3] sm:$0x1]
  %v28 = vadd.f32 %v26, 1e-05
  %v29 = vrsqrt.pop %v28
  %v30 = vmul.f32 %v27, %v29
  %v31 = vld [vmem:[%s4] sm:$0x1]
  %v32 = vmul.f32 %v21, %v30
  %v33 = vsub.f32 %v31, %v32
  %v34 = vld [vmem:[%s0] sm:$0xff]
  %v35 = vld [vmem:[%s0 + $0x8] sm:$0xff]
  %v37 = vlaneseq
  %v38 = vshrl.u32 %v37, 7
  %v39 = vsub.s32 0, %v38
  %v40 = vrot.slane %v30, %v39
  %v42 = vmul.f32 %v34, %v40
  %v43 = vmul.f32 %v35, %v40
  %v45 = vlaneseq
  %v46 = vshrl.u32 %v45, 7
  %v47 = vsub.s32 0, %v46
  %v48 = vrot.slane %v33, %v47
  %v50 = vadd.f32 %v42, %v48
  %v51 = vadd.f32 %v43, %v48
  %v52 = vmax.f32 %v50, 0.0
  %v53 = vmax.f32 %v51, 0.0
  %54 = vst [vmem:[%s5] sm:$0xff] %v52
  %55 = vst [vmem:[%s5 + $0x8] sm:$0xff] %v53
  // Predicated region
  $region22: #{global_generator_forward.22} parent=0 // pred_check
    _
  $region23: #{global_generator_forward.22} parent=0 // pred_check_branch
    %57 = sbr.rel (0) target = $region25
  $region24: #{global_generator_forward.22} parent=0 // pred_region
    _
  $region25: #{global_generator_forward.22} parent=0 // pred_fallthru
    _
  // Predicated region
  $region26: #{global_generator_forward.22} parent=0 // pred_check
    _
  $region27: #{global_generator_forward.22} parent=0 // pred_check_branch
    %59 = sbr.rel (0) target = $region29
  $region28: #{global_generator_forward.22} parent=0 // pred_region
    _
  $region29: #{global_generator_forward.22} parent=0 // pred_fallthru
    _

// kernel: global_generator_forward.21
$region0: #{global_generator_forward.21}
  #allocation0 [shape = 'u32[]', space=smem, size = 0x4, offset = 0x4, fixed_abs, tag = 'smem constant byte address 0x4 - core index']
  #allocation1 [shape = 'u32[144,128]{1,0:T(1,128)}', space=vmem, size = 0x12000, scoped, tag = 'internal scratch']
  %s0 = inlined_call_operand.vmem [shape: bf16[128,72], index: 0, kind: input, shape index: {}]
  %s1 = inlined_call_operand.vmem [shape: bf16[72,16], index: 1, kind: input, shape index: {}]
  %s2 = inlined_call_operand.vmem [shape: f32[128,16], index: 2, kind: output, shape index: {0}]
  %s3 = inlined_call_operand.vmem [shape: f32[1,16], index: 3, kind: output, shape index: {1}]
  %s4 = inlined_call_operand.vmem [shape: f32[1,16], index: 4, kind: output, shape index: {2}]
  %5 = xla_tuple %s2, %s3, %s4
  %s6 = sld [smem:[#allocation0]]
  $region38: #{global_generator_forward.21} parent=0
    _
  %s8 = ssub.s32 1, %s6
  %s9 = scalar_select 0, %s8, %s6
  // Predicated region
  $region2: #{global_generator_forward.21} parent=0 // pred_check
    _
  $region3: #{global_generator_forward.21} parent=0 // pred_check_branch
    %11 = sbr.rel (0) target = $region5
  $region4: #{global_generator_forward.21} parent=0 // pred_region
    _
  $region5: #{global_generator_forward.21} parent=0 // pred_fallthru
    _
  // Predicated region
  $region6: #{global_generator_forward.21} parent=0 // pred_check
    _
  $region7: #{global_generator_forward.21} parent=0 // pred_check_branch
    %13 = sbr.rel (0) target = $region9
  $region8: #{global_generator_forward.21} parent=0 // pred_region
    _
  $region9: #{global_generator_forward.21} parent=0 // pred_fallthru
    _
  %p15 = scmp.eq.s32.totalorder 0, 0
  // Predicated region
  $region10: #{global_generator_forward.21} parent=0 // pred_check
    %p16 = pneg %p15
  $region11: #{global_generator_forward.21} parent=0 // pred_check_branch
    %18 = sbr.rel (%p16) target = $region13
  $region12: #{global_generator_forward.21} parent=0 // pred_region
    %vm19 = vcmask 122880
    %20 = vst.msk [vmem:[%s3] sm:$0x1] %vm19, 0.0
    %21 = vst.msk [vmem:[%s4] sm:$0x1] %vm19, 0.0
  $region13: #{global_generator_forward.21} parent=0 // pred_fallthru
    _
  %v22 = vld [vmem:[%s0] sm:$0xf]
  %v23 = vld [vmem:[%s0 + $0x4] sm:$0xf]
  %v24 = vld [vmem:[%s0 + $0x8] sm:$0xf]
  %v25 = vld [vmem:[%s0 + $0xc] sm:$0xf]
  %v26 = vld [vmem:[%s0 + $0x10] sm:$0xf]
  %v27 = vld [vmem:[%s0 + $0x14] sm:$0xf]
  %v28 = vld [vmem:[%s0 + $0x18] sm:$0xf]
  %v29 = vld [vmem:[%s0 + $0x1c] sm:$0xf]
  %v30 = vld [vmem:[%s0 + $0x20] sm:$0xf]
  %v31 = vld [vmem:[%s0 + $0x24] sm:$0xf]
  %v32 = vld [vmem:[%s0 + $0x28] sm:$0xf]
  %v33 = vld [vmem:[%s0 + $0x2c] sm:$0xf]
  %v34 = vld [vmem:[%s0 + $0x30] sm:$0xf]
  %v35 = vld [vmem:[%s0 + $0x34] sm:$0xf]
  %v36 = vld [vmem:[%s0 + $0x38] sm:$0xf]
  %v37 = vld [vmem:[%s0 + $0x3c] sm:$0xf]
  %v38 = vld [vmem:[%s1] sm:$0xf]
  %v39 = vld [vmem:[%s1 + $0x4] sm:$0xf]
  %v40 = vld [vmem:[%s1 + $0x8] sm:$0xf]
  %v41 = vld [vmem:[%s1 + $0xc] sm:$0xf]
  %v42 = vld [vmem:[%s1 + $0x10] sm:$0xf]
  %v43 = vld [vmem:[%s1 + $0x14] sm:$0xf]
  %v44 = vld [vmem:[%s1 + $0x18] sm:$0xf]
  %v45 = vld [vmem:[%s1 + $0x1c] sm:$0xf]
  %v46 = vld [vmem:[%s1 + $0x20] sm:$0xf]
  %v63 = vunpack.c.l.b16 %v22
  %v64 = vunpack.c.l.b16 %v23
  %v65 = vunpack.c.l.b16 %v24
  %v66 = vunpack.c.l.b16 %v25
  %v67 = vunpack.c.l.b16 %v26
  %v68 = vunpack.c.l.b16 %v27
  %v69 = vunpack.c.l.b16 %v28
  %v70 = vunpack.c.l.b16 %v29
  %v71 = vunpack.c.l.b16 %v30
  %v72 = vunpack.c.l.b16 %v31
  %v73 = vunpack.c.l.b16 %v32
  %v74 = vunpack.c.l.b16 %v33
  %v75 = vunpack.c.l.b16 %v34
  %v76 = vunpack.c.l.b16 %v35
  %v77 = vunpack.c.l.b16 %v36
  %v78 = vunpack.c.l.b16 %v37
  %v79 = vpack.c.b16 %v64, %v63
  %v80 = vpack.c.b16 %v66, %v65
  %v81 = vpack.c.b16 %v68, %v67
  %v82 = vpack.c.b16 %v70, %v69
  %v83 = vpack.c.b16 %v72, %v71
  %v84 = vpack.c.b16 %v74, %v73
  %v85 = vpack.c.b16 %v76, %v75
  %v86 = vpack.c.b16 %v78, %v77
  %v96 = vunpack.c.l.b16 %v38
  %v97 = vunpack.c.l.b16 %v39
  %v98 = vunpack.c.l.b16 %v40
  %v99 = vunpack.c.l.b16 %v41
  %v100 = vunpack.c.l.b16 %v42
  %v101 = vunpack.c.l.b16 %v43
  %v102 = vunpack.c.l.b16 %v44
  %v103 = vunpack.c.l.b16 %v45
  %v104 = vunpack.c.l.b16 %v46
  %v105 = vpack.c.b16 %v97, %v96
  %v106 = vpack.c.b16 %v99, %v98
  %v107 = vpack.c.b16 %v101, %v100
  %v108 = vpack.c.b16 %v103, %v102
  %v109 = vpack.c.b16 %v104, %v104
  %vm114 = vcmask 588800
  %v116 = vsel %vm114, %v79, 0
  %v119 = vsel %vm114, %v80, 0
  %v122 = vsel %vm114, %v81, 0
  %v125 = vsel %vm114, %v82, 0
  %v128 = vsel %vm114, %v83, 0
  %v131 = vsel %vm114, %v84, 0
  %v134 = vsel %vm114, %v85, 0
  %v137 = vsel %vm114, %v86, 0
  %vm139 = vcmask 1043456
  %v141 = vsel %vm139, %v109, 0
  %143 = vmatprep.subr.bf16.mxu0 0
  %144 = vmatpush1.bf16.msra.mxu0 %v105
  %145 = vmatprep.subr.bf16.mxu0 0
  %146 = vmatpush1.bf16.msra.mxu0 %v106
  %147 = vmatprep.subr.bf16.mxu0 0
  %148 = vmatpush1.bf16.msra.mxu0 %v107
  %149 = vmatprep.subr.bf16.mxu0 0
  %150 = vmatpush1.bf16.msra.mxu0 %v108
  %151 = vmatprep.subr.bf16.mxu0 0
  %152 = vmatpush1.bf16.msra.mxu0 %v141
  %153 = vmatprep.subr.bf16.mxu0 0
  %154 = vmatpush1.bf16.msra.mxu0 0
  %155 = vmatprep.subr.bf16.mxu0 0
  %156 = vmatpush1.bf16.msra.mxu0 0
  %157 = vmatprep.subr.bf16.mxu0 0
  %158 = vmatpush1.bf16.msra.mxu0 0
  %159 = vmatprep.subr.bf16.mxu0 0
  %160 = vmatpush1.bf16.msra.mxu0 0
  %161 = vmatprep.subr.bf16.mxu0 0
  %162 = vmatpush1.bf16.msra.mxu0 0
  %163 = vmatprep.subr.bf16.mxu0 0
  %164 = vmatpush1.bf16.msra.mxu0 0
  %165 = vmatprep.subr.bf16.mxu0 0
  %166 = vmatpush1.bf16.msra.mxu0 0
  %167 = vmatprep.subr.bf16.mxu0 0
  %168 = vmatpush1.bf16.msra.mxu0 0
  %169 = vmatprep.subr.bf16.mxu0 0
  %170 = vmatpush1.bf16.msra.mxu0 0
  %171 = vmatprep.subr.bf16.mxu0 0
  %172 = vmatpush1.bf16.msra.mxu0 0
  %173 = vmatprep.subr.bf16.mxu0 0
  %174 = vmatpush1.bf16.msra.mxu0 0
  %175 = vmatprep.mubr.bf16.mxu0 0
  %176 = vmatmul.mubr.bf16.gmra.mrb[0].mxu0 %v116
  %v177 = vpop.f32.mrb[0].mxu0
  %v178 = vadd.f32 0.0, %v177
  %v179 = vpop.f32.mrb[0].mxu0
  %v180 = vpop.f32.mrb[0].mxu0
  %v181 = vadd.f32 0.0, %v180
  %v182 = vpop.f32.mrb[0].mxu0
  %183 = vmatprep.mubr.bf16.mxu0 0
  %184 = vmatmul.mubr.bf16.gmra.mrb[0].mxu0 %v119
  %v185 = vpop.f32.mrb[0].mxu0
  %v186 = vadd.f32 0.0, %v185
  %v187 = vpop.f32.mrb[0].mxu0
  %v188 = vpop.f32.mrb[0].mxu0
  %v189 = vadd.f32 0.0, %v188
  %v190 = vpop.f32.mrb[0].mxu0
  %191 = vmatprep.mubr.bf16.mxu0 0
  %192 = vmatmul.mubr.bf16.gmra.mrb[0].mxu0 %v122
  %v193 = vpop.f32.mrb[0].mxu0
  %v194 = vadd.f32 0.0, %v193
  %v195 = vpop.f32.mrb[0].mxu0
  %v196 = vpop.f32.mrb[0].mxu0
  %v197 = vadd.f32 0.0, %v196
  %v198 = vpop.f32.mrb[0].mxu0
  %199 = vmatprep.mubr.bf16.mxu0 0
  %200 = vmatmul.mubr.bf16.gmra.mrb[0].mxu0 %v125
  %v201 = vpop.f32.mrb[0].mxu0
  %v202 = vadd.f32 0.0, %v201
  %v203 = vpop.f32.mrb[0].mxu0
  %v204 = vpop.f32.mrb[0].mxu0
  %v205 = vadd.f32 0.0, %v204
  %v206 = vpop.f32.mrb[0].mxu0
  %207 = vmatprep.mubr.bf16.mxu0 0
  %208 = vmatmul.mubr.bf16.gmra.mrb[0].mxu0 %v128
  %v209 = vpop.f32.mrb[0].mxu0
  %v210 = vadd.f32 0.0, %v209
  %v211 = vpop.f32.mrb[0].mxu0
  %v212 = vpop.f32.mrb[0].mxu0
  %v213 = vadd.f32 0.0, %v212
  %v214 = vpop.f32.mrb[0].mxu0
  %215 = vmatprep.mubr.bf16.mxu0 0
  %216 = vmatmul.mubr.bf16.gmra.mrb[0].mxu0 %v131
  %v217 = vpop.f32.mrb[0].mxu0
  %v218 = vadd.f32 0.0, %v217
  %v219 = vpop.f32.mrb[0].mxu0
  %v220 = vpop.f32.mrb[0].mxu0
  %v221 = vadd.f32 0.0, %v220
  %v222 = vpop.f32.mrb[0].mxu0
  %223 = vmatprep.mubr.bf16.mxu0 0
  %224 = vmatmul.mubr.bf16.gmra.mrb[0].mxu0 %v134
  %v225 = vpop.f32.mrb[0].mxu0
  %v226 = vadd.f32 0.0, %v225
  %v227 = vpop.f32.mrb[0].mxu0
  %v228 = vpop.f32.mrb[0].mxu0
  %v229 = vadd.f32 0.0, %v228
  %v230 = vpop.f32.mrb[0].mxu0
  %231 = vmatprep.mubr.bf16.mxu0 0
  %232 = vmatmul.mubr.bf16.gmra.mrb[0].mxu0 %v137
  %v233 = vpop.f32.mrb[0].mxu0
  %v234 = vadd.f32 0.0, %v233
  %v235 = vpop.f32.mrb[0].mxu0
  %v236 = vpop.f32.mrb[0].mxu0
  %v237 = vadd.f32 0.0, %v236
  %v238 = vpop.f32.mrb[0].mxu0
  %239 = vdwg.mxu0
  %vm240 = vcmask 130048
  %241 = vst.msk [vmem:[%s2] sm:$0xff] %vm240, %v178
  %242 = vst.msk [vmem:[%s2 + $0x8] sm:$0xff] %vm240, %v181
  %243 = vst.msk [vmem:[%s2 + $0x10] sm:$0xff] %vm240, %v186
  %244 = vst.msk [vmem:[%s2 + $0x18] sm:$0xff] %vm240, %v189
  %245 = vst.msk [vmem:[%s2 + $0x20] sm:$0xff] %vm240, %v194
  %246 = vst.msk [vmem:[%s2 + $0x28] sm:$0xff] %vm240, %v197
  %247 = vst.msk [vmem:[%s2 + $0x30] sm:$0xff] %vm240, %v202
  %248 = vst.msk [vmem:[%s2 + $0x38] sm:$0xff] %vm240, %v205
  %249 = vst.msk [vmem:[%s2 + $0x40] sm:$0xff] %vm240, %v210
  %250 = vst.msk [vmem:[%s2 + $0x48] sm:$0xff] %vm240, %v213
  %251 = vst.msk [vmem:[%s2 + $0x50] sm:$0xff] %vm240, %v218
  %252 = vst.msk [vmem:[%s2 + $0x58] sm:$0xff] %vm240, %v221
  %253 = vst.msk [vmem:[%s2 + $0x60] sm:$0xff] %vm240, %v226
  %254 = vst.msk [vmem:[%s2 + $0x68] sm:$0xff] %vm240, %v229
  %255 = vst.msk [vmem:[%s2 + $0x70] sm:$0xff] %vm240, %v234
  %256 = vst.msk [vmem:[%s2 + $0x78] sm:$0xff] %vm240, %v237
  %v257 = vld [vmem:[%s3] sm:$0x1]
  %v258 = vsel %vm240, %v178, 0.0
  %v259 = vsel %vm240, %v181, 0.0
  %v260 = vadd.f32 %v258, %v259
  %v261 = vsel %vm240, %v186, 0.0
  %v262 = vadd.f32 %v260, %v261
  %v263 = vsel %vm240, %v189, 0.0
  %v264 = vadd.f32 %v262, %v263
  %v265 = vsel %vm240, %v194, 0.0
  %v266 = vadd.f32 %v264, %v265
  %v267 = vsel %vm240, %v197, 0.0
  %v268 = vadd.f32 %v266, %v267
  %v269 = vsel %vm240, %v202, 0.0
  %v270 = vadd.f32 %v268, %v269
  %v271 = vsel %vm240, %v205, 0.0
  %v272 = vadd.f32 %v270, %v271
  %v273 = vsel %vm240, %v210, 0.0
  %v274 = vadd.f32 %v272, %v273
  %v275 = vsel %vm240, %v213, 0.0
  %v276 = vadd.f32 %v274, %v275
  %v277 = vsel %vm240, %v218, 0.0
  %v278 = vadd.f32 %v276, %v277
  %v279 = vsel %vm240, %v221, 0.0
  %v280 = vadd.f32 %v278, %v279
  %v281 = vsel %vm240, %v226, 0.0
  %v282 = vadd.f32 %v280, %v281
  %v283 = vsel %vm240, %v229, 0.0
  %v284 = vadd.f32 %v282, %v283
  %v285 = vsel %vm240, %v234, 0.0
  %v286 = vadd.f32 %v284, %v285
  %v287 = vsel %vm240, %v237, 0.0
  %v288 = vadd.f32 %v286, %v287
  %v289 = vrot.slane %v288, 4
  %v290 = vadd.f32 %v288, %v289
  %v291 = vrot.slane %v290, 2
  %v292 = vadd.f32 %v290, %v291
  %v293 = vrot.slane %v292, 1
  %v294 = vadd.f32 %v292, %v293
  %v295 = vadd.f32 %v257, %v294
  %vm296 = vcmask 122880
  %297 = vst.msk [vmem:[%s3] sm:$0x1] %vm296, %v295
  %v298 = vld [vmem:[%s4] sm:$0x1]
  %v299 = vmul.f32 %v178, %v178
  %v300 = vmul.f32 %v181, %v181
  %v301 = vmul.f32 %v186, %v186
  %v302 = vmul.f32 %v189, %v189
  %v303 = vmul.f32 %v194, %v194
  %v304 = vmul.f32 %v197, %v197
  %v305 = vmul.f32 %v202, %v202
  %v306 = vmul.f32 %v205, %v205
  %v307 = vmul.f32 %v210, %v210
  %v308 = vmul.f32 %v213, %v213
  %v309 = vmul.f32 %v218, %v218
  %v310 = vmul.f32 %v221, %v221
  %v311 = vmul.f32 %v226, %v226
  %v312 = vmul.f32 %v229, %v229
  %v313 = vmul.f32 %v234, %v234
  %v314 = vmul.f32 %v237, %v237
  %v315 = vsel %vm240, %v299, 0.0
  %v316 = vsel %vm240, %v300, 0.0
  %v317 = vadd.f32 %v315, %v316
  %v318 = vsel %vm240, %v301, 0.0
  %v319 = vadd.f32 %v317, %v318
  %v320 = vsel %vm240, %v302, 0.0
  %v321 = vadd.f32 %v319, %v320
  %v322 = vsel %vm240, %v303, 0.0
  %v323 = vadd.f32 %v321, %v322
  %v324 = vsel %vm240, %v304, 0.0
  %v325 = vadd.f32 %v323, %v324
  %v326 = vsel %vm240, %v305, 0.0
  %v327 = vadd.f32 %v325, %v326
  %v328 = vsel %vm240, %v306, 0.0
  %v329 = vadd.f32 %v327, %v328
  %v330 = vsel %vm240, %v307, 0.0
  %v331 = vadd.f32 %v329, %v330
  %v332 = vsel %vm240, %v308, 0.0
  %v333 = vadd.f32 %v331, %v332
  %v334 = vsel %vm240, %v309, 0.0
  %v335 = vadd.f32 %v333, %v334
  %v336 = vsel %vm240, %v310, 0.0
  %v337 = vadd.f32 %v335, %v336
  %v338 = vsel %vm240, %v311, 0.0
  %v339 = vadd.f32 %v337, %v338
  %v340 = vsel %vm240, %v312, 0.0
  %v341 = vadd.f32 %v339, %v340
  %v342 = vsel %vm240, %v313, 0.0
  %v343 = vadd.f32 %v341, %v342
  %v344 = vsel %vm240, %v314, 0.0
  %v345 = vadd.f32 %v343, %v344
  %v346 = vrot.slane %v345, 4
  %v347 = vadd.f32 %v345, %v346
  %v348 = vrot.slane %v347, 2
  %v349 = vadd.f32 %v347, %v348
  %v350 = vrot.slane %v349, 1
  %v351 = vadd.f32 %v349, %v350
  %v352 = vadd.f32 %v298, %v351
  %353 = vst.msk [vmem:[%s4] sm:$0x1] %vm296, %v352
  // Predicated region
  $region14: #{global_generator_forward.21} parent=0 // pred_check
    _
  $region15: #{global_generator_forward.21} parent=0 // pred_check_branch
    %355 = sbr.rel (0) target = $region17
  $region16: #{global_generator_forward.21} parent=0 // pred_region
    _
  $region17: #{global_generator_forward.21} parent=0 // pred_fallthru
    _
  // Predicated region
  $region18: #{global_generator_forward.21} parent=0 // pred_check
    _
  $region19: #{global_generator_forward.21} parent=0 // pred_check_branch
    %357 = sbr.rel (0) target = $region21
  $region20: #{global_generator_forward.21} parent=0 // pred_region
    _
  $region21: #{global_generator_forward.21} parent=0 // pred_fallthru
    _
  // Predicated region
  $region22: #{global_generator_forward.21} parent=0 // pred_check
    _
  $region23: #{global_generator_forward.21} parent=0 // pred_check_branch
    %359 = sbr.rel (0) target = $region25
  $region24: #{global_generator_forward.21} parent=0 // pred_region
    _
  $region25: #{global_generator_forward.21} parent=0 // pred_fallthru
    _
  // Predicated region
  $region26: #{global_generator_forward.21} parent=0 // pred_check
    _
  $region27: #{global_generator_forward.21} parent=0 // pred_check_branch
    %361 = sbr.rel (0) target = $region29
  $region28: #{global_generator_forward.21} parent=0 // pred_region
    _
  $region29: #{global_generator_forward.21} parent=0 // pred_fallthru
    _
  // Predicated region
  $region30: #{global_generator_forward.21} parent=0 // pred_check
    _
  $region31: #{global_generator_forward.21} parent=0 // pred_check_branch
    %363 = sbr.rel (0) target = $region33
  $region32: #{global_generator_forward.21} parent=0 // pred_region
    _
  $region33: #{global_generator_forward.21} parent=0 // pred_fallthru
    _
  // Predicated region
  $region34: #{global_generator_forward.21} parent=0 // pred_check
    _
  $region35: #{global_generator_forward.21} parent=0 // pred_check_branch
    %365 = sbr.rel (0) target = $region37
  $region36: #{global_generator_forward.21} parent=0 // pred_region
    _
  $region37: #{global_generator_forward.21} parent=0 // pred_fallthru
    _

// kernel: global_generator_forward.24
$region0: #{global_generator_forward.24}
  #allocation0 [shape = 'u32[]', space=smem, size = 0x4, offset = 0x4, fixed_abs, tag = 'smem constant byte address 0x4 - core index']
  #allocation1 [shape = 'u32[144,128]{1,0:T(1,128)}', space=vmem, size = 0x12000, scoped, tag = 'internal scratch']
  %s0 = inlined_call_operand.vmem [shape: f32[8,128], index: 0, kind: input, shape index: {}]
  %s1 = inlined_call_operand.vmem [shape: f32[1,128], index: 1, kind: input, shape index: {}]
  %s2 = inlined_call_operand.vmem [shape: f32[1,128], index: 2, kind: input, shape index: {}]
  %s3 = inlined_call_operand.vmem [shape: f32[1,128], index: 3, kind: input, shape index: {}]
  %s4 = inlined_call_operand.vmem [shape: f32[1,128], index: 4, kind: input, shape index: {}]
  %s5 = inlined_call_operand.vmem [shape: f32[8,128], index: 5, kind: output, shape index: {}]
  %s6 = sld [smem:[#allocation0]]
  $region30: #{global_generator_forward.24} parent=0
    _
  %s8 = ssub.s32 1, %s6
  %s9 = scalar_select 0, %s8, %s6
  // Predicated region
  $region2: #{global_generator_forward.24} parent=0 // pred_check
    _
  $region3: #{global_generator_forward.24} parent=0 // pred_check_branch
    %11 = sbr.rel (0) target = $region5
  $region4: #{global_generator_forward.24} parent=0 // pred_region
    _
  $region5: #{global_generator_forward.24} parent=0 // pred_fallthru
    _
  // Predicated region
  $region6: #{global_generator_forward.24} parent=0 // pred_check
    _
  $region7: #{global_generator_forward.24} parent=0 // pred_check_branch
    %13 = sbr.rel (0) target = $region9
  $region8: #{global_generator_forward.24} parent=0 // pred_region
    _
  $region9: #{global_generator_forward.24} parent=0 // pred_fallthru
    _
  // Predicated region
  $region10: #{global_generator_forward.24} parent=0 // pred_check
    _
  $region11: #{global_generator_forward.24} parent=0 // pred_check_branch
    %15 = sbr.rel (0) target = $region13
  $region12: #{global_generator_forward.24} parent=0 // pred_region
    _
  $region13: #{global_generator_forward.24} parent=0 // pred_fallthru
    _
  // Predicated region
  $region14: #{global_generator_forward.24} parent=0 // pred_check
    _
  $region15: #{global_generator_forward.24} parent=0 // pred_check_branch
    %17 = sbr.rel (0) target = $region17
  $region16: #{global_generator_forward.24} parent=0 // pred_region
    _
  $region17: #{global_generator_forward.24} parent=0 // pred_fallthru
    _
  // Predicated region
  $region18: #{global_generator_forward.24} parent=0 // pred_check
    _
  $region19: #{global_generator_forward.24} parent=0 // pred_check_branch
    %19 = sbr.rel (0) target = $region21
  $region20: #{global_generator_forward.24} parent=0 // pred_region
    _
  $region21: #{global_generator_forward.24} parent=0 // pred_fallthru
    _
  %v20 = vld [vmem:[%s1] sm:$0x1]
  %v21 = vmul.f32 %v20, 0.03125
  %v22 = vld [vmem:[%s2] sm:$0x1]
  %v23 = vmul.f32 %v22, 0.03125
  %v24 = vmul.f32 %v21, %v21
  %v25 = vsub.f32 %v23, %v24
  %v26 = vmax.f32 %v25, 0.0
  %v27 = vld [vmem:[%s3] sm:$0x1]
  %v28 = vadd.f32 %v26, 1e-05
  %v29 = vrsqrt.pop %v28
  %v30 = vmul.f32 %v27, %v29
  %v31 = vld [vmem:[%s4] sm:$0x1]
  %v32 = vmul.f32 %v21, %v30
  %v33 = vsub.f32 %v31, %v32
  %v34 = vld [vmem:[%s0] sm:$0xff]
  %v36 = vlaneseq
  %v37 = vshrl.u32 %v36, 7
  %v38 = vsub.s32 0, %v37
  %v39 = vrot.slane %v30, %v38
  %v41 = vmul.f32 %v34, %v39
  %v43 = vlaneseq
  %v44 = vshrl.u32 %v43, 7
  %v45 = vsub.s32 0, %v44
  %v46 = vrot.slane %v33, %v45
  %v48 = vadd.f32 %v41, %v46
  %v49 = vmax.f32 %v48, 0.0
  %50 = vst [vmem:[%s5] sm:$0xff] %v49
  // Predicated region
  $region22: #{global_generator_forward.24} parent=0 // pred_check
    _
  $region23: #{global_generator_forward.24} parent=0 // pred_check_branch
    %52 = sbr.rel (0) target = $region25
  $region24: #{global_generator_forward.24} parent=0 // pred_region
    _
  $region25: #{global_generator_forward.24} parent=0 // pred_fallthru
    _
  // Predicated region
  $region26: #{global_generator_forward.24} parent=0 // pred_check
    _
  $region27: #{global_generator_forward.24} parent=0 // pred_check_branch
    %54 = sbr.rel (0) target = $region29
  $region28: #{global_generator_forward.24} parent=0 // pred_region
    _
  $region29: #{global_generator_forward.24} parent=0 // pred_fallthru
    _

// kernel: global_generator_forward.23
$region0: #{global_generator_forward.23}
  #allocation0 [shape = 'u32[]', space=smem, size = 0x4, offset = 0x4, fixed_abs, tag = 'smem constant byte address 0x4 - core index']
  #allocation1 [shape = 'u32[144,128]{1,0:T(1,128)}', space=vmem, size = 0x12000, scoped, tag = 'internal scratch']
  %s0 = inlined_call_operand.vmem [shape: bf16[32,144], index: 0, kind: input, shape index: {}]
  %s1 = inlined_call_operand.vmem [shape: bf16[144,32], index: 1, kind: input, shape index: {}]
  %s2 = inlined_call_operand.vmem [shape: f32[32,32], index: 2, kind: output, shape index: {0}]
  %s3 = inlined_call_operand.vmem [shape: f32[1,32], index: 3, kind: output, shape index: {1}]
  %s4 = inlined_call_operand.vmem [shape: f32[1,32], index: 4, kind: output, shape index: {2}]
  %5 = xla_tuple %s2, %s3, %s4
  %s6 = sld [smem:[#allocation0]]
  $region38: #{global_generator_forward.23} parent=0
    _
  %s8 = ssub.s32 1, %s6
  %s9 = scalar_select 0, %s8, %s6
  // Predicated region
  $region2: #{global_generator_forward.23} parent=0 // pred_check
    _
  $region3: #{global_generator_forward.23} parent=0 // pred_check_branch
    %11 = sbr.rel (0) target = $region5
  $region4: #{global_generator_forward.23} parent=0 // pred_region
    _
  $region5: #{global_generator_forward.23} parent=0 // pred_fallthru
    _
  // Predicated region
  $region6: #{global_generator_forward.23} parent=0 // pred_check
    _
  $region7: #{global_generator_forward.23} parent=0 // pred_check_branch
    %13 = sbr.rel (0) target = $region9
  $region8: #{global_generator_forward.23} parent=0 // pred_region
    _
  $region9: #{global_generator_forward.23} parent=0 // pred_fallthru
    _
  %p15 = scmp.eq.s32.totalorder 0, 0
  // Predicated region
  $region10: #{global_generator_forward.23} parent=0 // pred_check
    %p16 = pneg %p15
  $region11: #{global_generator_forward.23} parent=0 // pred_check_branch
    %18 = sbr.rel (%p16) target = $region13
  $region12: #{global_generator_forward.23} parent=0 // pred_region
    %vm19 = vcmask 253952
    %20 = vst.msk [vmem:[%s3] sm:$0x1] %vm19, 0.0
    %21 = vst.msk [vmem:[%s4] sm:$0x1] %vm19, 0.0
  $region13: #{global_generator_forward.23} parent=0 // pred_fallthru
    _
  %v22 = vld [vmem:[%s0] sm:$0xff]
  %v23 = vld [vmem:[%s0 + $0x8] sm:$0xff]
  %v24 = vld [vmem:[%s0 + $0x10] sm:$0xff]
  %v25 = vld [vmem:[%s0 + $0x18] sm:$0xff]
  %v26 = vld [vmem:[%s1] sm:$0xf]
  %v27 = vld [vmem:[%s1 + $0x4] sm:$0xf]
  %v28 = vld [vmem:[%s1 + $0x8] sm:$0xf]
  %v29 = vld [vmem:[%s1 + $0xc] sm:$0xf]
  %v30 = vld [vmem:[%s1 + $0x10] sm:$0xf]
  %v31 = vld [vmem:[%s1 + $0x14] sm:$0xf]
  %v32 = vld [vmem:[%s1 + $0x18] sm:$0xf]
  %v33 = vld [vmem:[%s1 + $0x1c] sm:$0xf]
  %v34 = vld [vmem:[%s1 + $0x20] sm:$0xf]
  %v35 = vld [vmem:[%s1 + $0x24] sm:$0xf]
  %v36 = vld [vmem:[%s1 + $0x28] sm:$0xf]
  %v37 = vld [vmem:[%s1 + $0x2c] sm:$0xf]
  %v38 = vld [vmem:[%s1 + $0x30] sm:$0xf]
  %v39 = vld [vmem:[%s1 + $0x34] sm:$0xf]
  %v40 = vld [vmem:[%s1 + $0x38] sm:$0xf]
  %v41 = vld [vmem:[%s1 + $0x3c] sm:$0xf]
  %v42 = vld [vmem:[%s1 + $0x40] sm:$0xf]
  %v43 = vld [vmem:[%s1 + $0x44] sm:$0xf]
  %v48 = vunpack.c.l.b16 %v22
  %v49 = vunpack.c.h.b16 %v22
  %v50 = vunpack.c.l.b16 %v23
  %v51 = vunpack.c.h.b16 %v23
  %v52 = vunpack.c.l.b16 %v24
  %v53 = vunpack.c.h.b16 %v24
  %v54 = vunpack.c.l.b16 %v25
  %v55 = vunpack.c.h.b16 %v25
  %v56 = vpack.c.b16 %v50, %v48
  %v57 = vpack.c.b16 %v51, %v49
  %v58 = vpack.c.b16 %v54, %v52
  %v59 = vpack.c.b16 %v55, %v53
  %v80 = vunpack.c.l.b16 %v26
  %v81 = vunpack.c.l.b16 %v27
  %v82 = vunpack.c.l.b16 %v28
  %v83 = vunpack.c.l.b16 %v29
  %v84 = vunpack.c.l.b16 %v30
  %v85 = vunpack.c.l.b16 %v31
  %v86 = vunpack.c.l.b16 %v32
  %v87 = vunpack.c.l.b16 %v33
  %v88 = vunpack.c.l.b16 %v34
  %v89 = vunpack.c.l.b16 %v35
  %v90 = vunpack.c.l.b16 %v36
  %v91 = vunpack.c.l.b16 %v37
  %v92 = vunpack.c.l.b16 %v38
  %v93 = vunpack.c.l.b16 %v39
  %v94 = vunpack.c.l.b16 %v40
  %v95 = vunpack.c.l.b16 %v41
  %v96 = vunpack.c.l.b16 %v42
  %v97 = vunpack.c.l.b16 %v43
  %v98 = vpack.c.b16 %v81, %v80
  %v99 = vpack.c.b16 %v83, %v82
  %v100 = vpack.c.b16 %v85, %v84
  %v101 = vpack.c.b16 %v87, %v86
  %v102 = vpack.c.b16 %v89, %v88
  %v103 = vpack.c.b16 %v91, %v90
  %v104 = vpack.c.b16 %v93, %v92
  %v105 = vpack.c.b16 %v95, %v94
  %v106 = vpack.c.b16 %v97, %v96
  %vm116 = vcmask 130048
  %v118 = vsel %vm116, %v57, 0
  %v121 = vsel %vm116, %v59, 0
  %123 = vmatprep.subr.bf16.mxu0 0
  %124 = vmatpush1.bf16.msra.mxu0 %v98
  %125 = vmatprep.subr.bf16.mxu0 0
  %126 = vmatpush1.bf16.msra.mxu0 %v99
  %127 = vmatprep.subr.bf16.mxu0 0
  %128 = vmatpush1.bf16.msra.mxu0 %v100
  %129 = vmatprep.subr.bf16.mxu0 0
  %130 = vmatpush1.bf16.msra.mxu0 %v101
  %131 = vmatprep.subr.bf16.mxu0 0
  %132 = vmatpush1.bf16.msra.mxu0 %v102
  %133 = vmatprep.subr.bf16.mxu0 0
  %134 = vmatpush1.bf16.msra.mxu0 %v103
  %135 = vmatprep.subr.bf16.mxu0 0
  %136 = vmatpush1.bf16.msra.mxu0 %v104
  %137 = vmatprep.subr.bf16.mxu0 0
  %138 = vmatpush1.bf16.msra.mxu0 %v105
  %139 = vmatprep.subr.bf16.mxu0 0
  %140 = vmatpush1.bf16.msra.mxu0 %v106
  %141 = vmatprep.subr.bf16.mxu0 0
  %142 = vmatpush1.bf16.msra.mxu0 0
  %143 = vmatprep.subr.bf16.mxu0 0
  %144 = vmatpush1.bf16.msra.mxu0 0
  %145 = vmatprep.subr.bf16.mxu0 0
  %146 = vmatpush1.bf16.msra.mxu0 0
  %147 = vmatprep.subr.bf16.mxu0 0
  %148 = vmatpush1.bf16.msra.mxu0 0
  %149 = vmatprep.subr.bf16.mxu0 0
  %150 = vmatpush1.bf16.msra.mxu0 0
  %151 = vmatprep.subr.bf16.mxu0 0
  %152 = vmatpush1.bf16.msra.mxu0 0
  %153 = vmatprep.subr.bf16.mxu0 0
  %154 = vmatpush1.bf16.msra.mxu0 0
  %155 = vmatprep.mubr.bf16.mxu0 %v118
  %156 = vmatmul.mubr.bf16.gmra.mrb[0].mxu0 %v56
  %v157 = vpop.f32.mrb[0].mxu0
  %v158 = vadd.f32 0.0, %v157
  %v159 = vpop.f32.mrb[0].mxu0
  %v160 = vpop.f32.mrb[0].mxu0
  %v161 = vadd.f32 0.0, %v160
  %v162 = vpop.f32.mrb[0].mxu0
  %163 = vmatprep.mubr.bf16.mxu0 %v121
  %164 = vmatmul.mubr.bf16.gmra.mrb[0].mxu0 %v58
  %v165 = vpop.f32.mrb[0].mxu0
  %v166 = vadd.f32 0.0, %v165
  %v167 = vpop.f32.mrb[0].mxu0
  %v168 = vpop.f32.mrb[0].mxu0
  %v169 = vadd.f32 0.0, %v168
  %v170 = vpop.f32.mrb[0].mxu0
  %171 = vdwg.mxu0
  %vm172 = vcmask 261120
  %173 = vst.msk [vmem:[%s2] sm:$0xff] %vm172, %v158
  %174 = vst.msk [vmem:[%s2 + $0x8] sm:$0xff] %vm172, %v161
  %175 = vst.msk [vmem:[%s2 + $0x10] sm:$0xff] %vm172, %v166
  %176 = vst.msk [vmem:[%s2 + $0x18] sm:$0xff] %vm172, %v169
  %v177 = vld [vmem:[%s3] sm:$0x1]
  %v178 = vsel %vm172, %v158, 0.0
  %v179 = vsel %vm172, %v161, 0.0
  %v180 = vadd.f32 %v178, %v179
  %v181 = vsel %vm172, %v166, 0.0
  %v182 = vadd.f32 %v180, %v181
  %v183 = vsel %vm172, %v169, 0.0
  %v184 = vadd.f32 %v182, %v183
  %v185 = vrot.slane %v184, 4
  %v186 = vadd.f32 %v184, %v185
  %v187 = vrot.slane %v186, 2
  %v188 = vadd.f32 %v186, %v187
  %v189 = vrot.slane %v188, 1
  %v190 = vadd.f32 %v188, %v189
  %v191 = vadd.f32 %v177, %v190
  %vm192 = vcmask 253952
  %193 = vst.msk [vmem:[%s3] sm:$0x1] %vm192, %v191
  %v194 = vld [vmem:[%s4] sm:$0x1]
  %v195 = vmul.f32 %v158, %v158
  %v196 = vmul.f32 %v161, %v161
  %v197 = vmul.f32 %v166, %v166
  %v198 = vmul.f32 %v169, %v169
  %v199 = vsel %vm172, %v195, 0.0
  %v200 = vsel %vm172, %v196, 0.0
  %v201 = vadd.f32 %v199, %v200
  %v202 = vsel %vm172, %v197, 0.0
  %v203 = vadd.f32 %v201, %v202
  %v204 = vsel %vm172, %v198, 0.0
  %v205 = vadd.f32 %v203, %v204
  %v206 = vrot.slane %v205, 4
  %v207 = vadd.f32 %v205, %v206
  %v208 = vrot.slane %v207, 2
  %v209 = vadd.f32 %v207, %v208
  %v210 = vrot.slane %v209, 1
  %v211 = vadd.f32 %v209, %v210
  %v212 = vadd.f32 %v194, %v211
  %213 = vst.msk [vmem:[%s4] sm:$0x1] %vm192, %v212
  // Predicated region
  $region14: #{global_generator_forward.23} parent=0 // pred_check
    _
  $region15: #{global_generator_forward.23} parent=0 // pred_check_branch
    %215 = sbr.rel (0) target = $region17
  $region16: #{global_generator_forward.23} parent=0 // pred_region
    _
  $region17: #{global_generator_forward.23} parent=0 // pred_fallthru
    _
  // Predicated region
  $region18: #{global_generator_forward.23} parent=0 // pred_check
    _
  $region19: #{global_generator_forward.23} parent=0 // pred_check_branch
    %217 = sbr.rel (0) target = $region21
  $region20: #{global_generator_forward.23} parent=0 // pred_region
    _
  $region21: #{global_generator_forward.23} parent=0 // pred_fallthru
    _
  // Predicated region
  $region22: #{global_generator_forward.23} parent=0 // pred_check
    _
  $region23: #{global_generator_forward.23} parent=0 // pred_check_branch
    %219 = sbr.rel (0) target = $region25
  $region24: #{global_generator_forward.23} parent=0 // pred_region
    _
  $region25: #{global_generator_forward.23} parent=0 // pred_fallthru
    _
  // Predicated region
  $region26: #{global_generator_forward.23} parent=0 // pred_check
    _
  $region27: #{global_generator_forward.23} parent=0 // pred_check_branch
    %221 = sbr.rel (0) target = $region29
  $region28: #{global_generator_forward.23} parent=0 // pred_region
    _
  $region29: #{global_generator_forward.23} parent=0 // pred_fallthru
    _
  // Predicated region
  $region30: #{global_generator_forward.23} parent=0 // pred_check
    _
  $region31: #{global_generator_forward.23} parent=0 // pred_check_branch
    %223 = sbr.rel (0) target = $region33
  $region32: #{global_generator_forward.23} parent=0 // pred_region
    _
  $region33: #{global_generator_forward.23} parent=0 // pred_fallthru
    _
  // Predicated region
  $region34: #{global_generator_forward.23} parent=0 // pred_check
    _
  $region35: #{global_generator_forward.23} parent=0 // pred_check_branch
    %225 = sbr.rel (0) target = $region37
  $region36: #{global_generator_forward.23} parent=0 // pred_region
    _
  $region37: #{global_generator_forward.23} parent=0 // pred_fallthru
    _

// kernel: global_generator_forward.28
$region0: #{global_generator_forward.28}
  #allocation0 [shape = 'u32[]', space=smem, size = 0x4, offset = 0x4, fixed_abs, tag = 'smem constant byte address 0x4 - core index']
  #allocation1 [shape = 'u32[144,128]{1,0:T(1,128)}', space=vmem, size = 0x12000, scoped, tag = 'internal scratch']
  %s0 = inlined_call_operand.vmem [shape: f32[8,128], index: 0, kind: input, shape index: {}]
  %s1 = inlined_call_operand.vmem [shape: f32[1,128], index: 1, kind: input, shape index: {}]
  %s2 = inlined_call_operand.vmem [shape: f32[1,128], index: 2, kind: input, shape index: {}]
  %s3 = inlined_call_operand.vmem [shape: f32[1,128], index: 3, kind: input, shape index: {}]
  %s4 = inlined_call_operand.vmem [shape: f32[1,128], index: 4, kind: input, shape index: {}]
  %s5 = inlined_call_operand.vmem [shape: f32[8,128], index: 5, kind: input, shape index: {}]
  %s6 = inlined_call_operand.vmem [shape: f32[8,128], index: 6, kind: output, shape index: {}]
  %s7 = sld [smem:[#allocation0]]
  $region34: #{global_generator_forward.28} parent=0
    _
  %s9 = ssub.s32 1, %s7
  %s10 = scalar_select 0, %s9, %s7
  // Predicated region
  $region2: #{global_generator_forward.28} parent=0 // pred_check
    _
  $region3: #{global_generator_forward.28} parent=0 // pred_check_branch
    %12 = sbr.rel (0) target = $region5
  $region4: #{global_generator_forward.28} parent=0 // pred_region
    _
  $region5: #{global_generator_forward.28} parent=0 // pred_fallthru
    _
  // Predicated region
  $region6: #{global_generator_forward.28} parent=0 // pred_check
    _
  $region7: #{global_generator_forward.28} parent=0 // pred_check_branch
    %14 = sbr.rel (0) target = $region9
  $region8: #{global_generator_forward.28} parent=0 // pred_region
    _
  $region9: #{global_generator_forward.28} parent=0 // pred_fallthru
    _
  // Predicated region
  $region10: #{global_generator_forward.28} parent=0 // pred_check
    _
  $region11: #{global_generator_forward.28} parent=0 // pred_check_branch
    %16 = sbr.rel (0) target = $region13
  $region12: #{global_generator_forward.28} parent=0 // pred_region
    _
  $region13: #{global_generator_forward.28} parent=0 // pred_fallthru
    _
  // Predicated region
  $region14: #{global_generator_forward.28} parent=0 // pred_check
    _
  $region15: #{global_generator_forward.28} parent=0 // pred_check_branch
    %18 = sbr.rel (0) target = $region17
  $region16: #{global_generator_forward.28} parent=0 // pred_region
    _
  $region17: #{global_generator_forward.28} parent=0 // pred_fallthru
    _
  // Predicated region
  $region18: #{global_generator_forward.28} parent=0 // pred_check
    _
  $region19: #{global_generator_forward.28} parent=0 // pred_check_branch
    %20 = sbr.rel (0) target = $region21
  $region20: #{global_generator_forward.28} parent=0 // pred_region
    _
  $region21: #{global_generator_forward.28} parent=0 // pred_fallthru
    _
  // Predicated region
  $region22: #{global_generator_forward.28} parent=0 // pred_check
    _
  $region23: #{global_generator_forward.28} parent=0 // pred_check_branch
    %22 = sbr.rel (0) target = $region25
  $region24: #{global_generator_forward.28} parent=0 // pred_region
    _
  $region25: #{global_generator_forward.28} parent=0 // pred_fallthru
    _
  %v23 = vld [vmem:[%s1] sm:$0x1]
  %v24 = vmul.f32 %v23, 0.03125
  %v25 = vld [vmem:[%s2] sm:$0x1]
  %v26 = vmul.f32 %v25, 0.03125
  %v27 = vmul.f32 %v24, %v24
  %v28 = vsub.f32 %v26, %v27
  %v29 = vmax.f32 %v28, 0.0
  %v30 = vld [vmem:[%s3] sm:$0x1]
  %v31 = vadd.f32 %v29, 1e-05
  %v32 = vrsqrt.pop %v31
  %v33 = vmul.f32 %v30, %v32
  %v34 = vld [vmem:[%s4] sm:$0x1]
  %v35 = vmul.f32 %v24, %v33
  %v36 = vsub.f32 %v34, %v35
  %v37 = vld [vmem:[%s0] sm:$0xff]
  %v39 = vlaneseq
  %v40 = vshrl.u32 %v39, 7
  %v41 = vsub.s32 0, %v40
  %v42 = vrot.slane %v33, %v41
  %v44 = vmul.f32 %v37, %v42
  %v46 = vlaneseq
  %v47 = vshrl.u32 %v46, 7
  %v48 = vsub.s32 0, %v47
  %v49 = vrot.slane %v36, %v48
  %v51 = vadd.f32 %v44, %v49
  %v52 = vld [vmem:[%s5] sm:$0xff]
  %v53 = vadd.f32 %v51, %v52
  %54 = vst [vmem:[%s6] sm:$0xff] %v53
  // Predicated region
  $region26: #{global_generator_forward.28} parent=0 // pred_check
    _
  $region27: #{global_generator_forward.28} parent=0 // pred_check_branch
    %56 = sbr.rel (0) target = $region29
  $region28: #{global_generator_forward.28} parent=0 // pred_region
    _
  $region29: #{global_generator_forward.28} parent=0 // pred_fallthru
    _
  // Predicated region
  $region30: #{global_generator_forward.28} parent=0 // pred_check
    _
  $region31: #{global_generator_forward.28} parent=0 // pred_check_branch
    %58 = sbr.rel (0) target = $region33
  $region32: #{global_generator_forward.28} parent=0 // pred_region
    _
  $region33: #{global_generator_forward.28} parent=0 // pred_fallthru
    _

// kernel: global_generator_forward.25
$region0: #{global_generator_forward.25}
  #allocation0 [shape = 'u32[]', space=smem, size = 0x4, offset = 0x4, fixed_abs, tag = 'smem constant byte address 0x4 - core index']
  #allocation1 [shape = 'u32[144,128]{1,0:T(1,128)}', space=vmem, size = 0x12000, scoped, tag = 'internal scratch']
  %s0 = inlined_call_operand.vmem [shape: bf16[32,288], index: 0, kind: input, shape index: {}]
  %s1 = inlined_call_operand.vmem [shape: bf16[288,32], index: 1, kind: input, shape index: {}]
  %s2 = inlined_call_operand.vmem [shape: f32[32,32], index: 2, kind: output, shape index: {0}]
  %s3 = inlined_call_operand.vmem [shape: f32[1,32], index: 3, kind: output, shape index: {1}]
  %s4 = inlined_call_operand.vmem [shape: f32[1,32], index: 4, kind: output, shape index: {2}]
  %5 = xla_tuple %s2, %s3, %s4
  %s6 = sld [smem:[#allocation0]]
  $region38: #{global_generator_forward.25} parent=0
    _
  %s8 = ssub.s32 1, %s6
  %s9 = scalar_select 0, %s8, %s6
  // Predicated region
  $region2: #{global_generator_forward.25} parent=0 // pred_check
    _
  $region3: #{global_generator_forward.25} parent=0 // pred_check_branch
    %11 = sbr.rel (0) target = $region5
  $region4: #{global_generator_forward.25} parent=0 // pred_region
    _
  $region5: #{global_generator_forward.25} parent=0 // pred_fallthru
    _
  // Predicated region
  $region6: #{global_generator_forward.25} parent=0 // pred_check
    _
  $region7: #{global_generator_forward.25} parent=0 // pred_check_branch
    %13 = sbr.rel (0) target = $region9
  $region8: #{global_generator_forward.25} parent=0 // pred_region
    _
  $region9: #{global_generator_forward.25} parent=0 // pred_fallthru
    _
  %p15 = scmp.eq.s32.totalorder 0, 0
  // Predicated region
  $region10: #{global_generator_forward.25} parent=0 // pred_check
    %p16 = pneg %p15
  $region11: #{global_generator_forward.25} parent=0 // pred_check_branch
    %18 = sbr.rel (%p16) target = $region13
  $region12: #{global_generator_forward.25} parent=0 // pred_region
    %vm19 = vcmask 253952
    %20 = vst.msk [vmem:[%s3] sm:$0x1] %vm19, 0.0
    %21 = vst.msk [vmem:[%s4] sm:$0x1] %vm19, 0.0
  $region13: #{global_generator_forward.25} parent=0 // pred_fallthru
    _
  %v22 = vld [vmem:[%s0] sm:$0xff]
  %v23 = vld [vmem:[%s0 + $0x8] sm:$0xf]
  %v24 = vld [vmem:[%s0 + $0xc] sm:$0xff]
  %v25 = vld [vmem:[%s0 + $0x14] sm:$0xf]
  %v26 = vld [vmem:[%s0 + $0x18] sm:$0xff]
  %v27 = vld [vmem:[%s0 + $0x20] sm:$0xf]
  %v28 = vld [vmem:[%s0 + $0x24] sm:$0xff]
  %v29 = vld [vmem:[%s0 + $0x2c] sm:$0xf]
  %v30 = vld [vmem:[%s1] sm:$0xf]
  %v31 = vld [vmem:[%s1 + $0x4] sm:$0xf]
  %v32 = vld [vmem:[%s1 + $0x8] sm:$0xf]
  %v33 = vld [vmem:[%s1 + $0xc] sm:$0xf]
  %v34 = vld [vmem:[%s1 + $0x10] sm:$0xf]
  %v35 = vld [vmem:[%s1 + $0x14] sm:$0xf]
  %v36 = vld [vmem:[%s1 + $0x18] sm:$0xf]
  %v37 = vld [vmem:[%s1 + $0x1c] sm:$0xf]
  %v38 = vld [vmem:[%s1 + $0x20] sm:$0xf]
  %v39 = vld [vmem:[%s1 + $0x24] sm:$0xf]
  %v40 = vld [vmem:[%s1 + $0x28] sm:$0xf]
  %v41 = vld [vmem:[%s1 + $0x2c] sm:$0xf]
  %v42 = vld [vmem:[%s1 + $0x30] sm:$0xf]
  %v43 = vld [vmem:[%s1 + $0x34] sm:$0xf]
  %v44 = vld [vmem:[%s1 + $0x38] sm:$0xf]
  %v45 = vld [vmem:[%s1 + $0x3c] sm:$0xf]
  %v46 = vld [vmem:[%s1 + $0x40] sm:$0xf]
  %v47 = vld [vmem:[%s1 + $0x44] sm:$0xf]
  %v48 = vld [vmem:[%s1 + $0x48] sm:$0xf]
  %v49 = vld [vmem:[%s1 + $0x4c] sm:$0xf]
  %v50 = vld [vmem:[%s1 + $0x50] sm:$0xf]
  %v51 = vld [vmem:[%s1 + $0x54] sm:$0xf]
  %v52 = vld [vmem:[%s1 + $0x58] sm:$0xf]
  %v53 = vld [vmem:[%s1 + $0x5c] sm:$0xf]
  %v54 = vld [vmem:[%s1 + $0x60] sm:$0xf]
  %v55 = vld [vmem:[%s1 + $0x64] sm:$0xf]
  %v56 = vld [vmem:[%s1 + $0x68] sm:$0xf]
  %v57 = vld [vmem:[%s1 + $0x6c] sm:$0xf]
  %v58 = vld [vmem:[%s1 + $0x70] sm:$0xf]
  %v59 = vld [vmem:[%s1 + $0x74] sm:$0xf]
  %v60 = vld [vmem:[%s1 + $0x78] sm:$0xf]
  %v61 = vld [vmem:[%s1 + $0x7c] sm:$0xf]
  %v62 = vld [vmem:[%s1 + $0x80] sm:$0xf]
  %v63 = vld [vmem:[%s1 + $0x84] sm:$0xf]
  %v64 = vld [vmem:[%s1 + $0x88] sm:$0xf]
  %v65 = vld [vmem:[%s1 + $0x8c] sm:$0xf]
  %v74 = vunpack.c.l.b16 %v22
  %v75 = vunpack.c.h.b16 %v22
  %v76 = vunpack.c.l.b16 %v23
  %v77 = vunpack.c.l.b16 %v24
  %v78 = vunpack.c.h.b16 %v24
  %v79 = vunpack.c.l.b16 %v25
  %v80 = vunpack.c.l.b16 %v26
  %v81 = vunpack.c.h.b16 %v26
  %v82 = vunpack.c.l.b16 %v27
  %v83 = vunpack.c.l.b16 %v28
  %v84 = vunpack.c.h.b16 %v28
  %v85 = vunpack.c.l.b16 %v29
  %v86 = vpack.c.b16 %v77, %v74
  %v87 = vpack.c.b16 %v78, %v75
  %v88 = vpack.c.b16 %v79, %v76
  %v89 = vpack.c.b16 %v83, %v80
  %v90 = vpack.c.b16 %v84, %v81
  %v91 = vpack.c.b16 %v85, %v82
  %v132 = vunpack.c.l.b16 %v30
  %v133 = vunpack.c.l.b16 %v31
  %v134 = vunpack.c.l.b16 %v32
  %v135 = vunpack.c.l.b16 %v33
  %v136 = vunpack.c.l.b16 %v34
  %v137 = vunpack.c.l.b16 %v35
  %v138 = vunpack.c.l.b16 %v36
  %v139 = vunpack.c.l.b16 %v37
  %v140 = vunpack.c.l.b16 %v38
  %v141 = vunpack.c.l.b16 %v39
  %v142 = vunpack.c.l.b16 %v40
  %v143 = vunpack.c.l.b16 %v41
  %v144 = vunpack.c.l.b16 %v42
  %v145 = vunpack.c.l.b16 %v43
  %v146 = vunpack.c.l.b16 %v44
  %v147 = vunpack.c.l.b16 %v45
  %v148 = vunpack.c.l.b16 %v46
  %v149 = vunpack.c.l.b16 %v47
  %v150 = vunpack.c.l.b16 %v48
  %v151 = vunpack.c.l.b16 %v49
  %v152 = vunpack.c.l.b16 %v50
  %v153 = vunpack.c.l.b16 %v51
  %v154 = vunpack.c.l.b16 %v52
  %v155 = vunpack.c.l.b16 %v53
  %v156 = vunpack.c.l.b16 %v54
  %v157 = vunpack.c.l.b16 %v55
  %v158 = vunpack.c.l.b16 %v56
  %v159 = vunpack.c.l.b16 %v57
  %v160 = vunpack.c.l.b16 %v58
  %v161 = vunpack.c.l.b16 %v59
  %v162 = vunpack.c.l.b16 %v60
  %v163 = vunpack.c.l.b16 %v61
  %v164 = vunpack.c.l.b16 %v62
  %v165 = vunpack.c.l.b16 %v63
  %v166 = vunpack.c.l.b16 %v64
  %v167 = vunpack.c.l.b16 %v65
  %v168 = vpack.c.b16 %v133, %v132
  %v169 = vpack.c.b16 %v135, %v134
  %v170 = vpack.c.b16 %v137, %v136
  %v171 = vpack.c.b16 %v139, %v138
  %v172 = vpack.c.b16 %v141, %v140
  %v173 = vpack.c.b16 %v143, %v142
  %v174 = vpack.c.b16 %v145, %v144
  %v175 = vpack.c.b16 %v147, %v146
  %v176 = vpack.c.b16 %v149, %v148
  %v177 = vpack.c.b16 %v151, %v150
  %v178 = vpack.c.b16 %v153, %v152
  %v179 = vpack.c.b16 %v155, %v154
  %v180 = vpack.c.b16 %v157, %v156
  %v181 = vpack.c.b16 %v159, %v158
  %v182 = vpack.c.b16 %v161, %v160
  %v183 = vpack.c.b16 %v163, %v162
  %v184 = vpack.c.b16 %v165, %v164
  %v185 = vpack.c.b16 %v167, %v166
  %vm204 = vcmask 261120
  %v206 = vsel %vm204, %v88, 0
  %v209 = vsel %vm204, %v91, 0
  %211 = vmatprep.subr.bf16.mxu0 0
  %212 = vmatpush1.bf16.msra.mxu0 %v168
  %213 = vmatprep.subr.bf16.mxu0 0
  %214 = vmatpush1.bf16.msra.mxu0 %v169
  %215 = vmatprep.subr.bf16.mxu0 0
  %216 = vmatpush1.bf16.msra.mxu0 %v170
  %217 = vmatprep.subr.bf16.mxu0 0
  %218 = vmatpush1.bf16.msra.mxu0 %v171
  %219 = vmatprep.subr.bf16.mxu0 0
  %220 = vmatpush1.bf16.msra.mxu0 %v172
  %221 = vmatprep.subr.bf16.mxu0 0
  %222 = vmatpush1.bf16.msra.mxu0 %v173
  %223 = vmatprep.subr.bf16.mxu0 0
  %224 = vmatpush1.bf16.msra.mxu0 %v174
  %225 = vmatprep.subr.bf16.mxu0 0
  %226 = vmatpush1.bf16.msra.mxu0 %v175
  %227 = vmatprep.subr.bf16.mxu0 0
  %228 = vmatpush1.bf16.msra.mxu0 %v176
  %229 = vmatprep.subr.bf16.mxu0 0
  %230 = vmatpush1.bf16.msra.mxu0 %v177
  %231 = vmatprep.subr.bf16.mxu0 0
  %232 = vmatpush1.bf16.msra.mxu0 %v178
  %233 = vmatprep.subr.bf16.mxu0 0
  %234 = vmatpush1.bf16.msra.mxu0 %v179
  %235 = vmatprep.subr.bf16.mxu0 0
  %236 = vmatpush1.bf16.msra.mxu0 %v180
  %237 = vmatprep.subr.bf16.mxu0 0
  %238 = vmatpush1.bf16.msra.mxu0 %v181
  %239 = vmatprep.subr.bf16.mxu0 0
  %240 = vmatpush1.bf16.msra.mxu0 %v182
  %241 = vmatprep.subr.bf16.mxu0 0
  %242 = vmatpush1.bf16.msra.mxu0 %v183
  %243 = vmatprep.mubr.bf16.mxu0 %v87
  %244 = vmatmul.mubr.bf16.gmra.mrb[0].mxu0 %v86
  %v245 = vpop.f32.mrb[0].mxu0
  %v246 = vadd.f32 0.0, %v245
  %v247 = vpop.f32.mrb[0].mxu0
  %v248 = vpop.f32.mrb[0].mxu0
  %v249 = vadd.f32 0.0, %v248
  %v250 = vpop.f32.mrb[0].mxu0
  %251 = vmatprep.mubr.bf16.mxu0 %v90
  %252 = vmatmul.mubr.bf16.gmra.mrb[0].mxu0 %v89
  %v253 = vpop.f32.mrb[0].mxu0
  %v254 = vadd.f32 0.0, %v253
  %v255 = vpop.f32.mrb[0].mxu0
  %v256 = vpop.f32.mrb[0].mxu0
  %v257 = vadd.f32 0.0, %v256
  %v258 = vpop.f32.mrb[0].mxu0
  %259 = vdwg.mxu0
  %260 = vmatprep.subr.bf16.mxu0 0
  %261 = vmatpush1.bf16.msra.mxu0 %v184
  %262 = vmatprep.subr.bf16.mxu0 0
  %263 = vmatpush1.bf16.msra.mxu0 %v185
  %264 = vmatprep.subr.bf16.mxu0 0
  %265 = vmatpush1.bf16.msra.mxu0 0
  %266 = vmatprep.subr.bf16.mxu0 0
  %267 = vmatpush1.bf16.msra.mxu0 0
  %268 = vmatprep.subr.bf16.mxu0 0
  %269 = vmatpush1.bf16.msra.mxu0 0
  %270 = vmatprep.subr.bf16.mxu0 0
  %271 = vmatpush1.bf16.msra.mxu0 0
  %272 = vmatprep.subr.bf16.mxu0 0
  %273 = vmatpush1.bf16.msra.mxu0 0
  %274 = vmatprep.subr.bf16.mxu0 0
  %275 = vmatpush1.bf16.msra.mxu0 0
  %276 = vmatprep.subr.bf16.mxu0 0
  %277 = vmatpush1.bf16.msra.mxu0 0
  %278 = vmatprep.subr.bf16.mxu0 0
  %279 = vmatpush1.bf16.msra.mxu0 0
  %280 = vmatprep.subr.bf16.mxu0 0
  %281 = vmatpush1.bf16.msra.mxu0 0
  %282 = vmatprep.subr.bf16.mxu0 0
  %283 = vmatpush1.bf16.msra.mxu0 0
  %284 = vmatprep.subr.bf16.mxu0 0
  %285 = vmatpush1.bf16.msra.mxu0 0
  %286 = vmatprep.subr.bf16.mxu0 0
  %287 = vmatpush1.bf16.msra.mxu0 0
  %288 = vmatprep.subr.bf16.mxu0 0
  %289 = vmatpush1.bf16.msra.mxu0 0
  %290 = vmatprep.subr.bf16.mxu0 0
  %291 = vmatpush1.bf16.msra.mxu0 0
  %292 = vmatprep.mubr.bf16.mxu0 0
  %293 = vmatmul.mubr.bf16.gmra.mrb[0].mxu0 %v206
  %v294 = vpop.f32.mrb[0].mxu0
  %v295 = vadd.f32 %v246, %v294
  %v296 = vpop.f32.mrb[0].mxu0
  %v297 = vpop.f32.mrb[0].mxu0
  %v298 = vadd.f32 %v249, %v297
  %v299 = vpop.f32.mrb[0].mxu0
  %300 = vmatprep.mubr.bf16.mxu0 0
  %301 = vmatmul.mubr.bf16.gmra.mrb[0].mxu0 %v209
  %v302 = vpop.f32.mrb[0].mxu0
  %v303 = vadd.f32 %v254, %v302
  %v304 = vpop.f32.mrb[0].mxu0
  %v305 = vpop.f32.mrb[0].mxu0
  %v306 = vadd.f32 %v257, %v305
  %v307 = vpop.f32.mrb[0].mxu0
  %308 = vdwg.mxu0
  %309 = vst.msk [vmem:[%s2] sm:$0xff] %vm204, %v295
  %310 = vst.msk [vmem:[%s2 + $0x8] sm:$0xff] %vm204, %v298
  %311 = vst.msk [vmem:[%s2 + $0x10] sm:$0xff] %vm204, %v303
  %312 = vst.msk [vmem:[%s2 + $0x18] sm:$0xff] %vm204, %v306
  %v313 = vld [vmem:[%s3] sm:$0x1]
  %v314 = vsel %vm204, %v295, 0.0
  %v315 = vsel %vm204, %v298, 0.0
  %v316 = vadd.f32 %v314, %v315
  %v317 = vsel %vm204, %v303, 0.0
  %v318 = vadd.f32 %v316, %v317
  %v319 = vsel %vm204, %v306, 0.0
  %v320 = vadd.f32 %v318, %v319
  %v321 = vrot.slane %v320, 4
  %v322 = vadd.f32 %v320, %v321
  %v323 = vrot.slane %v322, 2
  %v324 = vadd.f32 %v322, %v323
  %v325 = vrot.slane %v324, 1
  %v326 = vadd.f32 %v324, %v325
  %v327 = vadd.f32 %v313, %v326
  %vm328 = vcmask 253952
  %329 = vst.msk [vmem:[%s3] sm:$0x1] %vm328, %v327
  %v330 = vld [vmem:[%s4] sm:$0x1]
  %v331 = vmul.f32 %v295, %v295
  %v332 = vmul.f32 %v298, %v298
  %v333 = vmul.f32 %v303, %v303
  %v334 = vmul.f32 %v306, %v306
  %v335 = vsel %vm204, %v331, 0.0
  %v336 = vsel %vm204, %v332, 0.0
  %v337 = vadd.f32 %v335, %v336
  %v338 = vsel %vm204, %v333, 0.0
  %v339 = vadd.f32 %v337, %v338
  %v340 = vsel %vm204, %v334, 0.0
  %v341 = vadd.f32 %v339, %v340
  %v342 = vrot.slane %v341, 4
  %v343 = vadd.f32 %v341, %v342
  %v344 = vrot.slane %v343, 2
  %v345 = vadd.f32 %v343, %v344
  %v346 = vrot.slane %v345, 1
  %v347 = vadd.f32 %v345, %v346
  %v348 = vadd.f32 %v330, %v347
  %349 = vst.msk [vmem:[%s4] sm:$0x1] %vm328, %v348
  // Predicated region
  $region14: #{global_generator_forward.25} parent=0 // pred_check
    _
  $region15: #{global_generator_forward.25} parent=0 // pred_check_branch
    %351 = sbr.rel (0) target = $region17
  $region16: #{global_generator_forward.25} parent=0 // pred_region
    _
  $region17: #{global_generator_forward.25} parent=0 // pred_fallthru
    _
  // Predicated region
  $region18: #{global_generator_forward.25} parent=0 // pred_check
    _
  $region19: #{global_generator_forward.25} parent=0 // pred_check_branch
    %353 = sbr.rel (0) target = $region21
  $region20: #{global_generator_forward.25} parent=0 // pred_region
    _
  $region21: #{global_generator_forward.25} parent=0 // pred_fallthru
    _
  // Predicated region
  $region22: #{global_generator_forward.25} parent=0 // pred_check
    _
  $region23: #{global_generator_forward.25} parent=0 // pred_check_branch
    %355 = sbr.rel (0) target = $region25
  $region24: #{global_generator_forward.25} parent=0 // pred_region
    _
  $region25: #{global_generator_forward.25} parent=0 // pred_fallthru
    _
  // Predicated region
  $region26: #{global_generator_forward.25} parent=0 // pred_check
    _
  $region27: #{global_generator_forward.25} parent=0 // pred_check_branch
    %357 = sbr.rel (0) target = $region29
  $region28: #{global_generator_forward.25} parent=0 // pred_region
    _
  $region29: #{global_generator_forward.25} parent=0 // pred_fallthru
    _
  // Predicated region
  $region30: #{global_generator_forward.25} parent=0 // pred_check
    _
  $region31: #{global_generator_forward.25} parent=0 // pred_check_branch
    %359 = sbr.rel (0) target = $region33
  $region32: #{global_generator_forward.25} parent=0 // pred_region
    _
  $region33: #{global_generator_forward.25} parent=0 // pred_fallthru
    _
  // Predicated region
  $region34: #{global_generator_forward.25} parent=0 // pred_check
    _
  $region35: #{global_generator_forward.25} parent=0 // pred_check_branch
    %361 = sbr.rel (0) target = $region37
  $region36: #{global_generator_forward.25} parent=0 // pred_region
    _
  $region37: #{global_generator_forward.25} parent=0 // pred_fallthru
    _

// kernel: global_generator_forward.33
$region0: #{global_generator_forward.33}
  #allocation0 [shape = 'u32[]', space=smem, size = 0x4, offset = 0x4, fixed_abs, tag = 'smem constant byte address 0x4 - core index']
  #allocation1 [shape = 'u32[144,128]{1,0:T(1,128)}', space=vmem, size = 0x12000, scoped, tag = 'internal scratch']
  %s0 = inlined_call_operand.vmem [shape: bf16[32,128], index: 0, kind: input, shape index: {}]
  %s1 = inlined_call_operand.vmem [shape: bf16[128,64], index: 1, kind: input, shape index: {}]
  %s2 = inlined_call_operand.vmem [shape: f32[32,64], index: 2, kind: output, shape index: {0}]
  %s3 = inlined_call_operand.vmem [shape: f32[1,64], index: 3, kind: output, shape index: {1}]
  %s4 = inlined_call_operand.vmem [shape: f32[1,64], index: 4, kind: output, shape index: {2}]
  %5 = xla_tuple %s2, %s3, %s4
  %s6 = sld [smem:[#allocation0]]
  $region38: #{global_generator_forward.33} parent=0
    _
  %s8 = ssub.s32 1, %s6
  %s9 = scalar_select 0, %s8, %s6
  // Predicated region
  $region2: #{global_generator_forward.33} parent=0 // pred_check
    _
  $region3: #{global_generator_forward.33} parent=0 // pred_check_branch
    %11 = sbr.rel (0) target = $region5
  $region4: #{global_generator_forward.33} parent=0 // pred_region
    _
  $region5: #{global_generator_forward.33} parent=0 // pred_fallthru
    _
  // Predicated region
  $region6: #{global_generator_forward.33} parent=0 // pred_check
    _
  $region7: #{global_generator_forward.33} parent=0 // pred_check_branch
    %13 = sbr.rel (0) target = $region9
  $region8: #{global_generator_forward.33} parent=0 // pred_region
    _
  $region9: #{global_generator_forward.33} parent=0 // pred_fallthru
    _
  %p15 = scmp.eq.s32.totalorder 0, 0
  // Predicated region
  $region10: #{global_generator_forward.33} parent=0 // pred_check
    %p16 = pneg %p15
  $region11: #{global_generator_forward.33} parent=0 // pred_check_branch
    %18 = sbr.rel (%p16) target = $region13
  $region12: #{global_generator_forward.33} parent=0 // pred_region
    %vm19 = vcmask 516096
    %20 = vst.msk [vmem:[%s3] sm:$0x1] %vm19, 0.0
    %21 = vst.msk [vmem:[%s4] sm:$0x1] %vm19, 0.0
  $region13: #{global_generator_forward.33} parent=0 // pred_fallthru
    _
  %v22 = vld [vmem:[%s0] sm:$0xf]
  %v23 = vld [vmem:[%s0 + $0x4] sm:$0xf]
  %v24 = vld [vmem:[%s0 + $0x8] sm:$0xf]
  %v25 = vld [vmem:[%s0 + $0xc] sm:$0xf]
  %v26 = vld [vmem:[%s1] sm:$0xf]
  %v27 = vld [vmem:[%s1 + $0x4] sm:$0xf]
  %v28 = vld [vmem:[%s1 + $0x8] sm:$0xf]
  %v29 = vld [vmem:[%s1 + $0xc] sm:$0xf]
  %v30 = vld [vmem:[%s1 + $0x10] sm:$0xf]
  %v31 = vld [vmem:[%s1 + $0x14] sm:$0xf]
  %v32 = vld [vmem:[%s1 + $0x18] sm:$0xf]
  %v33 = vld [vmem:[%s1 + $0x1c] sm:$0xf]
  %v34 = vld [vmem:[%s1 + $0x20] sm:$0xf]
  %v35 = vld [vmem:[%s1 + $0x24] sm:$0xf]
  %v36 = vld [vmem:[%s1 + $0x28] sm:$0xf]
  %v37 = vld [vmem:[%s1 + $0x2c] sm:$0xf]
  %v38 = vld [vmem:[%s1 + $0x30] sm:$0xf]
  %v39 = vld [vmem:[%s1 + $0x34] sm:$0xf]
  %v40 = vld [vmem:[%s1 + $0x38] sm:$0xf]
  %v41 = vld [vmem:[%s1 + $0x3c] sm:$0xf]
  %v46 = vunpack.c.l.b16 %v22
  %v47 = vunpack.c.l.b16 %v23
  %v48 = vunpack.c.l.b16 %v24
  %v49 = vunpack.c.l.b16 %v25
  %v50 = vpack.c.b16 %v47, %v46
  %v51 = vpack.c.b16 %v49, %v48
  %v70 = vunpack.c.l.b16 %v26
  %v71 = vunpack.c.l.b16 %v27
  %v72 = vunpack.c.l.b16 %v28
  %v73 = vunpack.c.l.b16 %v29
  %v74 = vunpack.c.l.b16 %v30
  %v75 = vunpack.c.l.b16 %v31
  %v76 = vunpack.c.l.b16 %v32
  %v77 = vunpack.c.l.b16 %v33
  %v78 = vunpack.c.l.b16 %v34
  %v79 = vunpack.c.l.b16 %v35
  %v80 = vunpack.c.l.b16 %v36
  %v81 = vunpack.c.l.b16 %v37
  %v82 = vunpack.c.l.b16 %v38
  %v83 = vunpack.c.l.b16 %v39
  %v84 = vunpack.c.l.b16 %v40
  %v85 = vunpack.c.l.b16 %v41
  %v86 = vpack.c.b16 %v71, %v70
  %v87 = vpack.c.b16 %v73, %v72
  %v88 = vpack.c.b16 %v75, %v74
  %v89 = vpack.c.b16 %v77, %v76
  %v90 = vpack.c.b16 %v79, %v78
  %v91 = vpack.c.b16 %v81, %v80
  %v92 = vpack.c.b16 %v83, %v82
  %v93 = vpack.c.b16 %v85, %v84
  %102 = vmatprep.subr.bf16.mxu0 0
  %103 = vmatpush1.bf16.msra.mxu0 %v86
  %104 = vmatprep.subr.bf16.mxu0 0
  %105 = vmatpush1.bf16.msra.mxu0 %v87
  %106 = vmatprep.subr.bf16.mxu0 0
  %107 = vmatpush1.bf16.msra.mxu0 %v88
  %108 = vmatprep.subr.bf16.mxu0 0
  %109 = vmatpush1.bf16.msra.mxu0 %v89
  %110 = vmatprep.subr.bf16.mxu0 0
  %111 = vmatpush1.bf16.msra.mxu0 %v90
  %112 = vmatprep.subr.bf16.mxu0 0
  %113 = vmatpush1.bf16.msra.mxu0 %v91
  %114 = vmatprep.subr.bf16.mxu0 0
  %115 = vmatpush1.bf16.msra.mxu0 %v92
  %116 = vmatprep.subr.bf16.mxu0 0
  %117 = vmatpush1.bf16.msra.mxu0 %v93
  %118 = vmatprep.subr.bf16.mxu0 0
  %119 = vmatpush1.bf16.msra.mxu0 0
  %120 = vmatprep.subr.bf16.mxu0 0
  %121 = vmatpush1.bf16.msra.mxu0 0
  %122 = vmatprep.subr.bf16.mxu0 0
  %123 = vmatpush1.bf16.msra.mxu0 0
  %124 = vmatprep.subr.bf16.mxu0 0
  %125 = vmatpush1.bf16.msra.mxu0 0
  %126 = vmatprep.subr.bf16.mxu0 0
  %127 = vmatpush1.bf16.msra.mxu0 0
  %128 = vmatprep.subr.bf16.mxu0 0
  %129 = vmatpush1.bf16.msra.mxu0 0
  %130 = vmatprep.subr.bf16.mxu0 0
  %131 = vmatpush1.bf16.msra.mxu0 0
  %132 = vmatprep.subr.bf16.mxu0 0
  %133 = vmatpush1.bf16.msra.mxu0 0
  %134 = vmatprep.mubr.bf16.mxu0 0
  %135 = vmatmul.mubr.bf16.gmra.mrb[0].mxu0 %v50
  %v136 = vpop.f32.mrb[0].mxu0
  %v137 = vadd.f32 0.0, %v136
  %v138 = vpop.f32.mrb[0].mxu0
  %v139 = vpop.f32.mrb[0].mxu0
  %v140 = vadd.f32 0.0, %v139
  %v141 = vpop.f32.mrb[0].mxu0
  %142 = vmatprep.mubr.bf16.mxu0 0
  %143 = vmatmul.mubr.bf16.gmra.mrb[0].mxu0 %v51
  %v144 = vpop.f32.mrb[0].mxu0
  %v145 = vadd.f32 0.0, %v144
  %v146 = vpop.f32.mrb[0].mxu0
  %v147 = vpop.f32.mrb[0].mxu0
  %v148 = vadd.f32 0.0, %v147
  %v149 = vpop.f32.mrb[0].mxu0
  %150 = vdwg.mxu0
  %vm151 = vcmask 523264
  %152 = vst.msk [vmem:[%s2] sm:$0xff] %vm151, %v137
  %153 = vst.msk [vmem:[%s2 + $0x8] sm:$0xff] %vm151, %v140
  %154 = vst.msk [vmem:[%s2 + $0x10] sm:$0xff] %vm151, %v145
  %155 = vst.msk [vmem:[%s2 + $0x18] sm:$0xff] %vm151, %v148
  %v156 = vld [vmem:[%s3] sm:$0x1]
  %v157 = vsel %vm151, %v137, 0.0
  %v158 = vsel %vm151, %v140, 0.0
  %v159 = vadd.f32 %v157, %v158
  %v160 = vsel %vm151, %v145, 0.0
  %v161 = vadd.f32 %v159, %v160
  %v162 = vsel %vm151, %v148, 0.0
  %v163 = vadd.f32 %v161, %v162
  %v164 = vrot.slane %v163, 4
  %v165 = vadd.f32 %v163, %v164
  %v166 = vrot.slane %v165, 2
  %v167 = vadd.f32 %v165, %v166
  %v168 = vrot.slane %v167, 1
  %v169 = vadd.f32 %v167, %v168
  %v170 = vadd.f32 %v156, %v169
  %vm171 = vcmask 516096
  %172 = vst.msk [vmem:[%s3] sm:$0x1] %vm171, %v170
  %v173 = vld [vmem:[%s4] sm:$0x1]
  %v174 = vmul.f32 %v137, %v137
  %v175 = vmul.f32 %v140, %v140
  %v176 = vmul.f32 %v145, %v145
  %v177 = vmul.f32 %v148, %v148
  %v178 = vsel %vm151, %v174, 0.0
  %v179 = vsel %vm151, %v175, 0.0
  %v180 = vadd.f32 %v178, %v179
  %v181 = vsel %vm151, %v176, 0.0
  %v182 = vadd.f32 %v180, %v181
  %v183 = vsel %vm151, %v177, 0.0
  %v184 = vadd.f32 %v182, %v183
  %v185 = vrot.slane %v184, 4
  %v186 = vadd.f32 %v184, %v185
  %v187 = vrot.slane %v186, 2
  %v188 = vadd.f32 %v186, %v187
  %v189 = vrot.slane %v188, 1
  %v190 = vadd.f32 %v188, %v189
  %v191 = vadd.f32 %v173, %v190
  %192 = vst.msk [vmem:[%s4] sm:$0x1] %vm171, %v191
  // Predicated region
  $region14: #{global_generator_forward.33} parent=0 // pred_check
    _
  $region15: #{global_generator_forward.33} parent=0 // pred_check_branch
    %194 = sbr.rel (0) target = $region17
  $region16: #{global_generator_forward.33} parent=0 // pred_region
    _
  $region17: #{global_generator_forward.33} parent=0 // pred_fallthru
    _
  // Predicated region
  $region18: #{global_generator_forward.33} parent=0 // pred_check
    _
  $region19: #{global_generator_forward.33} parent=0 // pred_check_branch
    %196 = sbr.rel (0) target = $region21
  $region20: #{global_generator_forward.33} parent=0 // pred_region
    _
  $region21: #{global_generator_forward.33} parent=0 // pred_fallthru
    _
  // Predicated region
  $region22: #{global_generator_forward.33} parent=0 // pred_check
    _
  $region23: #{global_generator_forward.33} parent=0 // pred_check_branch
    %198 = sbr.rel (0) target = $region25
  $region24: #{global_generator_forward.33} parent=0 // pred_region
    _
  $region25: #{global_generator_forward.33} parent=0 // pred_fallthru
    _
  // Predicated region
  $region26: #{global_generator_forward.33} parent=0 // pred_check
    _
  $region27: #{global_generator_forward.33} parent=0 // pred_check_branch
    %200 = sbr.rel (0) target = $region29
  $region28: #{global_generator_forward.33} parent=0 // pred_region
    _
  $region29: #{global_generator_forward.33} parent=0 // pred_fallthru
    _
  // Predicated region
  $region30: #{global_generator_forward.33} parent=0 // pred_check
    _
  $region31: #{global_generator_forward.33} parent=0 // pred_check_branch
    %202 = sbr.rel (0) target = $region33
  $region32: #{global_generator_forward.33} parent=0 // pred_region
    _
  $region33: #{global_generator_forward.33} parent=0 // pred_fallthru
    _
  // Predicated region
  $region34: #{global_generator_forward.33} parent=0 // pred_check
    _
  $region35: #{global_generator_forward.33} parent=0 // pred_check_branch
    %204 = sbr.rel (0) target = $region37
  $region36: #{global_generator_forward.33} parent=0 // pred_region
    _
  $region37: #{global_generator_forward.33} parent=0 // pred_fallthru
    _

// kernel: global_generator_forward.35
$region0: #{global_generator_forward.35}
  #allocation0 [shape = 'u32[]', space=smem, size = 0x4, offset = 0x4, fixed_abs, tag = 'smem constant byte address 0x4 - core index']
  #allocation1 [shape = 'u32[144,128]{1,0:T(1,128)}', space=vmem, size = 0x12000, scoped, tag = 'internal scratch']
  %s0 = inlined_call_operand.vmem [shape: bf16[128,64], index: 0, kind: input, shape index: {}]
  %s1 = inlined_call_operand.vmem [shape: bf16[64,32], index: 1, kind: input, shape index: {}]
  %s2 = inlined_call_operand.vmem [shape: f32[128,32], index: 2, kind: output, shape index: {0}]
  %s3 = inlined_call_operand.vmem [shape: f32[1,32], index: 3, kind: output, shape index: {1}]
  %s4 = inlined_call_operand.vmem [shape: f32[1,32], index: 4, kind: output, shape index: {2}]
  %5 = xla_tuple %s2, %s3, %s4
  %s6 = sld [smem:[#allocation0]]
  $region38: #{global_generator_forward.35} parent=0
    _
  %s8 = ssub.s32 1, %s6
  %s9 = scalar_select 0, %s8, %s6
  // Predicated region
  $region2: #{global_generator_forward.35} parent=0 // pred_check
    _
  $region3: #{global_generator_forward.35} parent=0 // pred_check_branch
    %11 = sbr.rel (0) target = $region5
  $region4: #{global_generator_forward.35} parent=0 // pred_region
    _
  $region5: #{global_generator_forward.35} parent=0 // pred_fallthru
    _
  // Predicated region
  $region6: #{global_generator_forward.35} parent=0 // pred_check
    _
  $region7: #{global_generator_forward.35} parent=0 // pred_check_branch
    %13 = sbr.rel (0) target = $region9
  $region8: #{global_generator_forward.35} parent=0 // pred_region
    _
  $region9: #{global_generator_forward.35} parent=0 // pred_fallthru
    _
  %p15 = scmp.eq.s32.totalorder 0, 0
  // Predicated region
  $region10: #{global_generator_forward.35} parent=0 // pred_check
    %p16 = pneg %p15
  $region11: #{global_generator_forward.35} parent=0 // pred_check_branch
    %18 = sbr.rel (%p16) target = $region13
  $region12: #{global_generator_forward.35} parent=0 // pred_region
    %vm19 = vcmask 253952
    %20 = vst.msk [vmem:[%s3] sm:$0x1] %vm19, 0.0
    %21 = vst.msk [vmem:[%s4] sm:$0x1] %vm19, 0.0
  $region13: #{global_generator_forward.35} parent=0 // pred_fallthru
    _
  %v22 = vld [vmem:[%s0] sm:$0xf]
  %v23 = vld [vmem:[%s0 + $0x4] sm:$0xf]
  %v24 = vld [vmem:[%s0 + $0x8] sm:$0xf]
  %v25 = vld [vmem:[%s0 + $0xc] sm:$0xf]
  %v26 = vld [vmem:[%s0 + $0x10] sm:$0xf]
  %v27 = vld [vmem:[%s0 + $0x14] sm:$0xf]
  %v28 = vld [vmem:[%s0 + $0x18] sm:$0xf]
  %v29 = vld [vmem:[%s0 + $0x1c] sm:$0xf]
  %v30 = vld [vmem:[%s0 + $0x20] sm:$0xf]
  %v31 = vld [vmem:[%s0 + $0x24] sm:$0xf]
  %v32 = vld [vmem:[%s0 + $0x28] sm:$0xf]
  %v33 = vld [vmem:[%s0 + $0x2c] sm:$0xf]
  %v34 = vld [vmem:[%s0 + $0x30] sm:$0xf]
  %v35 = vld [vmem:[%s0 + $0x34] sm:$0xf]
  %v36 = vld [vmem:[%s0 + $0x38] sm:$0xf]
  %v37 = vld [vmem:[%s0 + $0x3c] sm:$0xf]
  %v38 = vld [vmem:[%s1] sm:$0xf]
  %v39 = vld [vmem:[%s1 + $0x4] sm:$0xf]
  %v40 = vld [vmem:[%s1 + $0x8] sm:$0xf]
  %v41 = vld [vmem:[%s1 + $0xc] sm:$0xf]
  %v42 = vld [vmem:[%s1 + $0x10] sm:$0xf]
  %v43 = vld [vmem:[%s1 + $0x14] sm:$0xf]
  %v44 = vld [vmem:[%s1 + $0x18] sm:$0xf]
  %v45 = vld [vmem:[%s1 + $0x1c] sm:$0xf]
  %v62 = vunpack.c.l.b16 %v22
  %v63 = vunpack.c.l.b16 %v23
  %v64 = vunpack.c.l.b16 %v24
  %v65 = vunpack.c.l.b16 %v25
  %v66 = vunpack.c.l.b16 %v26
  %v67 = vunpack.c.l.b16 %v27
  %v68 = vunpack.c.l.b16 %v28
  %v69 = vunpack.c.l.b16 %v29
  %v70 = vunpack.c.l.b16 %v30
  %v71 = vunpack.c.l.b16 %v31
  %v72 = vunpack.c.l.b16 %v32
  %v73 = vunpack.c.l.b16 %v33
  %v74 = vunpack.c.l.b16 %v34
  %v75 = vunpack.c.l.b16 %v35
  %v76 = vunpack.c.l.b16 %v36
  %v77 = vunpack.c.l.b16 %v37
  %v78 = vpack.c.b16 %v63, %v62
  %v79 = vpack.c.b16 %v65, %v64
  %v80 = vpack.c.b16 %v67, %v66
  %v81 = vpack.c.b16 %v69, %v68
  %v82 = vpack.c.b16 %v71, %v70
  %v83 = vpack.c.b16 %v73, %v72
  %v84 = vpack.c.b16 %v75, %v74
  %v85 = vpack.c.b16 %v77, %v76
  %v94 = vunpack.c.l.b16 %v38
  %v95 = vunpack.c.l.b16 %v39
  %v96 = vunpack.c.l.b16 %v40
  %v97 = vunpack.c.l.b16 %v41
  %v98 = vunpack.c.l.b16 %v42
  %v99 = vunpack.c.l.b16 %v43
  %v100 = vunpack.c.l.b16 %v44
  %v101 = vunpack.c.l.b16 %v45
  %v102 = vpack.c.b16 %v95, %v94
  %v103 = vpack.c.b16 %v97, %v96
  %v104 = vpack.c.b16 %v99, %v98
  %v105 = vpack.c.b16 %v101, %v100
  %vm110 = vcmask 523264
  %v112 = vsel %vm110, %v78, 0
  %v115 = vsel %vm110, %v79, 0
  %v118 = vsel %vm110, %v80, 0
  %v121 = vsel %vm110, %v81, 0
  %v124 = vsel %vm110, %v82, 0
  %v127 = vsel %vm110, %v83, 0
  %v130 = vsel %vm110, %v84, 0
  %v133 = vsel %vm110, %v85, 0
  %135 = vmatprep.subr.bf16.mxu0 0
  %136 = vmatpush1.bf16.msra.mxu0 %v102
  %137 = vmatprep.subr.bf16.mxu0 0
  %138 = vmatpush1.bf16.msra.mxu0 %v103
  %139 = vmatprep.subr.bf16.mxu0 0
  %140 = vmatpush1.bf16.msra.mxu0 %v104
  %141 = vmatprep.subr.bf16.mxu0 0
  %142 = vmatpush1.bf16.msra.mxu0 %v105
  %143 = vmatprep.subr.bf16.mxu0 0
  %144 = vmatpush1.bf16.msra.mxu0 0
  %145 = vmatprep.subr.bf16.mxu0 0
  %146 = vmatpush1.bf16.msra.mxu0 0
  %147 = vmatprep.subr.bf16.mxu0 0
  %148 = vmatpush1.bf16.msra.mxu0 0
  %149 = vmatprep.subr.bf16.mxu0 0
  %150 = vmatpush1.bf16.msra.mxu0 0
  %151 = vmatprep.subr.bf16.mxu0 0
  %152 = vmatpush1.bf16.msra.mxu0 0
  %153 = vmatprep.subr.bf16.mxu0 0
  %154 = vmatpush1.bf16.msra.mxu0 0
  %155 = vmatprep.subr.bf16.mxu0 0
  %156 = vmatpush1.bf16.msra.mxu0 0
  %157 = vmatprep.subr.bf16.mxu0 0
  %158 = vmatpush1.bf16.msra.mxu0 0
  %159 = vmatprep.subr.bf16.mxu0 0
  %160 = vmatpush1.bf16.msra.mxu0 0
  %161 = vmatprep.subr.bf16.mxu0 0
  %162 = vmatpush1.bf16.msra.mxu0 0
  %163 = vmatprep.subr.bf16.mxu0 0
  %164 = vmatpush1.bf16.msra.mxu0 0
  %165 = vmatprep.subr.bf16.mxu0 0
  %166 = vmatpush1.bf16.msra.mxu0 0
  %167 = vmatprep.mubr.bf16.mxu0 0
  %168 = vmatmul.mubr.bf16.gmra.mrb[0].mxu0 %v112
  %v169 = vpop.f32.mrb[0].mxu0
  %v170 = vadd.f32 0.0, %v169
  %v171 = vpop.f32.mrb[0].mxu0
  %v172 = vpop.f32.mrb[0].mxu0
  %v173 = vadd.f32 0.0, %v172
  %v174 = vpop.f32.mrb[0].mxu0
  %175 = vmatprep.mubr.bf16.mxu0 0
  %176 = vmatmul.mubr.bf16.gmra.mrb[0].mxu0 %v115
  %v177 = vpop.f32.mrb[0].mxu0
  %v178 = vadd.f32 0.0, %v177
  %v179 = vpop.f32.mrb[0].mxu0
  %v180 = vpop.f32.mrb[0].mxu0
  %v181 = vadd.f32 0.0, %v180
  %v182 = vpop.f32.mrb[0].mxu0
  %183 = vmatprep.mubr.bf16.mxu0 0
  %184 = vmatmul.mubr.bf16.gmra.mrb[0].mxu0 %v118
  %v185 = vpop.f32.mrb[0].mxu0
  %v186 = vadd.f32 0.0, %v185
  %v187 = vpop.f32.mrb[0].mxu0
  %v188 = vpop.f32.mrb[0].mxu0
  %v189 = vadd.f32 0.0, %v188
  %v190 = vpop.f32.mrb[0].mxu0
  %191 = vmatprep.mubr.bf16.mxu0 0
  %192 = vmatmul.mubr.bf16.gmra.mrb[0].mxu0 %v121
  %v193 = vpop.f32.mrb[0].mxu0
  %v194 = vadd.f32 0.0, %v193
  %v195 = vpop.f32.mrb[0].mxu0
  %v196 = vpop.f32.mrb[0].mxu0
  %v197 = vadd.f32 0.0, %v196
  %v198 = vpop.f32.mrb[0].mxu0
  %199 = vmatprep.mubr.bf16.mxu0 0
  %200 = vmatmul.mubr.bf16.gmra.mrb[0].mxu0 %v124
  %v201 = vpop.f32.mrb[0].mxu0
  %v202 = vadd.f32 0.0, %v201
  %v203 = vpop.f32.mrb[0].mxu0
  %v204 = vpop.f32.mrb[0].mxu0
  %v205 = vadd.f32 0.0, %v204
  %v206 = vpop.f32.mrb[0].mxu0
  %207 = vmatprep.mubr.bf16.mxu0 0
  %208 = vmatmul.mubr.bf16.gmra.mrb[0].mxu0 %v127
  %v209 = vpop.f32.mrb[0].mxu0
  %v210 = vadd.f32 0.0, %v209
  %v211 = vpop.f32.mrb[0].mxu0
  %v212 = vpop.f32.mrb[0].mxu0
  %v213 = vadd.f32 0.0, %v212
  %v214 = vpop.f32.mrb[0].mxu0
  %215 = vmatprep.mubr.bf16.mxu0 0
  %216 = vmatmul.mubr.bf16.gmra.mrb[0].mxu0 %v130
  %v217 = vpop.f32.mrb[0].mxu0
  %v218 = vadd.f32 0.0, %v217
  %v219 = vpop.f32.mrb[0].mxu0
  %v220 = vpop.f32.mrb[0].mxu0
  %v221 = vadd.f32 0.0, %v220
  %v222 = vpop.f32.mrb[0].mxu0
  %223 = vmatprep.mubr.bf16.mxu0 0
  %224 = vmatmul.mubr.bf16.gmra.mrb[0].mxu0 %v133
  %v225 = vpop.f32.mrb[0].mxu0
  %v226 = vadd.f32 0.0, %v225
  %v227 = vpop.f32.mrb[0].mxu0
  %v228 = vpop.f32.mrb[0].mxu0
  %v229 = vadd.f32 0.0, %v228
  %v230 = vpop.f32.mrb[0].mxu0
  %231 = vdwg.mxu0
  %vm232 = vcmask 261120
  %233 = vst.msk [vmem:[%s2] sm:$0xff] %vm232, %v170
  %234 = vst.msk [vmem:[%s2 + $0x8] sm:$0xff] %vm232, %v173
  %235 = vst.msk [vmem:[%s2 + $0x10] sm:$0xff] %vm232, %v178
  %236 = vst.msk [vmem:[%s2 + $0x18] sm:$0xff] %vm232, %v181
  %237 = vst.msk [vmem:[%s2 + $0x20] sm:$0xff] %vm232, %v186
  %238 = vst.msk [vmem:[%s2 + $0x28] sm:$0xff] %vm232, %v189
  %239 = vst.msk [vmem:[%s2 + $0x30] sm:$0xff] %vm232, %v194
  %240 = vst.msk [vmem:[%s2 + $0x38] sm:$0xff] %vm232, %v197
  %241 = vst.msk [vmem:[%s2 + $0x40] sm:$0xff] %vm232, %v202
  %242 = vst.msk [vmem:[%s2 + $0x48] sm:$0xff] %vm232, %v205
  %243 = vst.msk [vmem:[%s2 + $0x50] sm:$0xff] %vm232, %v210
  %244 = vst.msk [vmem:[%s2 + $0x58] sm:$0xff] %vm232, %v213
  %245 = vst.msk [vmem:[%s2 + $0x60] sm:$0xff] %vm232, %v218
  %246 = vst.msk [vmem:[%s2 + $0x68] sm:$0xff] %vm232, %v221
  %247 = vst.msk [vmem:[%s2 + $0x70] sm:$0xff] %vm232, %v226
  %248 = vst.msk [vmem:[%s2 + $0x78] sm:$0xff] %vm232, %v229
  %v249 = vld [vmem:[%s3] sm:$0x1]
  %v250 = vsel %vm232, %v170, 0.0
  %v251 = vsel %vm232, %v173, 0.0
  %v252 = vadd.f32 %v250, %v251
  %v253 = vsel %vm232, %v178, 0.0
  %v254 = vadd.f32 %v252, %v253
  %v255 = vsel %vm232, %v181, 0.0
  %v256 = vadd.f32 %v254, %v255
  %v257 = vsel %vm232, %v186, 0.0
  %v258 = vadd.f32 %v256, %v257
  %v259 = vsel %vm232, %v189, 0.0
  %v260 = vadd.f32 %v258, %v259
  %v261 = vsel %vm232, %v194, 0.0
  %v262 = vadd.f32 %v260, %v261
  %v263 = vsel %vm232, %v197, 0.0
  %v264 = vadd.f32 %v262, %v263
  %v265 = vsel %vm232, %v202, 0.0
  %v266 = vadd.f32 %v264, %v265
  %v267 = vsel %vm232, %v205, 0.0
  %v268 = vadd.f32 %v266, %v267
  %v269 = vsel %vm232, %v210, 0.0
  %v270 = vadd.f32 %v268, %v269
  %v271 = vsel %vm232, %v213, 0.0
  %v272 = vadd.f32 %v270, %v271
  %v273 = vsel %vm232, %v218, 0.0
  %v274 = vadd.f32 %v272, %v273
  %v275 = vsel %vm232, %v221, 0.0
  %v276 = vadd.f32 %v274, %v275
  %v277 = vsel %vm232, %v226, 0.0
  %v278 = vadd.f32 %v276, %v277
  %v279 = vsel %vm232, %v229, 0.0
  %v280 = vadd.f32 %v278, %v279
  %v281 = vrot.slane %v280, 4
  %v282 = vadd.f32 %v280, %v281
  %v283 = vrot.slane %v282, 2
  %v284 = vadd.f32 %v282, %v283
  %v285 = vrot.slane %v284, 1
  %v286 = vadd.f32 %v284, %v285
  %v287 = vadd.f32 %v249, %v286
  %vm288 = vcmask 253952
  %289 = vst.msk [vmem:[%s3] sm:$0x1] %vm288, %v287
  %v290 = vld [vmem:[%s4] sm:$0x1]
  %v291 = vmul.f32 %v170, %v170
  %v292 = vmul.f32 %v173, %v173
  %v293 = vmul.f32 %v178, %v178
  %v294 = vmul.f32 %v181, %v181
  %v295 = vmul.f32 %v186, %v186
  %v296 = vmul.f32 %v189, %v189
  %v297 = vmul.f32 %v194, %v194
  %v298 = vmul.f32 %v197, %v197
  %v299 = vmul.f32 %v202, %v202
  %v300 = vmul.f32 %v205, %v205
  %v301 = vmul.f32 %v210, %v210
  %v302 = vmul.f32 %v213, %v213
  %v303 = vmul.f32 %v218, %v218
  %v304 = vmul.f32 %v221, %v221
  %v305 = vmul.f32 %v226, %v226
  %v306 = vmul.f32 %v229, %v229
  %v307 = vsel %vm232, %v291, 0.0
  %v308 = vsel %vm232, %v292, 0.0
  %v309 = vadd.f32 %v307, %v308
  %v310 = vsel %vm232, %v293, 0.0
  %v311 = vadd.f32 %v309, %v310
  %v312 = vsel %vm232, %v294, 0.0
  %v313 = vadd.f32 %v311, %v312
  %v314 = vsel %vm232, %v295, 0.0
  %v315 = vadd.f32 %v313, %v314
  %v316 = vsel %vm232, %v296, 0.0
  %v317 = vadd.f32 %v315, %v316
  %v318 = vsel %vm232, %v297, 0.0
  %v319 = vadd.f32 %v317, %v318
  %v320 = vsel %vm232, %v298, 0.0
  %v321 = vadd.f32 %v319, %v320
  %v322 = vsel %vm232, %v299, 0.0
  %v323 = vadd.f32 %v321, %v322
  %v324 = vsel %vm232, %v300, 0.0
  %v325 = vadd.f32 %v323, %v324
  %v326 = vsel %vm232, %v301, 0.0
  %v327 = vadd.f32 %v325, %v326
  %v328 = vsel %vm232, %v302, 0.0
  %v329 = vadd.f32 %v327, %v328
  %v330 = vsel %vm232, %v303, 0.0
  %v331 = vadd.f32 %v329, %v330
  %v332 = vsel %vm232, %v304, 0.0
  %v333 = vadd.f32 %v331, %v332
  %v334 = vsel %vm232, %v305, 0.0
  %v335 = vadd.f32 %v333, %v334
  %v336 = vsel %vm232, %v306, 0.0
  %v337 = vadd.f32 %v335, %v336
  %v338 = vrot.slane %v337, 4
  %v339 = vadd.f32 %v337, %v338
  %v340 = vrot.slane %v339, 2
  %v341 = vadd.f32 %v339, %v340
  %v342 = vrot.slane %v341, 1
  %v343 = vadd.f32 %v341, %v342
  %v344 = vadd.f32 %v290, %v343
  %345 = vst.msk [vmem:[%s4] sm:$0x1] %vm288, %v344
  // Predicated region
  $region14: #{global_generator_forward.35} parent=0 // pred_check
    _
  $region15: #{global_generator_forward.35} parent=0 // pred_check_branch
    %347 = sbr.rel (0) target = $region17
  $region16: #{global_generator_forward.35} parent=0 // pred_region
    _
  $region17: #{global_generator_forward.35} parent=0 // pred_fallthru
    _
  // Predicated region
  $region18: #{global_generator_forward.35} parent=0 // pred_check
    _
  $region19: #{global_generator_forward.35} parent=0 // pred_check_branch
    %349 = sbr.rel (0) target = $region21
  $region20: #{global_generator_forward.35} parent=0 // pred_region
    _
  $region21: #{global_generator_forward.35} parent=0 // pred_fallthru
    _
  // Predicated region
  $region22: #{global_generator_forward.35} parent=0 // pred_check
    _
  $region23: #{global_generator_forward.35} parent=0 // pred_check_branch
    %351 = sbr.rel (0) target = $region25
  $region24: #{global_generator_forward.35} parent=0 // pred_region
    _
  $region25: #{global_generator_forward.35} parent=0 // pred_fallthru
    _
  // Predicated region
  $region26: #{global_generator_forward.35} parent=0 // pred_check
    _
  $region27: #{global_generator_forward.35} parent=0 // pred_check_branch
    %353 = sbr.rel (0) target = $region29
  $region28: #{global_generator_forward.35} parent=0 // pred_region
    _
  $region29: #{global_generator_forward.35} parent=0 // pred_fallthru
    _
  // Predicated region
  $region30: #{global_generator_forward.35} parent=0 // pred_check
    _
  $region31: #{global_generator_forward.35} parent=0 // pred_check_branch
    %355 = sbr.rel (0) target = $region33
  $region32: #{global_generator_forward.35} parent=0 // pred_region
    _
  $region33: #{global_generator_forward.35} parent=0 // pred_fallthru
    _
  // Predicated region
  $region34: #{global_generator_forward.35} parent=0 // pred_check
    _
  $region35: #{global_generator_forward.35} parent=0 // pred_check_branch
    %357 = sbr.rel (0) target = $region37
  $region36: #{global_generator_forward.35} parent=0 // pred_region
    _
  $region37: #{global_generator_forward.35} parent=0 // pred_fallthru
    _

// kernel: global_generator_forward.37
$region0: #{global_generator_forward.37}
  #allocation0 [shape = 'u32[]', space=smem, size = 0x4, offset = 0x4, fixed_abs, tag = 'smem constant byte address 0x4 - core index']
  #allocation1 [shape = 'u32[144,128]{1,0:T(1,128)}', space=vmem, size = 0x12000, scoped, tag = 'internal scratch']
  %s0 = inlined_call_operand.vmem [shape: bf16[512,392], index: 0, kind: input, shape index: {}]
  %s1 = inlined_call_operand.vmem [shape: bf16[392,3], index: 1, kind: input, shape index: {}]
  %s2 = inlined_call_operand.vmem [shape: f32[1,3], index: 2, kind: input, shape index: {}]
  %s3 = inlined_call_operand.vmem [shape: f32[512,3], index: 3, kind: output, shape index: {}]
  %s4 = sld [smem:[#allocation0]]
  $region22: #{global_generator_forward.37} parent=0
    _
  %s6 = ssub.s32 1, %s4
  %s7 = scalar_select 0, %s6, %s4
  // Predicated region
  $region2: #{global_generator_forward.37} parent=0 // pred_check
    _
  $region3: #{global_generator_forward.37} parent=0 // pred_check_branch
    %9 = sbr.rel (0) target = $region5
  $region4: #{global_generator_forward.37} parent=0 // pred_region
    _
  $region5: #{global_generator_forward.37} parent=0 // pred_fallthru
    _
  // Predicated region
  $region6: #{global_generator_forward.37} parent=0 // pred_check
    _
  $region7: #{global_generator_forward.37} parent=0 // pred_check_branch
    %11 = sbr.rel (0) target = $region9
  $region8: #{global_generator_forward.37} parent=0 // pred_region
    _
  $region9: #{global_generator_forward.37} parent=0 // pred_fallthru
    _
  // Predicated region
  $region10: #{global_generator_forward.37} parent=0 // pred_check
    _
  $region11: #{global_generator_forward.37} parent=0 // pred_check_branch
    %13 = sbr.rel (0) target = $region13
  $region12: #{global_generator_forward.37} parent=0 // pred_region
    _
  $region13: #{global_generator_forward.37} parent=0 // pred_fallthru
    _
  %v15 = vld [vmem:[%s0] sm:$0xff]
  %v16 = vld [vmem:[%s0 + $0x8] sm:$0xff]
  %v17 = vld [vmem:[%s0 + $0x10] sm:$0xff]
  %v18 = vld [vmem:[%s0 + $0x18] sm:$0xff]
  %v19 = vld [vmem:[%s0 + $0x20] sm:$0xff]
  %v20 = vld [vmem:[%s0 + $0x28] sm:$0xff]
  %v21 = vld [vmem:[%s0 + $0x30] sm:$0xff]
  %v22 = vld [vmem:[%s0 + $0x38] sm:$0xff]
  %v23 = vld [vmem:[%s0 + $0x40] sm:$0xff]
  %v24 = vld [vmem:[%s0 + $0x48] sm:$0xff]
  %v25 = vld [vmem:[%s0 + $0x50] sm:$0xff]
  %v26 = vld [vmem:[%s0 + $0x58] sm:$0xff]
  %v27 = vld [vmem:[%s0 + $0x60] sm:$0xff]
  %v28 = vld [vmem:[%s0 + $0x68] sm:$0xff]
  %v29 = vld [vmem:[%s0 + $0x70] sm:$0xff]
  %v30 = vld [vmem:[%s0 + $0x78] sm:$0xff]
  %v31 = vld [vmem:[%s0 + $0x80] sm:$0xff]
  %v32 = vld [vmem:[%s0 + $0x88] sm:$0xff]
  %v33 = vld [vmem:[%s0 + $0x90] sm:$0xff]
  %v34 = vld [vmem:[%s0 + $0x98] sm:$0xff]
  %v35 = vld [vmem:[%s0 + $0xa0] sm:$0xff]
  %v36 = vld [vmem:[%s0 + $0xa8] sm:$0xff]
  %v37 = vld [vmem:[%s0 + $0xb0] sm:$0xff]
  %v38 = vld [vmem:[%s0 + $0xb8] sm:$0xff]
  %v39 = vld [vmem:[%s0 + $0xc0] sm:$0xff]
  %v40 = vld [vmem:[%s0 + $0xc8] sm:$0xff]
  %v41 = vld [vmem:[%s0 + $0xd0] sm:$0xff]
  %v42 = vld [vmem:[%s0 + $0xd8] sm:$0xff]
  %v43 = vld [vmem:[%s0 + $0xe0] sm:$0xff]
  %v44 = vld [vmem:[%s0 + $0xe8] sm:$0xff]
  %v45 = vld [vmem:[%s0 + $0xf0] sm:$0xff]
  %v46 = vld [vmem:[%s0 + $0xf8] sm:$0xff]
  %v47 = vld [vmem:[%s0 + $0x100] sm:$0xff]
  %v48 = vld [vmem:[%s0 + $0x108] sm:$0xff]
  %v49 = vld [vmem:[%s0 + $0x110] sm:$0xff]
  %v50 = vld [vmem:[%s0 + $0x118] sm:$0xff]
  %v51 = vld [vmem:[%s0 + $0x120] sm:$0xff]
  %v52 = vld [vmem:[%s0 + $0x128] sm:$0xff]
  %v53 = vld [vmem:[%s0 + $0x130] sm:$0xff]
  %v54 = vld [vmem:[%s0 + $0x138] sm:$0xff]
  %v55 = vld [vmem:[%s0 + $0x140] sm:$0xff]
  %v56 = vld [vmem:[%s0 + $0x148] sm:$0xff]
  %v57 = vld [vmem:[%s0 + $0x150] sm:$0xff]
  %v58 = vld [vmem:[%s0 + $0x158] sm:$0xff]
  %v59 = vld [vmem:[%s0 + $0x160] sm:$0xff]
  %v60 = vld [vmem:[%s0 + $0x168] sm:$0xff]
  %v61 = vld [vmem:[%s0 + $0x170] sm:$0xff]
  %v62 = vld [vmem:[%s0 + $0x178] sm:$0xff]
  %v63 = vld [vmem:[%s0 + $0x180] sm:$0xff]
  %v64 = vld [vmem:[%s0 + $0x188] sm:$0xff]
  %v65 = vld [vmem:[%s0 + $0x190] sm:$0xff]
  %v66 = vld [vmem:[%s0 + $0x198] sm:$0xff]
  %v67 = vld [vmem:[%s0 + $0x1a0] sm:$0xff]
  %v68 = vld [vmem:[%s0 + $0x1a8] sm:$0xff]
  %v69 = vld [vmem:[%s0 + $0x1b0] sm:$0xff]
  %v70 = vld [vmem:[%s0 + $0x1b8] sm:$0xff]
  %v71 = vld [vmem:[%s0 + $0x1c0] sm:$0xff]
  %v72 = vld [vmem:[%s0 + $0x1c8] sm:$0xff]
  %v73 = vld [vmem:[%s0 + $0x1d0] sm:$0xff]
  %v74 = vld [vmem:[%s0 + $0x1d8] sm:$0xff]
  %v75 = vld [vmem:[%s0 + $0x1e0] sm:$0xff]
  %v76 = vld [vmem:[%s0 + $0x1e8] sm:$0xff]
  %v77 = vld [vmem:[%s0 + $0x1f0] sm:$0xff]
  %v78 = vld [vmem:[%s0 + $0x1f8] sm:$0xff]
  %v79 = vld [vmem:[%s0 + $0x200] sm:$0xff]
  %v80 = vld [vmem:[%s0 + $0x208] sm:$0xff]
  %v81 = vld [vmem:[%s0 + $0x210] sm:$0xff]
  %v82 = vld [vmem:[%s0 + $0x218] sm:$0xff]
  %v83 = vld [vmem:[%s0 + $0x220] sm:$0xff]
  %v84 = vld [vmem:[%s0 + $0x228] sm:$0xff]
  %v85 = vld [vmem:[%s0 + $0x230] sm:$0xff]
  %v86 = vld [vmem:[%s0 + $0x238] sm:$0xff]
  %v87 = vld [vmem:[%s0 + $0x240] sm:$0xff]
  %v88 = vld [vmem:[%s0 + $0x248] sm:$0xff]
  %v89 = vld [vmem:[%s0 + $0x250] sm:$0xff]
  %v90 = vld [vmem:[%s0 + $0x258] sm:$0xff]
  %v91 = vld [vmem:[%s0 + $0x260] sm:$0xff]
  %v92 = vld [vmem:[%s0 + $0x268] sm:$0xff]
  %v93 = vld [vmem:[%s0 + $0x270] sm:$0xff]
  %v94 = vld [vmem:[%s0 + $0x278] sm:$0xff]
  %v95 = vld [vmem:[%s0 + $0x280] sm:$0xff]
  %v96 = vld [vmem:[%s0 + $0x288] sm:$0xff]
  %v97 = vld [vmem:[%s0 + $0x290] sm:$0xff]
  %v98 = vld [vmem:[%s0 + $0x298] sm:$0xff]
  %v99 = vld [vmem:[%s0 + $0x2a0] sm:$0xff]
  %v100 = vld [vmem:[%s0 + $0x2a8] sm:$0xff]
  %v101 = vld [vmem:[%s0 + $0x2b0] sm:$0xff]
  %v102 = vld [vmem:[%s0 + $0x2b8] sm:$0xff]
  %v103 = vld [vmem:[%s0 + $0x2c0] sm:$0xff]
  %v104 = vld [vmem:[%s0 + $0x2c8] sm:$0xff]
  %v105 = vld [vmem:[%s0 + $0x2d0] sm:$0xff]
  %v106 = vld [vmem:[%s0 + $0x2d8] sm:$0xff]
  %v107 = vld [vmem:[%s0 + $0x2e0] sm:$0xff]
  %v108 = vld [vmem:[%s0 + $0x2e8] sm:$0xff]
  %v109 = vld [vmem:[%s0 + $0x2f0] sm:$0xff]
  %v110 = vld [vmem:[%s0 + $0x2f8] sm:$0xff]
  %v111 = vld [vmem:[%s0 + $0x300] sm:$0xff]
  %v112 = vld [vmem:[%s0 + $0x308] sm:$0xff]
  %v113 = vld [vmem:[%s0 + $0x310] sm:$0xff]
  %v114 = vld [vmem:[%s0 + $0x318] sm:$0xff]
  %v115 = vld [vmem:[%s0 + $0x320] sm:$0xff]
  %v116 = vld [vmem:[%s0 + $0x328] sm:$0xff]
  %v117 = vld [vmem:[%s0 + $0x330] sm:$0xff]
  %v118 = vld [vmem:[%s0 + $0x338] sm:$0xff]
  %v119 = vld [vmem:[%s0 + $0x340] sm:$0xff]
  %v120 = vld [vmem:[%s0 + $0x348] sm:$0xff]
  %v121 = vld [vmem:[%s0 + $0x350] sm:$0xff]
  %v122 = vld [vmem:[%s0 + $0x358] sm:$0xff]
  %v123 = vld [vmem:[%s0 + $0x360] sm:$0xff]
  %v124 = vld [vmem:[%s0 + $0x368] sm:$0xff]
  %v125 = vld [vmem:[%s0 + $0x370] sm:$0xff]
  %v126 = vld [vmem:[%s0 + $0x378] sm:$0xff]
  %v127 = vld [vmem:[%s0 + $0x380] sm:$0xff]
  %v128 = vld [vmem:[%s0 + $0x388] sm:$0xff]
  %v129 = vld [vmem:[%s0 + $0x390] sm:$0xff]
  %v130 = vld [vmem:[%s0 + $0x398] sm:$0xff]
  %v131 = vld [vmem:[%s0 + $0x3a0] sm:$0xff]
  %v132 = vld [vmem:[%s0 + $0x3a8] sm:$0xff]
  %v133 = vld [vmem:[%s0 + $0x3b0] sm:$0xff]
  %v134 = vld [vmem:[%s0 + $0x3b8] sm:$0xff]
  %v135 = vld [vmem:[%s0 + $0x3c0] sm:$0xff]
  %v136 = vld [vmem:[%s0 + $0x3c8] sm:$0xff]
  %v137 = vld [vmem:[%s0 + $0x3d0] sm:$0xff]
  %v138 = vld [vmem:[%s0 + $0x3d8] sm:$0xff]
  %v139 = vld [vmem:[%s0 + $0x3e0] sm:$0xff]
  %v140 = vld [vmem:[%s0 + $0x3e8] sm:$0xff]
  %v141 = vld [vmem:[%s0 + $0x3f0] sm:$0xff]
  %v142 = vld [vmem:[%s0 + $0x3f8] sm:$0xff]
  %v143 = vld [vmem:[%s1] sm:$0xf]
  %v144 = vld [vmem:[%s1 + $0x4] sm:$0xf]
  %v145 = vld [vmem:[%s1 + $0x8] sm:$0xf]
  %v146 = vld [vmem:[%s1 + $0xc] sm:$0xf]
  %v147 = vld [vmem:[%s1 + $0x10] sm:$0xf]
  %v148 = vld [vmem:[%s1 + $0x14] sm:$0xf]
  %v149 = vld [vmem:[%s1 + $0x18] sm:$0xf]
  %v150 = vld [vmem:[%s1 + $0x1c] sm:$0xf]
  %v151 = vld [vmem:[%s1 + $0x20] sm:$0xf]
  %v152 = vld [vmem:[%s1 + $0x24] sm:$0xf]
  %v153 = vld [vmem:[%s1 + $0x28] sm:$0xf]
  %v154 = vld [vmem:[%s1 + $0x2c] sm:$0xf]
  %v155 = vld [vmem:[%s1 + $0x30] sm:$0xf]
  %v156 = vld [vmem:[%s1 + $0x34] sm:$0xf]
  %v157 = vld [vmem:[%s1 + $0x38] sm:$0xf]
  %v158 = vld [vmem:[%s1 + $0x3c] sm:$0xf]
  %v159 = vld [vmem:[%s1 + $0x40] sm:$0xf]
  %v160 = vld [vmem:[%s1 + $0x44] sm:$0xf]
  %v161 = vld [vmem:[%s1 + $0x48] sm:$0xf]
  %v162 = vld [vmem:[%s1 + $0x4c] sm:$0xf]
  %v163 = vld [vmem:[%s1 + $0x50] sm:$0xf]
  %v164 = vld [vmem:[%s1 + $0x54] sm:$0xf]
  %v165 = vld [vmem:[%s1 + $0x58] sm:$0xf]
  %v166 = vld [vmem:[%s1 + $0x5c] sm:$0xf]
  %v167 = vld [vmem:[%s1 + $0x60] sm:$0xf]
  %v168 = vld [vmem:[%s1 + $0x64] sm:$0xf]
  %v169 = vld [vmem:[%s1 + $0x68] sm:$0xf]
  %v170 = vld [vmem:[%s1 + $0x6c] sm:$0xf]
  %v171 = vld [vmem:[%s1 + $0x70] sm:$0xf]
  %v172 = vld [vmem:[%s1 + $0x74] sm:$0xf]
  %v173 = vld [vmem:[%s1 + $0x78] sm:$0xf]
  %v174 = vld [vmem:[%s1 + $0x7c] sm:$0xf]
  %v175 = vld [vmem:[%s1 + $0x80] sm:$0xf]
  %v176 = vld [vmem:[%s1 + $0x84] sm:$0xf]
  %v177 = vld [vmem:[%s1 + $0x88] sm:$0xf]
  %v178 = vld [vmem:[%s1 + $0x8c] sm:$0xf]
  %v179 = vld [vmem:[%s1 + $0x90] sm:$0xf]
  %v180 = vld [vmem:[%s1 + $0x94] sm:$0xf]
  %v181 = vld [vmem:[%s1 + $0x98] sm:$0xf]
  %v182 = vld [vmem:[%s1 + $0x9c] sm:$0xf]
  %v183 = vld [vmem:[%s1 + $0xa0] sm:$0xf]
  %v184 = vld [vmem:[%s1 + $0xa4] sm:$0xf]
  %v185 = vld [vmem:[%s1 + $0xa8] sm:$0xf]
  %v186 = vld [vmem:[%s1 + $0xac] sm:$0xf]
  %v187 = vld [vmem:[%s1 + $0xb0] sm:$0xf]
  %v188 = vld [vmem:[%s1 + $0xb4] sm:$0xf]
  %v189 = vld [vmem:[%s1 + $0xb8] sm:$0xf]
  %v190 = vld [vmem:[%s1 + $0xbc] sm:$0xf]
  %v191 = vld [vmem:[%s1 + $0xc0] sm:$0xf]
  %v192 = vld [vmem:[%s2] sm:$0x1]
  %v194 = vlaneseq
  %v195 = vshrl.u32 %v194, 7
  %v196 = vsub.s32 0, %v195
  %v197 = vrot.slane %v192, %v196
  %v327 = vunpack.c.l.b16 %v15
  %v328 = vunpack.c.h.b16 %v15
  %v329 = vunpack.c.l.b16 %v16
  %v330 = vunpack.c.h.b16 %v16
  %v331 = vunpack.c.l.b16 %v17
  %v332 = vunpack.c.h.b16 %v17
  %v333 = vunpack.c.l.b16 %v18
  %v334 = vunpack.c.h.b16 %v18
  %v335 = vunpack.c.l.b16 %v19
  %v336 = vunpack.c.h.b16 %v19
  %v337 = vunpack.c.l.b16 %v20
  %v338 = vunpack.c.h.b16 %v20
  %v339 = vunpack.c.l.b16 %v21
  %v340 = vunpack.c.h.b16 %v21
  %v341 = vunpack.c.l.b16 %v22
  %v342 = vunpack.c.h.b16 %v22
  %v343 = vunpack.c.l.b16 %v23
  %v344 = vunpack.c.h.b16 %v23
  %v345 = vunpack.c.l.b16 %v24
  %v346 = vunpack.c.h.b16 %v24
  %v347 = vunpack.c.l.b16 %v25
  %v348 = vunpack.c.h.b16 %v25
  %v349 = vunpack.c.l.b16 %v26
  %v350 = vunpack.c.h.b16 %v26
  %v351 = vunpack.c.l.b16 %v27
  %v352 = vunpack.c.h.b16 %v27
  %v353 = vunpack.c.l.b16 %v28
  %v354 = vunpack.c.h.b16 %v28
  %v355 = vunpack.c.l.b16 %v29
  %v356 = vunpack.c.h.b16 %v29
  %v357 = vunpack.c.l.b16 %v30
  %v358 = vunpack.c.h.b16 %v30
  %v359 = vunpack.c.l.b16 %v31
  %v360 = vunpack.c.h.b16 %v31
  %v361 = vunpack.c.l.b16 %v32
  %v362 = vunpack.c.h.b16 %v32
  %v363 = vunpack.c.l.b16 %v33
  %v364 = vunpack.c.h.b16 %v33
  %v365 = vunpack.c.l.b16 %v34
  %v366 = vunpack.c.h.b16 %v34
  %v367 = vunpack.c.l.b16 %v35
  %v368 = vunpack.c.h.b16 %v35
  %v369 = vunpack.c.l.b16 %v36
  %v370 = vunpack.c.h.b16 %v36
  %v371 = vunpack.c.l.b16 %v37
  %v372 = vunpack.c.h.b16 %v37
  %v373 = vunpack.c.l.b16 %v38
  %v374 = vunpack.c.h.b16 %v38
  %v375 = vunpack.c.l.b16 %v39
  %v376 = vunpack.c.h.b16 %v39
  %v377 = vunpack.c.l.b16 %v40
  %v378 = vunpack.c.h.b16 %v40
  %v379 = vunpack.c.l.b16 %v41
  %v380 = vunpack.c.h.b16 %v41
  %v381 = vunpack.c.l.b16 %v42
  %v382 = vunpack.c.h.b16 %v42
  %v383 = vunpack.c.l.b16 %v43
  %v384 = vunpack.c.h.b16 %v43
  %v385 = vunpack.c.l.b16 %v44
  %v386 = vunpack.c.h.b16 %v44
  %v387 = vunpack.c.l.b16 %v45
  %v388 = vunpack.c.h.b16 %v45
  %v389 = vunpack.c.l.b16 %v46
  %v390 = vunpack.c.h.b16 %v46
  %v391 = vunpack.c.l.b16 %v47
  %v392 = vunpack.c.h.b16 %v47
  %v393 = vunpack.c.l.b16 %v48
  %v394 = vunpack.c.h.b16 %v48
  %v395 = vunpack.c.l.b16 %v49
  %v396 = vunpack.c.h.b16 %v49
  %v397 = vunpack.c.l.b16 %v50
  %v398 = vunpack.c.h.b16 %v50
  %v399 = vunpack.c.l.b16 %v51
  %v400 = vunpack.c.h.b16 %v51
  %v401 = vunpack.c.l.b16 %v52
  %v402 = vunpack.c.h.b16 %v52
  %v403 = vunpack.c.l.b16 %v53
  %v404 = vunpack.c.h.b16 %v53
  %v405 = vunpack.c.l.b16 %v54
  %v406 = vunpack.c.h.b16 %v54
  %v407 = vunpack.c.l.b16 %v55
  %v408 = vunpack.c.h.b16 %v55
  %v409 = vunpack.c.l.b16 %v56
  %v410 = vunpack.c.h.b16 %v56
  %v411 = vunpack.c.l.b16 %v57
  %v412 = vunpack.c.h.b16 %v57
  %v413 = vunpack.c.l.b16 %v58
  %v414 = vunpack.c.h.b16 %v58
  %v415 = vunpack.c.l.b16 %v59
  %v416 = vunpack.c.h.b16 %v59
  %v417 = vunpack.c.l.b16 %v60
  %v418 = vunpack.c.h.b16 %v60
  %v419 = vunpack.c.l.b16 %v61
  %v420 = vunpack.c.h.b16 %v61
  %v421 = vunpack.c.l.b16 %v62
  %v422 = vunpack.c.h.b16 %v62
  %v423 = vunpack.c.l.b16 %v63
  %v424 = vunpack.c.h.b16 %v63
  %v425 = vunpack.c.l.b16 %v64
  %v426 = vunpack.c.h.b16 %v64
  %v427 = vunpack.c.l.b16 %v65
  %v428 = vunpack.c.h.b16 %v65
  %v429 = vunpack.c.l.b16 %v66
  %v430 = vunpack.c.h.b16 %v66
  %v431 = vunpack.c.l.b16 %v67
  %v432 = vunpack.c.h.b16 %v67
  %v433 = vunpack.c.l.b16 %v68
  %v434 = vunpack.c.h.b16 %v68
  %v435 = vunpack.c.l.b16 %v69
  %v436 = vunpack.c.h.b16 %v69
  %v437 = vunpack.c.l.b16 %v70
  %v438 = vunpack.c.h.b16 %v70
  %v439 = vunpack.c.l.b16 %v71
  %v440 = vunpack.c.h.b16 %v71
  %v441 = vunpack.c.l.b16 %v72
  %v442 = vunpack.c.h.b16 %v72
  %v443 = vunpack.c.l.b16 %v73
  %v444 = vunpack.c.h.b16 %v73
  %v445 = vunpack.c.l.b16 %v74
  %v446 = vunpack.c.h.b16 %v74
  %v447 = vunpack.c.l.b16 %v75
  %v448 = vunpack.c.h.b16 %v75
  %v449 = vunpack.c.l.b16 %v76
  %v450 = vunpack.c.h.b16 %v76
  %v451 = vunpack.c.l.b16 %v77
  %v452 = vunpack.c.h.b16 %v77
  %v453 = vunpack.c.l.b16 %v78
  %v454 = vunpack.c.h.b16 %v78
  %v455 = vunpack.c.l.b16 %v79
  %v456 = vunpack.c.h.b16 %v79
  %v457 = vunpack.c.l.b16 %v80
  %v458 = vunpack.c.h.b16 %v80
  %v459 = vunpack.c.l.b16 %v81
  %v460 = vunpack.c.h.b16 %v81
  %v461 = vunpack.c.l.b16 %v82
  %v462 = vunpack.c.h.b16 %v82
  %v463 = vunpack.c.l.b16 %v83
  %v464 = vunpack.c.h.b16 %v83
  %v465 = vunpack.c.l.b16 %v84
  %v466 = vunpack.c.h.b16 %v84
  %v467 = vunpack.c.l.b16 %v85
  %v468 = vunpack.c.h.b16 %v85
  %v469 = vunpack.c.l.b16 %v86
  %v470 = vunpack.c.h.b16 %v86
  %v471 = vunpack.c.l.b16 %v87
  %v472 = vunpack.c.h.b16 %v87
  %v473 = vunpack.c.l.b16 %v88
  %v474 = vunpack.c.h.b16 %v88
  %v475 = vunpack.c.l.b16 %v89
  %v476 = vunpack.c.h.b16 %v89
  %v477 = vunpack.c.l.b16 %v90
  %v478 = vunpack.c.h.b16 %v90
  %v479 = vunpack.c.l.b16 %v91
  %v480 = vunpack.c.h.b16 %v91
  %v481 = vunpack.c.l.b16 %v92
  %v482 = vunpack.c.h.b16 %v92
  %v483 = vunpack.c.l.b16 %v93
  %v484 = vunpack.c.h.b16 %v93
  %v485 = vunpack.c.l.b16 %v94
  %v486 = vunpack.c.h.b16 %v94
  %v487 = vunpack.c.l.b16 %v95
  %v488 = vunpack.c.h.b16 %v95
  %v489 = vunpack.c.l.b16 %v96
  %v490 = vunpack.c.h.b16 %v96
  %v491 = vunpack.c.l.b16 %v97
  %v492 = vunpack.c.h.b16 %v97
  %v493 = vunpack.c.l.b16 %v98
  %v494 = vunpack.c.h.b16 %v98
  %v495 = vunpack.c.l.b16 %v99
  %v496 = vunpack.c.h.b16 %v99
  %v497 = vunpack.c.l.b16 %v100
  %v498 = vunpack.c.h.b16 %v100
  %v499 = vunpack.c.l.b16 %v101
  %v500 = vunpack.c.h.b16 %v101
  %v501 = vunpack.c.l.b16 %v102
  %v502 = vunpack.c.h.b16 %v102
  %v503 = vunpack.c.l.b16 %v103
  %v504 = vunpack.c.h.b16 %v103
  %v505 = vunpack.c.l.b16 %v104
  %v506 = vunpack.c.h.b16 %v104
  %v507 = vunpack.c.l.b16 %v105
  %v508 = vunpack.c.h.b16 %v105
  %v509 = vunpack.c.l.b16 %v106
  %v510 = vunpack.c.h.b16 %v106
  %v511 = vunpack.c.l.b16 %v107
  %v512 = vunpack.c.h.b16 %v107
  %v513 = vunpack.c.l.b16 %v108
  %v514 = vunpack.c.h.b16 %v108
  %v515 = vunpack.c.l.b16 %v109
  %v516 = vunpack.c.h.b16 %v109
  %v517 = vunpack.c.l.b16 %v110
  %v518 = vunpack.c.h.b16 %v110
  %v519 = vunpack.c.l.b16 %v111
  %v520 = vunpack.c.h.b16 %v111
  %v521 = vunpack.c.l.b16 %v112
  %v522 = vunpack.c.h.b16 %v112
  %v523 = vunpack.c.l.b16 %v113
  %v524 = vunpack.c.h.b16 %v113
  %v525 = vunpack.c.l.b16 %v114
  %v526 = vunpack.c.h.b16 %v114
  %v527 = vunpack.c.l.b16 %v115
  %v528 = vunpack.c.h.b16 %v115
  %v529 = vunpack.c.l.b16 %v116
  %v530 = vunpack.c.h.b16 %v116
  %v531 = vunpack.c.l.b16 %v117
  %v532 = vunpack.c.h.b16 %v117
  %v533 = vunpack.c.l.b16 %v118
  %v534 = vunpack.c.h.b16 %v118
  %v535 = vunpack.c.l.b16 %v119
  %v536 = vunpack.c.h.b16 %v119
  %v537 = vunpack.c.l.b16 %v120
  %v538 = vunpack.c.h.b16 %v120
  %v539 = vunpack.c.l.b16 %v121
  %v540 = vunpack.c.h.b16 %v121
  %v541 = vunpack.c.l.b16 %v122
  %v542 = vunpack.c.h.b16 %v122
  %v543 = vunpack.c.l.b16 %v123
  %v544 = vunpack.c.h.b16 %v123
  %v545 = vunpack.c.l.b16 %v124
  %v546 = vunpack.c.h.b16 %v124
  %v547 = vunpack.c.l.b16 %v125
  %v548 = vunpack.c.h.b16 %v125
  %v549 = vunpack.c.l.b16 %v126
  %v550 = vunpack.c.h.b16 %v126
  %v551 = vunpack.c.l.b16 %v127
  %v552 = vunpack.c.h.b16 %v127
  %v553 = vunpack.c.l.b16 %v128
  %v554 = vunpack.c.h.b16 %v128
  %v555 = vunpack.c.l.b16 %v129
  %v556 = vunpack.c.h.b16 %v129
  %v557 = vunpack.c.l.b16 %v130
  %v558 = vunpack.c.h.b16 %v130
  %v559 = vunpack.c.l.b16 %v131
  %v560 = vunpack.c.h.b16 %v131
  %v561 = vunpack.c.l.b16 %v132
  %v562 = vunpack.c.h.b16 %v132
  %v563 = vunpack.c.l.b16 %v133
  %v564 = vunpack.c.h.b16 %v133
  %v565 = vunpack.c.l.b16 %v134
  %v566 = vunpack.c.h.b16 %v134
  %v567 = vunpack.c.l.b16 %v135
  %v568 = vunpack.c.h.b16 %v135
  %v569 = vunpack.c.l.b16 %v136
  %v570 = vunpack.c.h.b16 %v136
  %v571 = vunpack.c.l.b16 %v137
  %v572 = vunpack.c.h.b16 %v137
  %v573 = vunpack.c.l.b16 %v138
  %v574 = vunpack.c.h.b16 %v138
  %v575 = vunpack.c.l.b16 %v139
  %v576 = vunpack.c.h.b16 %v139
  %v577 = vunpack.c.l.b16 %v140
  %v578 = vunpack.c.h.b16 %v140
  %v579 = vunpack.c.l.b16 %v141
  %v580 = vunpack.c.h.b16 %v141
  %v581 = vunpack.c.l.b16 %v142
  %v582 = vunpack.c.h.b16 %v142
  %v583 = vpack.c.b16 %v331, %v327
  %v584 = vpack.c.b16 %v332, %v328
  %v585 = vpack.c.b16 %v333, %v329
  %v586 = vpack.c.b16 %v334, %v330
  %v587 = vpack.c.b16 %v339, %v335
  %v588 = vpack.c.b16 %v340, %v336
  %v589 = vpack.c.b16 %v341, %v337
  %v590 = vpack.c.b16 %v342, %v338
  %v591 = vpack.c.b16 %v347, %v343
  %v592 = vpack.c.b16 %v348, %v344
  %v593 = vpack.c.b16 %v349, %v345
  %v594 = vpack.c.b16 %v350, %v346
  %v595 = vpack.c.b16 %v355, %v351
  %v596 = vpack.c.b16 %v356, %v352
  %v597 = vpack.c.b16 %v357, %v353
  %v598 = vpack.c.b16 %v358, %v354
  %v599 = vpack.c.b16 %v363, %v359
  %v600 = vpack.c.b16 %v364, %v360
  %v601 = vpack.c.b16 %v365, %v361
  %v602 = vpack.c.b16 %v366, %v362
  %v603 = vpack.c.b16 %v371, %v367
  %v604 = vpack.c.b16 %v372, %v368
  %v605 = vpack.c.b16 %v373, %v369
  %v606 = vpack.c.b16 %v374, %v370
  %v607 = vpack.c.b16 %v379, %v375
  %v608 = vpack.c.b16 %v380, %v376
  %v609 = vpack.c.b16 %v381, %v377
  %v610 = vpack.c.b16 %v382, %v378
  %v611 = vpack.c.b16 %v387, %v383
  %v612 = vpack.c.b16 %v388, %v384
  %v613 = vpack.c.b16 %v389, %v385
  %v614 = vpack.c.b16 %v390, %v386
  %v615 = vpack.c.b16 %v395, %v391
  %v616 = vpack.c.b16 %v396, %v392
  %v617 = vpack.c.b16 %v397, %v393
  %v618 = vpack.c.b16 %v398, %v394
  %v619 = vpack.c.b16 %v403, %v399
  %v620 = vpack.c.b16 %v404, %v400
  %v621 = vpack.c.b16 %v405, %v401
  %v622 = vpack.c.b16 %v406, %v402
  %v623 = vpack.c.b16 %v411, %v407
  %v624 = vpack.c.b16 %v412, %v408
  %v625 = vpack.c.b16 %v413, %v409
  %v626 = vpack.c.b16 %v414, %v410
  %v627 = vpack.c.b16 %v419, %v415
  %v628 = vpack.c.b16 %v420, %v416
  %v629 = vpack.c.b16 %v421, %v417
  %v630 = vpack.c.b16 %v422, %v418
  %v631 = vpack.c.b16 %v427, %v423
  %v632 = vpack.c.b16 %v428, %v424
  %v633 = vpack.c.b16 %v429, %v425
  %v634 = vpack.c.b16 %v430, %v426
  %v635 = vpack.c.b16 %v435, %v431
  %v636 = vpack.c.b16 %v436, %v432
  %v637 = vpack.c.b16 %v437, %v433
  %v638 = vpack.c.b16 %v438, %v434
  %v639 = vpack.c.b16 %v443, %v439
  %v640 = vpack.c.b16 %v444, %v440
  %v641 = vpack.c.b16 %v445, %v441
  %v642 = vpack.c.b16 %v446, %v442
  %v643 = vpack.c.b16 %v451, %v447
  %v644 = vpack.c.b16 %v452, %v448
  %v645 = vpack.c.b16 %v453, %v449
  %v646 = vpack.c.b16 %v454, %v450
  %v647 = vpack.c.b16 %v459, %v455
  %v648 = vpack.c.b16 %v460, %v456
  %v649 = vpack.c.b16 %v461, %v457
  %v650 = vpack.c.b16 %v462, %v458
  %v651 = vpack.c.b16 %v467, %v463
  %v652 = vpack.c.b16 %v468, %v464
  %v653 = vpack.c.b16 %v469, %v465
  %v654 = vpack.c.b16 %v470, %v466
  %v655 = vpack.c.b16 %v475, %v471
  %v656 = vpack.c.b16 %v476, %v472
  %v657 = vpack.c.b16 %v477, %v473
  %v658 = vpack.c.b16 %v478, %v474
  %v659 = vpack.c.b16 %v483, %v479
  %v660 = vpack.c.b16 %v484, %v480
  %v661 = vpack.c.b16 %v485, %v481
  %v662 = vpack.c.b16 %v486, %v482
  %v663 = vpack.c.b16 %v491, %v487
  %v664 = vpack.c.b16 %v492, %v488
  %v665 = vpack.c.b16 %v493, %v489
  %v666 = vpack.c.b16 %v494, %v490
  %v667 = vpack.c.b16 %v499, %v495
  %v668 = vpack.c.b16 %v500, %v496
  %v669 = vpack.c.b16 %v501, %v497
  %v670 = vpack.c.b16 %v502, %v498
  %v671 = vpack.c.b16 %v507, %v503
  %v672 = vpack.c.b16 %v508, %v504
  %v673 = vpack.c.b16 %v509, %v505
  %v674 = vpack.c.b16 %v510, %v506
  %v675 = vpack.c.b16 %v515, %v511
  %v676 = vpack.c.b16 %v516, %v512
  %v677 = vpack.c.b16 %v517, %v513
  %v678 = vpack.c.b16 %v518, %v514
  %v679 = vpack.c.b16 %v523, %v519
  %v680 = vpack.c.b16 %v524, %v520
  %v681 = vpack.c.b16 %v525, %v521
  %v682 = vpack.c.b16 %v526, %v522
  %v683 = vpack.c.b16 %v531, %v527
  %v684 = vpack.c.b16 %v532, %v528
  %v685 = vpack.c.b16 %v533, %v529
  %v686 = vpack.c.b16 %v534, %v530
  %v687 = vpack.c.b16 %v539, %v535
  %v688 = vpack.c.b16 %v540, %v536
  %v689 = vpack.c.b16 %v541, %v537
  %v690 = vpack.c.b16 %v542, %v538
  %v691 = vpack.c.b16 %v547, %v543
  %v692 = vpack.c.b16 %v548, %v544
  %v693 = vpack.c.b16 %v549, %v545
  %v694 = vpack.c.b16 %v550, %v546
  %v695 = vpack.c.b16 %v555, %v551
  %v696 = vpack.c.b16 %v556, %v552
  %v697 = vpack.c.b16 %v557, %v553
  %v698 = vpack.c.b16 %v558, %v554
  %v699 = vpack.c.b16 %v563, %v559
  %v700 = vpack.c.b16 %v564, %v560
  %v701 = vpack.c.b16 %v565, %v561
  %v702 = vpack.c.b16 %v566, %v562
  %v703 = vpack.c.b16 %v571, %v567
  %v704 = vpack.c.b16 %v572, %v568
  %v705 = vpack.c.b16 %v573, %v569
  %v706 = vpack.c.b16 %v574, %v570
  %v707 = vpack.c.b16 %v579, %v575
  %v708 = vpack.c.b16 %v580, %v576
  %v709 = vpack.c.b16 %v581, %v577
  %v710 = vpack.c.b16 %v582, %v578
  %v856 = vunpack.c.l.b16 %v143
  %v857 = vunpack.c.l.b16 %v144
  %v858 = vunpack.c.l.b16 %v145
  %v859 = vunpack.c.l.b16 %v146
  %v860 = vunpack.c.l.b16 %v147
  %v861 = vunpack.c.l.b16 %v148
  %v862 = vunpack.c.l.b16 %v149
  %v863 = vunpack.c.l.b16 %v150
  %v864 = vunpack.c.l.b16 %v151
  %v865 = vunpack.c.l.b16 %v152
  %v866 = vunpack.c.l.b16 %v153
  %v867 = vunpack.c.l.b16 %v154
  %v868 = vunpack.c.l.b16 %v155
  %v869 = vunpack.c.l.b16 %v156
  %v870 = vunpack.c.l.b16 %v157
  %v871 = vunpack.c.l.b16 %v158
  %v872 = vunpack.c.l.b16 %v159
  %v873 = vunpack.c.l.b16 %v160
  %v874 = vunpack.c.l.b16 %v161
  %v875 = vunpack.c.l.b16 %v162
  %v876 = vunpack.c.l.b16 %v163
  %v877 = vunpack.c.l.b16 %v164
  %v878 = vunpack.c.l.b16 %v165
  %v879 = vunpack.c.l.b16 %v166
  %v880 = vunpack.c.l.b16 %v167
  %v881 = vunpack.c.l.b16 %v168
  %v882 = vunpack.c.l.b16 %v169
  %v883 = vunpack.c.l.b16 %v170
  %v884 = vunpack.c.l.b16 %v171
  %v885 = vunpack.c.l.b16 %v172
  %v886 = vunpack.c.l.b16 %v173
  %v887 = vunpack.c.l.b16 %v174
  %v888 = vunpack.c.l.b16 %v175
  %v889 = vunpack.c.l.b16 %v176
  %v890 = vunpack.c.l.b16 %v177
  %v891 = vunpack.c.l.b16 %v178
  %v892 = vunpack.c.l.b16 %v179
  %v893 = vunpack.c.l.b16 %v180
  %v894 = vunpack.c.l.b16 %v181
  %v895 = vunpack.c.l.b16 %v182
  %v896 = vunpack.c.l.b16 %v183
  %v897 = vunpack.c.l.b16 %v184
  %v898 = vunpack.c.l.b16 %v185
  %v899 = vunpack.c.l.b16 %v186
  %v900 = vunpack.c.l.b16 %v187
  %v901 = vunpack.c.l.b16 %v188
  %v902 = vunpack.c.l.b16 %v189
  %v903 = vunpack.c.l.b16 %v190
  %v904 = vunpack.c.l.b16 %v191
  %v905 = vpack.c.b16 %v857, %v856
  %v906 = vpack.c.b16 %v859, %v858
  %v907 = vpack.c.b16 %v861, %v860
  %v908 = vpack.c.b16 %v863, %v862
  %v909 = vpack.c.b16 %v865, %v864
  %v910 = vpack.c.b16 %v867, %v866
  %v911 = vpack.c.b16 %v869, %v868
  %v912 = vpack.c.b16 %v871, %v870
  %v913 = vpack.c.b16 %v873, %v872
  %v914 = vpack.c.b16 %v875, %v874
  %v915 = vpack.c.b16 %v877, %v876
  %v916 = vpack.c.b16 %v879, %v878
  %v917 = vpack.c.b16 %v881, %v880
  %v918 = vpack.c.b16 %v883, %v882
  %v919 = vpack.c.b16 %v885, %v884
  %v920 = vpack.c.b16 %v887, %v886
  %v921 = vpack.c.b16 %v889, %v888
  %v922 = vpack.c.b16 %v891, %v890
  %v923 = vpack.c.b16 %v893, %v892
  %v924 = vpack.c.b16 %v895, %v894
  %v925 = vpack.c.b16 %v897, %v896
  %v926 = vpack.c.b16 %v899, %v898
  %v927 = vpack.c.b16 %v901, %v900
  %v928 = vpack.c.b16 %v903, %v902
  %v929 = vpack.c.b16 %v904, %v904
  %vm954 = vcmask 64512
  %v956 = vsel %vm954, %v586, 0
  %v959 = vsel %vm954, %v590, 0
  %v962 = vsel %vm954, %v594, 0
  %v965 = vsel %vm954, %v598, 0
  %v968 = vsel %vm954, %v602, 0
  %v971 = vsel %vm954, %v606, 0
  %v974 = vsel %vm954, %v610, 0
  %v977 = vsel %vm954, %v614, 0
  %v980 = vsel %vm954, %v618, 0
  %v983 = vsel %vm954, %v622, 0
  %v986 = vsel %vm954, %v626, 0
  %v989 = vsel %vm954, %v630, 0
  %v992 = vsel %vm954, %v634, 0
  %v995 = vsel %vm954, %v638, 0
  %v998 = vsel %vm954, %v642, 0
  %v1001 = vsel %vm954, %v646, 0
  %v1004 = vsel %vm954, %v650, 0
  %v1007 = vsel %vm954, %v654, 0
  %v1010 = vsel %vm954, %v658, 0
  %v1013 = vsel %vm954, %v662, 0
  %v1016 = vsel %vm954, %v666, 0
  %v1019 = vsel %vm954, %v670, 0
  %v1022 = vsel %vm954, %v674, 0
  %v1025 = vsel %vm954, %v678, 0
  %v1028 = vsel %vm954, %v682, 0
  %v1031 = vsel %vm954, %v686, 0
  %v1034 = vsel %vm954, %v690, 0
  %v1037 = vsel %vm954, %v694, 0
  %v1040 = vsel %vm954, %v698, 0
  %v1043 = vsel %vm954, %v702, 0
  %v1046 = vsel %vm954, %v706, 0
  %v1049 = vsel %vm954, %v710, 0
  %vm1051 = vcmask 1043456
  %v1053 = vsel %vm1051, %v929, 0
  %1055 = vmatprep.subr.bf16.mxu0 0
  %1056 = vmatpush1.bf16.msra.mxu0 %v905
  %1057 = vmatprep.subr.bf16.mxu0 0
  %1058 = vmatpush1.bf16.msra.mxu0 %v906
  %1059 = vmatprep.subr.bf16.mxu0 0
  %1060 = vmatpush1.bf16.msra.mxu0 %v907
  %1061 = vmatprep.subr.bf16.mxu0 0
  %1062 = vmatpush1.bf16.msra.mxu0 %v908
  %1063 = vmatprep.subr.bf16.mxu0 0
  %1064 = vmatpush1.bf16.msra.mxu0 %v909
  %1065 = vmatprep.subr.bf16.mxu0 0
  %1066 = vmatpush1.bf16.msra.mxu0 %v910
  %1067 = vmatprep.subr.bf16.mxu0 0
  %1068 = vmatpush1.bf16.msra.mxu0 %v911
  %1069 = vmatprep.subr.bf16.mxu0 0
  %1070 = vmatpush1.bf16.msra.mxu0 %v912
  %1071 = vmatprep.subr.bf16.mxu0 0
  %1072 = vmatpush1.bf16.msra.mxu0 %v913
  %1073 = vmatprep.subr.bf16.mxu0 0
  %1074 = vmatpush1.bf16.msra.mxu0 %v914
  %1075 = vmatprep.subr.bf16.mxu0 0
  %1076 = vmatpush1.bf16.msra.mxu0 %v915
  %1077 = vmatprep.subr.bf16.mxu0 0
  %1078 = vmatpush1.bf16.msra.mxu0 %v916
  %1079 = vmatprep.subr.bf16.mxu0 0
  %1080 = vmatpush1.bf16.msra.mxu0 %v917
  %1081 = vmatprep.subr.bf16.mxu0 0
  %1082 = vmatpush1.bf16.msra.mxu0 %v918
  %1083 = vmatprep.subr.bf16.mxu0 0
  %1084 = vmatpush1.bf16.msra.mxu0 %v919
  %1085 = vmatprep.subr.bf16.mxu0 0
  %1086 = vmatpush1.bf16.msra.mxu0 %v920
  %1087 = vmatprep.mubr.bf16.mxu0 %v584
  %1088 = vmatmul.mubr.bf16.gmra.mrb[0].mxu0 %v583
  %v1089 = vpop.f32.mrb[0].mxu0
  %v1090 = vadd.f32 %v197, %v1089
  %v1091 = vpop.f32.mrb[0].mxu0
  %v1092 = vpop.f32.mrb[0].mxu0
  %v1093 = vadd.f32 %v197, %v1092
  %v1094 = vpop.f32.mrb[0].mxu0
  %1095 = vmatprep.mubr.bf16.mxu0 %v588
  %1096 = vmatmul.mubr.bf16.gmra.mrb[0].mxu0 %v587
  %v1097 = vpop.f32.mrb[0].mxu0
  %v1098 = vadd.f32 %v197, %v1097
  %v1099 = vpop.f32.mrb[0].mxu0
  %v1100 = vpop.f32.mrb[0].mxu0
  %v1101 = vadd.f32 %v197, %v1100
  %v1102 = vpop.f32.mrb[0].mxu0
  %1103 = vmatprep.mubr.bf16.mxu0 %v592
  %1104 = vmatmul.mubr.bf16.gmra.mrb[0].mxu0 %v591
  %v1105 = vpop.f32.mrb[0].mxu0
  %v1106 = vadd.f32 %v197, %v1105
  %v1107 = vpop.f32.mrb[0].mxu0
  %v1108 = vpop.f32.mrb[0].mxu0
  %v1109 = vadd.f32 %v197, %v1108
  %v1110 = vpop.f32.mrb[0].mxu0
  %1111 = vmatprep.mubr.bf16.mxu0 %v596
  %1112 = vmatmul.mubr.bf16.gmra.mrb[0].mxu0 %v595
  %v1113 = vpop.f32.mrb[0].mxu0
  %v1114 = vadd.f32 %v197, %v1113
  %v1115 = vpop.f32.mrb[0].mxu0
  %v1116 = vpop.f32.mrb[0].mxu0
  %v1117 = vadd.f32 %v197, %v1116
  %v1118 = vpop.f32.mrb[0].mxu0
  %1119 = vmatprep.mubr.bf16.mxu0 %v600
  %1120 = vmatmul.mubr.bf16.gmra.mrb[0].mxu0 %v599
  %v1121 = vpop.f32.mrb[0].mxu0
  %v1122 = vadd.f32 %v197, %v1121
  %v1123 = vpop.f32.mrb[0].mxu0
  %v1124 = vpop.f32.mrb[0].mxu0
  %v1125 = vadd.f32 %v197, %v1124
  %v1126 = vpop.f32.mrb[0].mxu0
  %1127 = vmatprep.mubr.bf16.mxu0 %v604
  %1128 = vmatmul.mubr.bf16.gmra.mrb[0].mxu0 %v603
  %v1129 = vpop.f32.mrb[0].mxu0
  %v1130 = vadd.f32 %v197, %v1129
  %v1131 = vpop.f32.mrb[0].mxu0
  %v1132 = vpop.f32.mrb[0].mxu0
  %v1133 = vadd.f32 %v197, %v1132
  %v1134 = vpop.f32.mrb[0].mxu0
  %1135 = vmatprep.mubr.bf16.mxu0 %v608
  %1136 = vmatmul.mubr.bf16.gmra.mrb[0].mxu0 %v607
  %v1137 = vpop.f32.mrb[0].mxu0
  %v1138 = vadd.f32 %v197, %v1137
  %v1139 = vpop.f32.mrb[0].mxu0
  %v1140 = vpop.f32.mrb[0].mxu0
  %v1141 = vadd.f32 %v197, %v1140
  %v1142 = vpop.f32.mrb[0].mxu0
  %1143 = vmatprep.mubr.bf16.mxu0 %v612
  %1144 = vmatmul.mubr.bf16.gmra.mrb[0].mxu0 %v611
  %v1145 = vpop.f32.mrb[0].mxu0
  %v1146 = vadd.f32 %v197, %v1145
  %v1147 = vpop.f32.mrb[0].mxu0
  %v1148 = vpop.f32.mrb[0].mxu0
  %v1149 = vadd.f32 %v197, %v1148
  %v1150 = vpop.f32.mrb[0].mxu0
  %1151 = vmatprep.mubr.bf16.mxu0 %v616
  %1152 = vmatmul.mubr.bf16.gmra.mrb[0].mxu0 %v615
  %v1153 = vpop.f32.mrb[0].mxu0
  %v1154 = vadd.f32 %v197, %v1153
  %v1155 = vpop.f32.mrb[0].mxu0
  %v1156 = vpop.f32.mrb[0].mxu0
  %v1157 = vadd.f32 %v197, %v1156
  %v1158 = vpop.f32.mrb[0].mxu0
  %1159 = vmatprep.mubr.bf16.mxu0 %v620
  %1160 = vmatmul.mubr.bf16.gmra.mrb[0].mxu0 %v619
  %v1161 = vpop.f32.mrb[0].mxu0
  %v1162 = vadd.f32 %v197, %v1161
  %v1163 = vpop.f32.mrb[0].mxu0
  %v1164 = vpop.f32.mrb[0].mxu0
  %v1165 = vadd.f32 %v197, %v1164
  %v1166 = vpop.f32.mrb[0].mxu0
  %1167 = vmatprep.mubr.bf16.mxu0 %v624
  %1168 = vmatmul.mubr.bf16.gmra.mrb[0].mxu0 %v623
  %v1169 = vpop.f32.mrb[0].mxu0
  %v1170 = vadd.f32 %v197, %v1169
  %v1171 = vpop.f32.mrb[0].mxu0
  %v1172 = vpop.f32.mrb[0].mxu0
  %v1173 = vadd.f32 %v197, %v1172
  %v1174 = vpop.f32.mrb[0].mxu0
  %1175 = vmatprep.mubr.bf16.mxu0 %v628
  %1176 = vmatmul.mubr.bf16.gmra.mrb[0].mxu0 %v627
  %v1177 = vpop.f32.mrb[0].mxu0
  %v1178 = vadd.f32 %v197, %v1177
  %v1179 = vpop.f32.mrb[0].mxu0
  %v1180 = vpop.f32.mrb[0].mxu0
  %v1181 = vadd.f32 %v197, %v1180
  %v1182 = vpop.f32.mrb[0].mxu0
  %1183 = vmatprep.mubr.bf16.mxu0 %v632
  %1184 = vmatmul.mubr.bf16.gmra.mrb[0].mxu0 %v631
  %v1185 = vpop.f32.mrb[0].mxu0
  %v1186 = vadd.f32 %v197, %v1185
  %v1187 = vpop.f32.mrb[0].mxu0
  %v1188 = vpop.f32.mrb[0].mxu0
  %v1189 = vadd.f32 %v197, %v1188
  %v1190 = vpop.f32.mrb[0].mxu0
  %1191 = vmatprep.mubr.bf16.mxu0 %v636
  %1192 = vmatmul.mubr.bf16.gmra.mrb[0].mxu0 %v635
  %v1193 = vpop.f32.mrb[0].mxu0
  %v1194 = vadd.f32 %v197, %v1193
  %v1195 = vpop.f32.mrb[0].mxu0
  %v1196 = vpop.f32.mrb[0].mxu0
  %v1197 = vadd.f32 %v197, %v1196
  %v1198 = vpop.f32.mrb[0].mxu0
  %1199 = vmatprep.mubr.bf16.mxu0 %v640
  %1200 = vmatmul.mubr.bf16.gmra.mrb[0].mxu0 %v639
  %v1201 = vpop.f32.mrb[0].mxu0
  %v1202 = vadd.f32 %v197, %v1201
  %v1203 = vpop.f32.mrb[0].mxu0
  %v1204 = vpop.f32.mrb[0].mxu0
  %v1205 = vadd.f32 %v197, %v1204
  %v1206 = vpop.f32.mrb[0].mxu0
  %1207 = vmatprep.mubr.bf16.mxu0 %v644
  %1208 = vmatmul.mubr.bf16.gmra.mrb[0].mxu0 %v643
  %v1209 = vpop.f32.mrb[0].mxu0
  %v1210 = vadd.f32 %v197, %v1209
  %v1211 = vpop.f32.mrb[0].mxu0
  %v1212 = vpop.f32.mrb[0].mxu0
  %v1213 = vadd.f32 %v197, %v1212
  %v1214 = vpop.f32.mrb[0].mxu0
  %1215 = vmatprep.mubr.bf16.mxu0 %v648
  %1216 = vmatmul.mubr.bf16.gmra.mrb[0].mxu0 %v647
  %v1217 = vpop.f32.mrb[0].mxu0
  %v1218 = vadd.f32 %v197, %v1217
  %v1219 = vpop.f32.mrb[0].mxu0
  %v1220 = vpop.f32.mrb[0].mxu0
  %v1221 = vadd.f32 %v197, %v1220
  %v1222 = vpop.f32.mrb[0].mxu0
  %1223 = vmatprep.mubr.bf16.mxu0 %v652
  %1224 = vmatmul.mubr.bf16.gmra.mrb[0].mxu0 %v651
  %v1225 = vpop.f32.mrb[0].mxu0
  %v1226 = vadd.f32 %v197, %v1225
  %v1227 = vpop.f32.mrb[0].mxu0
  %v1228 = vpop.f32.mrb[0].mxu0
  %v1229 = vadd.f32 %v197, %v1228
  %v1230 = vpop.f32.mrb[0].mxu0
  %1231 = vmatprep.mubr.bf16.mxu0 %v656
  %1232 = vmatmul.mubr.bf16.gmra.mrb[0].mxu0 %v655
  %v1233 = vpop.f32.mrb[0].mxu0
  %v1234 = vadd.f32 %v197, %v1233
  %v1235 = vpop.f32.mrb[0].mxu0
  %v1236 = vpop.f32.mrb[0].mxu0
  %v1237 = vadd.f32 %v197, %v1236
  %v1238 = vpop.f32.mrb[0].mxu0
  %1239 = vmatprep.mubr.bf16.mxu0 %v660
  %1240 = vmatmul.mubr.bf16.gmra.mrb[0].mxu0 %v659
  %v1241 = vpop.f32.mrb[0].mxu0
  %v1242 = vadd.f32 %v197, %v1241
  %v1243 = vpop.f32.mrb[0].mxu0
  %v1244 = vpop.f32.mrb[0].mxu0
  %v1245 = vadd.f32 %v197, %v1244
  %v1246 = vpop.f32.mrb[0].mxu0
  %1247 = vmatprep.mubr.bf16.mxu0 %v664
  %1248 = vmatmul.mubr.bf16.gmra.mrb[0].mxu0 %v663
  %v1249 = vpop.f32.mrb[0].mxu0
  %v1250 = vadd.f32 %v197, %v1249
  %v1251 = vpop.f32.mrb[0].mxu0
  %v1252 = vpop.f32.mrb[0].mxu0
  %v1253 = vadd.f32 %v197, %v1252
  %v1254 = vpop.f32.mrb[0].mxu0
  %1255 = vmatprep.mubr.bf16.mxu0 %v668
  %1256 = vmatmul.mubr.bf16.gmra.mrb[0].mxu0 %v667
  %v1257 = vpop.f32.mrb[0].mxu0
  %v1258 = vadd.f32 %v197, %v1257
  %v1259 = vpop.f32.mrb[0].mxu0
  %v1260 = vpop.f32.mrb[0].mxu0
  %v1261 = vadd.f32 %v197, %v1260
  %v1262 = vpop.f32.mrb[0].mxu0
  %1263 = vmatprep.mubr.bf16.mxu0 %v672
  %1264 = vmatmul.mubr.bf16.gmra.mrb[0].mxu0 %v671
  %v1265 = vpop.f32.mrb[0].mxu0
  %v1266 = vadd.f32 %v197, %v1265
  %v1267 = vpop.f32.mrb[0].mxu0
  %v1268 = vpop.f32.mrb[0].mxu0
  %v1269 = vadd.f32 %v197, %v1268
  %v1270 = vpop.f32.mrb[0].mxu0
  %1271 = vmatprep.mubr.bf16.mxu0 %v676
  %1272 = vmatmul.mubr.bf16.gmra.mrb[0].mxu0 %v675
  %v1273 = vpop.f32.mrb[0].mxu0
  %v1274 = vadd.f32 %v197, %v1273
  %v1275 = vpop.f32.mrb[0].mxu0
  %v1276 = vpop.f32.mrb[0].mxu0
  %v1277 = vadd.f32 %v197, %v1276
  %v1278 = vpop.f32.mrb[0].mxu0
  %1279 = vmatprep.mubr.bf16.mxu0 %v680
  %1280 = vmatmul.mubr.bf16.gmra.mrb[0].mxu0 %v679
  %v1281 = vpop.f32.mrb[0].mxu0
  %v1282 = vadd.f32 %v197, %v1281
  %v1283 = vpop.f32.mrb[0].mxu0
  %v1284 = vpop.f32.mrb[0].mxu0
  %v1285 = vadd.f32 %v197, %v1284
  %v1286 = vpop.f32.mrb[0].mxu0
  %1287 = vmatprep.mubr.bf16.mxu0 %v684
  %1288 = vmatmul.mubr.bf16.gmra.mrb[0].mxu0 %v683
  %v1289 = vpop.f32.mrb[0].mxu0
  %v1290 = vadd.f32 %v197, %v1289
  %v1291 = vpop.f32.mrb[0].mxu0
  %v1292 = vpop.f32.mrb[0].mxu0
  %v1293 = vadd.f32 %v197, %v1292
  %v1294 = vpop.f32.mrb[0].mxu0
  %1295 = vmatprep.mubr.bf16.mxu0 %v688
  %1296 = vmatmul.mubr.bf16.gmra.mrb[0].mxu0 %v687
  %v1297 = vpop.f32.mrb[0].mxu0
  %v1298 = vadd.f32 %v197, %v1297
  %v1299 = vpop.f32.mrb[0].mxu0
  %v1300 = vpop.f32.mrb[0].mxu0
  %v1301 = vadd.f32 %v197, %v1300
  %v1302 = vpop.f32.mrb[0].mxu0
  %1303 = vmatprep.mubr.bf16.mxu0 %v692
  %1304 = vmatmul.mubr.bf16.gmra.mrb[0].mxu0 %v691
  %v1305 = vpop.f32.mrb[0].mxu0
  %v1306 = vadd.f32 %v197, %v1305
  %v1307 = vpop.f32.mrb[0].mxu0
  %v1308 = vpop.f32.mrb[0].mxu0
  %v1309 = vadd.f32 %v197, %v1308
  %v1310 = vpop.f32.mrb[0].mxu0
  %1311 = vmatprep.mubr.bf16.mxu0 %v696
  %1312 = vmatmul.mubr.bf16.gmra.mrb[0].mxu0 %v695
  %v1313 = vpop.f32.mrb[0].mxu0
  %v1314 = vadd.f32 %v197, %v1313
  %v1315 = vpop.f32.mrb[0].mxu0
  %v1316 = vpop.f32.mrb[0].mxu0
  %v1317 = vadd.f32 %v197, %v1316
  %v1318 = vpop.f32.mrb[0].mxu0
  %1319 = vmatprep.mubr.bf16.mxu0 %v700
  %1320 = vmatmul.mubr.bf16.gmra.mrb[0].mxu0 %v699
  %v1321 = vpop.f32.mrb[0].mxu0
  %v1322 = vadd.f32 %v197, %v1321
  %v1323 = vpop.f32.mrb[0].mxu0
  %v1324 = vpop.f32.mrb[0].mxu0
  %v1325 = vadd.f32 %v197, %v1324
  %v1326 = vpop.f32.mrb[0].mxu0
  %1327 = vmatprep.mubr.bf16.mxu0 %v704
  %1328 = vmatmul.mubr.bf16.gmra.mrb[0].mxu0 %v703
  %v1329 = vpop.f32.mrb[0].mxu0
  %v1330 = vadd.f32 %v197, %v1329
  %v1331 = vpop.f32.mrb[0].mxu0
  %v1332 = vpop.f32.mrb[0].mxu0
  %v1333 = vadd.f32 %v197, %v1332
  %v1334 = vpop.f32.mrb[0].mxu0
  %1335 = vmatprep.mubr.bf16.mxu0 %v708
  %1336 = vmatmul.mubr.bf16.gmra.mrb[0].mxu0 %v707
  %v1337 = vpop.f32.mrb[0].mxu0
  %v1338 = vadd.f32 %v197, %v1337
  %v1339 = vpop.f32.mrb[0].mxu0
  %v1340 = vpop.f32.mrb[0].mxu0
  %v1341 = vadd.f32 %v197, %v1340
  %v1342 = vpop.f32.mrb[0].mxu0
  %1343 = vdwg.mxu0
  %1344 = vmatprep.subr.bf16.mxu0 0
  %1345 = vmatpush1.bf16.msra.mxu0 %v921
  %1346 = vmatprep.subr.bf16.mxu0 0
  %1347 = vmatpush1.bf16.msra.mxu0 %v922
  %1348 = vmatprep.subr.bf16.mxu0 0
  %1349 = vmatpush1.bf16.msra.mxu0 %v923
  %1350 = vmatprep.subr.bf16.mxu0 0
  %1351 = vmatpush1.bf16.msra.mxu0 %v924
  %1352 = vmatprep.subr.bf16.mxu0 0
  %1353 = vmatpush1.bf16.msra.mxu0 %v925
  %1354 = vmatprep.subr.bf16.mxu0 0
  %1355 = vmatpush1.bf16.msra.mxu0 %v926
  %1356 = vmatprep.subr.bf16.mxu0 0
  %1357 = vmatpush1.bf16.msra.mxu0 %v927
  %1358 = vmatprep.subr.bf16.mxu0 0
  %1359 = vmatpush1.bf16.msra.mxu0 %v928
  %1360 = vmatprep.subr.bf16.mxu0 0
  %1361 = vmatpush1.bf16.msra.mxu0 %v1053
  %1362 = vmatprep.subr.bf16.mxu0 0
  %1363 = vmatpush1.bf16.msra.mxu0 0
  %1364 = vmatprep.subr.bf16.mxu0 0
  %1365 = vmatpush1.bf16.msra.mxu0 0
  %1366 = vmatprep.subr.bf16.mxu0 0
  %1367 = vmatpush1.bf16.msra.mxu0 0
  %1368 = vmatprep.subr.bf16.mxu0 0
  %1369 = vmatpush1.bf16.msra.mxu0 0
  %1370 = vmatprep.subr.bf16.mxu0 0
  %1371 = vmatpush1.bf16.msra.mxu0 0
  %1372 = vmatprep.subr.bf16.mxu0 0
  %1373 = vmatpush1.bf16.msra.mxu0 0
  %1374 = vmatprep.subr.bf16.mxu0 0
  %1375 = vmatpush1.bf16.msra.mxu0 0
  %1376 = vmatprep.mubr.bf16.mxu0 %v956
  %1377 = vmatmul.mubr.bf16.gmra.mrb[0].mxu0 %v585
  %v1378 = vpop.f32.mrb[0].mxu0
  %v1379 = vadd.f32 %v1090, %v1378
  %v1380 = vpop.f32.mrb[0].mxu0
  %v1381 = vpop.f32.mrb[0].mxu0
  %v1382 = vadd.f32 %v1093, %v1381
  %v1383 = vpop.f32.mrb[0].mxu0
  %1384 = vmatprep.mubr.bf16.mxu0 %v959
  %1385 = vmatmul.mubr.bf16.gmra.mrb[0].mxu0 %v589
  %v1386 = vpop.f32.mrb[0].mxu0
  %v1387 = vadd.f32 %v1098, %v1386
  %v1388 = vpop.f32.mrb[0].mxu0
  %v1389 = vpop.f32.mrb[0].mxu0
  %v1390 = vadd.f32 %v1101, %v1389
  %v1391 = vpop.f32.mrb[0].mxu0
  %1392 = vmatprep.mubr.bf16.mxu0 %v962
  %1393 = vmatmul.mubr.bf16.gmra.mrb[0].mxu0 %v593
  %v1394 = vpop.f32.mrb[0].mxu0
  %v1395 = vadd.f32 %v1106, %v1394
  %v1396 = vpop.f32.mrb[0].mxu0
  %v1397 = vpop.f32.mrb[0].mxu0
  %v1398 = vadd.f32 %v1109, %v1397
  %v1399 = vpop.f32.mrb[0].mxu0
  %1400 = vmatprep.mubr.bf16.mxu0 %v965
  %1401 = vmatmul.mubr.bf16.gmra.mrb[0].mxu0 %v597
  %v1402 = vpop.f32.mrb[0].mxu0
  %v1403 = vadd.f32 %v1114, %v1402
  %v1404 = vpop.f32.mrb[0].mxu0
  %v1405 = vpop.f32.mrb[0].mxu0
  %v1406 = vadd.f32 %v1117, %v1405
  %v1407 = vpop.f32.mrb[0].mxu0
  %1408 = vmatprep.mubr.bf16.mxu0 %v968
  %1409 = vmatmul.mubr.bf16.gmra.mrb[0].mxu0 %v601
  %v1410 = vpop.f32.mrb[0].mxu0
  %v1411 = vadd.f32 %v1122, %v1410
  %v1412 = vpop.f32.mrb[0].mxu0
  %v1413 = vpop.f32.mrb[0].mxu0
  %v1414 = vadd.f32 %v1125, %v1413
  %v1415 = vpop.f32.mrb[0].mxu0
  %1416 = vmatprep.mubr.bf16.mxu0 %v971
  %1417 = vmatmul.mubr.bf16.gmra.mrb[0].mxu0 %v605
  %v1418 = vpop.f32.mrb[0].mxu0
  %v1419 = vadd.f32 %v1130, %v1418
  %v1420 = vpop.f32.mrb[0].mxu0
  %v1421 = vpop.f32.mrb[0].mxu0
  %v1422 = vadd.f32 %v1133, %v1421
  %v1423 = vpop.f32.mrb[0].mxu0
  %1424 = vmatprep.mubr.bf16.mxu0 %v974
  %1425 = vmatmul.mubr.bf16.gmra.mrb[0].mxu0 %v609
  %v1426 = vpop.f32.mrb[0].mxu0
  %v1427 = vadd.f32 %v1138, %v1426
  %v1428 = vpop.f32.mrb[0].mxu0
  %v1429 = vpop.f32.mrb[0].mxu0
  %v1430 = vadd.f32 %v1141, %v1429
  %v1431 = vpop.f32.mrb[0].mxu0
  %1432 = vmatprep.mubr.bf16.mxu0 %v977
  %1433 = vmatmul.mubr.bf16.gmra.mrb[0].mxu0 %v613
  %v1434 = vpop.f32.mrb[0].mxu0
  %v1435 = vadd.f32 %v1146, %v1434
  %v1436 = vpop.f32.mrb[0].mxu0
  %v1437 = vpop.f32.mrb[0].mxu0
  %v1438 = vadd.f32 %v1149, %v1437
  %v1439 = vpop.f32.mrb[0].mxu0
  %1440 = vmatprep.mubr.bf16.mxu0 %v980
  %1441 = vmatmul.mubr.bf16.gmra.mrb[0].mxu0 %v617
  %v1442 = vpop.f32.mrb[0].mxu0
  %v1443 = vadd.f32 %v1154, %v1442
  %v1444 = vpop.f32.mrb[0].mxu0
  %v1445 = vpop.f32.mrb[0].mxu0
  %v1446 = vadd.f32 %v1157, %v1445
  %v1447 = vpop.f32.mrb[0].mxu0
  %1448 = vmatprep.mubr.bf16.mxu0 %v983
  %1449 = vmatmul.mubr.bf16.gmra.mrb[0].mxu0 %v621
  %v1450 = vpop.f32.mrb[0].mxu0
  %v1451 = vadd.f32 %v1162, %v1450
  %v1452 = vpop.f32.mrb[0].mxu0
  %v1453 = vpop.f32.mrb[0].mxu0
  %v1454 = vadd.f32 %v1165, %v1453
  %v1455 = vpop.f32.mrb[0].mxu0
  %1456 = vmatprep.mubr.bf16.mxu0 %v986
  %1457 = vmatmul.mubr.bf16.gmra.mrb[0].mxu0 %v625
  %v1458 = vpop.f32.mrb[0].mxu0
  %v1459 = vadd.f32 %v1170, %v1458
  %v1460 = vpop.f32.mrb[0].mxu0
  %v1461 = vpop.f32.mrb[0].mxu0
  %v1462 = vadd.f32 %v1173, %v1461
  %v1463 = vpop.f32.mrb[0].mxu0
  %1464 = vmatprep.mubr.bf16.mxu0 %v989
  %1465 = vmatmul.mubr.bf16.gmra.mrb[0].mxu0 %v629
  %v1466 = vpop.f32.mrb[0].mxu0
  %v1467 = vadd.f32 %v1178, %v1466
  %v1468 = vpop.f32.mrb[0].mxu0
  %v1469 = vpop.f32.mrb[0].mxu0
  %v1470 = vadd.f32 %v1181, %v1469
  %v1471 = vpop.f32.mrb[0].mxu0
  %1472 = vmatprep.mubr.bf16.mxu0 %v992
  %1473 = vmatmul.mubr.bf16.gmra.mrb[0].mxu0 %v633
  %v1474 = vpop.f32.mrb[0].mxu0
  %v1475 = vadd.f32 %v1186, %v1474
  %v1476 = vpop.f32.mrb[0].mxu0
  %v1477 = vpop.f32.mrb[0].mxu0
  %v1478 = vadd.f32 %v1189, %v1477
  %v1479 = vpop.f32.mrb[0].mxu0
  %1480 = vmatprep.mubr.bf16.mxu0 %v995
  %1481 = vmatmul.mubr.bf16.gmra.mrb[0].mxu0 %v637
  %v1482 = vpop.f32.mrb[0].mxu0
  %v1483 = vadd.f32 %v1194, %v1482
  %v1484 = vpop.f32.mrb[0].mxu0
  %v1485 = vpop.f32.mrb[0].mxu0
  %v1486 = vadd.f32 %v1197, %v1485
  %v1487 = vpop.f32.mrb[0].mxu0
  %1488 = vmatprep.mubr.bf16.mxu0 %v998
  %1489 = vmatmul.mubr.bf16.gmra.mrb[0].mxu0 %v641
  %v1490 = vpop.f32.mrb[0].mxu0
  %v1491 = vadd.f32 %v1202, %v1490
  %v1492 = vpop.f32.mrb[0].mxu0
  %v1493 = vpop.f32.mrb[0].mxu0
  %v1494 = vadd.f32 %v1205, %v1493
  %v1495 = vpop.f32.mrb[0].mxu0
  %1496 = vmatprep.mubr.bf16.mxu0 %v1001
  %1497 = vmatmul.mubr.bf16.gmra.mrb[0].mxu0 %v645
  %v1498 = vpop.f32.mrb[0].mxu0
  %v1499 = vadd.f32 %v1210, %v1498
  %v1500 = vpop.f32.mrb[0].mxu0
  %v1501 = vpop.f32.mrb[0].mxu0
  %v1502 = vadd.f32 %v1213, %v1501
  %v1503 = vpop.f32.mrb[0].mxu0
  %1504 = vmatprep.mubr.bf16.mxu0 %v1004
  %1505 = vmatmul.mubr.bf16.gmra.mrb[0].mxu0 %v649
  %v1506 = vpop.f32.mrb[0].mxu0
  %v1507 = vadd.f32 %v1218, %v1506
  %v1508 = vpop.f32.mrb[0].mxu0
  %v1509 = vpop.f32.mrb[0].mxu0
  %v1510 = vadd.f32 %v1221, %v1509
  %v1511 = vpop.f32.mrb[0].mxu0
  %1512 = vmatprep.mubr.bf16.mxu0 %v1007
  %1513 = vmatmul.mubr.bf16.gmra.mrb[0].mxu0 %v653
  %v1514 = vpop.f32.mrb[0].mxu0
  %v1515 = vadd.f32 %v1226, %v1514
  %v1516 = vpop.f32.mrb[0].mxu0
  %v1517 = vpop.f32.mrb[0].mxu0
  %v1518 = vadd.f32 %v1229, %v1517
  %v1519 = vpop.f32.mrb[0].mxu0
  %1520 = vmatprep.mubr.bf16.mxu0 %v1010
  %1521 = vmatmul.mubr.bf16.gmra.mrb[0].mxu0 %v657
  %v1522 = vpop.f32.mrb[0].mxu0
  %v1523 = vadd.f32 %v1234, %v1522
  %v1524 = vpop.f32.mrb[0].mxu0
  %v1525 = vpop.f32.mrb[0].mxu0
  %v1526 = vadd.f32 %v1237, %v1525
  %v1527 = vpop.f32.mrb[0].mxu0
  %1528 = vmatprep.mubr.bf16.mxu0 %v1013
  %1529 = vmatmul.mubr.bf16.gmra.mrb[0].mxu0 %v661
  %v1530 = vpop.f32.mrb[0].mxu0
  %v1531 = vadd.f32 %v1242, %v1530
  %v1532 = vpop.f32.mrb[0].mxu0
  %v1533 = vpop.f32.mrb[0].mxu0
  %v1534 = vadd.f32 %v1245, %v1533
  %v1535 = vpop.f32.mrb[0].mxu0
  %1536 = vmatprep.mubr.bf16.mxu0 %v1016
  %1537 = vmatmul.mubr.bf16.gmra.mrb[0].mxu0 %v665
  %v1538 = vpop.f32.mrb[0].mxu0
  %v1539 = vadd.f32 %v1250, %v1538
  %v1540 = vpop.f32.mrb[0].mxu0
  %v1541 = vpop.f32.mrb[0].mxu0
  %v1542 = vadd.f32 %v1253, %v1541
  %v1543 = vpop.f32.mrb[0].mxu0
  %1544 = vmatprep.mubr.bf16.mxu0 %v1019
  %1545 = vmatmul.mubr.bf16.gmra.mrb[0].mxu0 %v669
  %v1546 = vpop.f32.mrb[0].mxu0
  %v1547 = vadd.f32 %v1258, %v1546
  %v1548 = vpop.f32.mrb[0].mxu0
  %v1549 = vpop.f32.mrb[0].mxu0
  %v1550 = vadd.f32 %v1261, %v1549
  %v1551 = vpop.f32.mrb[0].mxu0
  %1552 = vmatprep.mubr.bf16.mxu0 %v1022
  %1553 = vmatmul.mubr.bf16.gmra.mrb[0].mxu0 %v673
  %v1554 = vpop.f32.mrb[0].mxu0
  %v1555 = vadd.f32 %v1266, %v1554
  %v1556 = vpop.f32.mrb[0].mxu0
  %v1557 = vpop.f32.mrb[0].mxu0
  %v1558 = vadd.f32 %v1269, %v1557
  %v1559 = vpop.f32.mrb[0].mxu0
  %1560 = vmatprep.mubr.bf16.mxu0 %v1025
  %1561 = vmatmul.mubr.bf16.gmra.mrb[0].mxu0 %v677
  %v1562 = vpop.f32.mrb[0].mxu0
  %v1563 = vadd.f32 %v1274, %v1562
  %v1564 = vpop.f32.mrb[0].mxu0
  %v1565 = vpop.f32.mrb[0].mxu0
  %v1566 = vadd.f32 %v1277, %v1565
  %v1567 = vpop.f32.mrb[0].mxu0
  %1568 = vmatprep.mubr.bf16.mxu0 %v1028
  %1569 = vmatmul.mubr.bf16.gmra.mrb[0].mxu0 %v681
  %v1570 = vpop.f32.mrb[0].mxu0
  %v1571 = vadd.f32 %v1282, %v1570
  %v1572 = vpop.f32.mrb[0].mxu0
  %v1573 = vpop.f32.mrb[0].mxu0
  %v1574 = vadd.f32 %v1285, %v1573
  %v1575 = vpop.f32.mrb[0].mxu0
  %1576 = vmatprep.mubr.bf16.mxu0 %v1031
  %1577 = vmatmul.mubr.bf16.gmra.mrb[0].mxu0 %v685
  %v1578 = vpop.f32.mrb[0].mxu0
  %v1579 = vadd.f32 %v1290, %v1578
  %v1580 = vpop.f32.mrb[0].mxu0
  %v1581 = vpop.f32.mrb[0].mxu0
  %v1582 = vadd.f32 %v1293, %v1581
  %v1583 = vpop.f32.mrb[0].mxu0
  %1584 = vmatprep.mubr.bf16.mxu0 %v1034
  %1585 = vmatmul.mubr.bf16.gmra.mrb[0].mxu0 %v689
  %v1586 = vpop.f32.mrb[0].mxu0
  %v1587 = vadd.f32 %v1298, %v1586
  %v1588 = vpop.f32.mrb[0].mxu0
  %v1589 = vpop.f32.mrb[0].mxu0
  %v1590 = vadd.f32 %v1301, %v1589
  %v1591 = vpop.f32.mrb[0].mxu0
  %1592 = vmatprep.mubr.bf16.mxu0 %v1037
  %1593 = vmatmul.mubr.bf16.gmra.mrb[0].mxu0 %v693
  %v1594 = vpop.f32.mrb[0].mxu0
  %v1595 = vadd.f32 %v1306, %v1594
  %v1596 = vpop.f32.mrb[0].mxu0
  %v1597 = vpop.f32.mrb[0].mxu0
  %v1598 = vadd.f32 %v1309, %v1597
  %v1599 = vpop.f32.mrb[0].mxu0
  %1600 = vmatprep.mubr.bf16.mxu0 %v1040
  %1601 = vmatmul.mubr.bf16.gmra.mrb[0].mxu0 %v697
  %v1602 = vpop.f32.mrb[0].mxu0
  %v1603 = vadd.f32 %v1314, %v1602
  %v1604 = vpop.f32.mrb[0].mxu0
  %v1605 = vpop.f32.mrb[0].mxu0
  %v1606 = vadd.f32 %v1317, %v1605
  %v1607 = vpop.f32.mrb[0].mxu0
  %1608 = vmatprep.mubr.bf16.mxu0 %v1043
  %1609 = vmatmul.mubr.bf16.gmra.mrb[0].mxu0 %v701
  %v1610 = vpop.f32.mrb[0].mxu0
  %v1611 = vadd.f32 %v1322, %v1610
  %v1612 = vpop.f32.mrb[0].mxu0
  %v1613 = vpop.f32.mrb[0].mxu0
  %v1614 = vadd.f32 %v1325, %v1613
  %v1615 = vpop.f32.mrb[0].mxu0
  %1616 = vmatprep.mubr.bf16.mxu0 %v1046
  %1617 = vmatmul.mubr.bf16.gmra.mrb[0].mxu0 %v705
  %v1618 = vpop.f32.mrb[0].mxu0
  %v1619 = vadd.f32 %v1330, %v1618
  %v1620 = vpop.f32.mrb[0].mxu0
  %v1621 = vpop.f32.mrb[0].mxu0
  %v1622 = vadd.f32 %v1333, %v1621
  %v1623 = vpop.f32.mrb[0].mxu0
  %1624 = vmatprep.mubr.bf16.mxu0 %v1049
  %1625 = vmatmul.mubr.bf16.gmra.mrb[0].mxu0 %v709
  %v1626 = vpop.f32.mrb[0].mxu0
  %v1627 = vadd.f32 %v1338, %v1626
  %v1628 = vpop.f32.mrb[0].mxu0
  %v1629 = vpop.f32.mrb[0].mxu0
  %v1630 = vadd.f32 %v1341, %v1629
  %v1631 = vpop.f32.mrb[0].mxu0
  %1632 = vdwg.mxu0
  %v1633 = vtanh.pop %v1379
  %v1634 = vtanh.pop %v1382
  %v1635 = vtanh.pop %v1387
  %v1636 = vtanh.pop %v1390
  %v1637 = vtanh.pop %v1395
  %v1638 = vtanh.pop %v1398
  %v1639 = vtanh.pop %v1403
  %v1640 = vtanh.pop %v1406
  %v1641 = vtanh.pop %v1411
  %v1642 = vtanh.pop %v1414
  %v1643 = vtanh.pop %v1419
  %v1644 = vtanh.pop %v1422
  %v1645 = vtanh.pop %v1427
  %v1646 = vtanh.pop %v1430
  %v1647 = vtanh.pop %v1435
  %v1648 = vtanh.pop %v1438
  %v1649 = vtanh.pop %v1443
  %v1650 = vtanh.pop %v1446
  %v1651 = vtanh.pop %v1451
  %v1652 = vtanh.pop %v1454
  %v1653 = vtanh.pop %v1459
  %v1654 = vtanh.pop %v1462
  %v1655 = vtanh.pop %v1467
  %v1656 = vtanh.pop %v1470
  %v1657 = vtanh.pop %v1475
  %v1658 = vtanh.pop %v1478
  %v1659 = vtanh.pop %v1483
  %v1660 = vtanh.pop %v1486
  %v1661 = vtanh.pop %v1491
  %v1662 = vtanh.pop %v1494
  %v1663 = vtanh.pop %v1499
  %v1664 = vtanh.pop %v1502
  %v1665 = vtanh.pop %v1507
  %v1666 = vtanh.pop %v1510
  %v1667 = vtanh.pop %v1515
  %v1668 = vtanh.pop %v1518
  %v1669 = vtanh.pop %v1523
  %v1670 = vtanh.pop %v1526
  %v1671 = vtanh.pop %v1531
  %v1672 = vtanh.pop %v1534
  %v1673 = vtanh.pop %v1539
  %v1674 = vtanh.pop %v1542
  %v1675 = vtanh.pop %v1547
  %v1676 = vtanh.pop %v1550
  %v1677 = vtanh.pop %v1555
  %v1678 = vtanh.pop %v1558
  %v1679 = vtanh.pop %v1563
  %v1680 = vtanh.pop %v1566
  %v1681 = vtanh.pop %v1571
  %v1682 = vtanh.pop %v1574
  %v1683 = vtanh.pop %v1579
  %v1684 = vtanh.pop %v1582
  %v1685 = vtanh.pop %v1587
  %v1686 = vtanh.pop %v1590
  %v1687 = vtanh.pop %v1595
  %v1688 = vtanh.pop %v1598
  %v1689 = vtanh.pop %v1603
  %v1690 = vtanh.pop %v1606
  %v1691 = vtanh.pop %v1611
  %v1692 = vtanh.pop %v1614
  %v1693 = vtanh.pop %v1619
  %v1694 = vtanh.pop %v1622
  %v1695 = vtanh.pop %v1627
  %v1696 = vtanh.pop %v1630
  %vm1697 = vcmask 23552
  %1698 = vst.msk [vmem:[%s3] sm:$0xff] %vm1697, %v1633
  %1699 = vst.msk [vmem:[%s3 + $0x8] sm:$0xff] %vm1697, %v1634
  %1700 = vst.msk [vmem:[%s3 + $0x10] sm:$0xff] %vm1697, %v1635
  %1701 = vst.msk [vmem:[%s3 + $0x18] sm:$0xff] %vm1697, %v1636
  %1702 = vst.msk [vmem:[%s3 + $0x20] sm:$0xff] %vm1697, %v1637
  %1703 = vst.msk [vmem:[%s3 + $0x28] sm:$0xff] %vm1697, %v1638
  %1704 = vst.msk [vmem:[%s3 + $0x30] sm:$0xff] %vm1697, %v1639
  %1705 = vst.msk [vmem:[%s3 + $0x38] sm:$0xff] %vm1697, %v1640
  %1706 = vst.msk [vmem:[%s3 + $0x40] sm:$0xff] %vm1697, %v1641
  %1707 = vst.msk [vmem:[%s3 + $0x48] sm:$0xff] %vm1697, %v1642
  %1708 = vst.msk [vmem:[%s3 + $0x50] sm:$0xff] %vm1697, %v1643
  %1709 = vst.msk [vmem:[%s3 + $0x58] sm:$0xff] %vm1697, %v1644
  %1710 = vst.msk [vmem:[%s3 + $0x60] sm:$0xff] %vm1697, %v1645
  %1711 = vst.msk [vmem:[%s3 + $0x68] sm:$0xff] %vm1697, %v1646
  %1712 = vst.msk [vmem:[%s3 + $0x70] sm:$0xff] %vm1697, %v1647
  %1713 = vst.msk [vmem:[%s3 + $0x78] sm:$0xff] %vm1697, %v1648
  %1714 = vst.msk [vmem:[%s3 + $0x80] sm:$0xff] %vm1697, %v1649
  %1715 = vst.msk [vmem:[%s3 + $0x88] sm:$0xff] %vm1697, %v1650
  %1716 = vst.msk [vmem:[%s3 + $0x90] sm:$0xff] %vm1697, %v1651
  %1717 = vst.msk [vmem:[%s3 + $0x98] sm:$0xff] %vm1697, %v1652
  %1718 = vst.msk [vmem:[%s3 + $0xa0] sm:$0xff] %vm1697, %v1653
  %1719 = vst.msk [vmem:[%s3 + $0xa8] sm:$0xff] %vm1697, %v1654
  %1720 = vst.msk [vmem:[%s3 + $0xb0] sm:$0xff] %vm1697, %v1655
  %1721 = vst.msk [vmem:[%s3 + $0xb8] sm:$0xff] %vm1697, %v1656
  %1722 = vst.msk [vmem:[%s3 + $0xc0] sm:$0xff] %vm1697, %v1657
  %1723 = vst.msk [vmem:[%s3 + $0xc8] sm:$0xff] %vm1697, %v1658
  %1724 = vst.msk [vmem:[%s3 + $0xd0] sm:$0xff] %vm1697, %v1659
  %1725 = vst.msk [vmem:[%s3 + $0xd8] sm:$0xff] %vm1697, %v1660
  %1726 = vst.msk [vmem:[%s3 + $0xe0] sm:$0xff] %vm1697, %v1661
  %1727 = vst.msk [vmem:[%s3 + $0xe8] sm:$0xff] %vm1697, %v1662
  %1728 = vst.msk [vmem:[%s3 + $0xf0] sm:$0xff] %vm1697, %v1663
  %1729 = vst.msk [vmem:[%s3 + $0xf8] sm:$0xff] %vm1697, %v1664
  %1730 = vst.msk [vmem:[%s3 + $0x100] sm:$0xff] %vm1697, %v1665
  %1731 = vst.msk [vmem:[%s3 + $0x108] sm:$0xff] %vm1697, %v1666
  %1732 = vst.msk [vmem:[%s3 + $0x110] sm:$0xff] %vm1697, %v1667
  %1733 = vst.msk [vmem:[%s3 + $0x118] sm:$0xff] %vm1697, %v1668
  %1734 = vst.msk [vmem:[%s3 + $0x120] sm:$0xff] %vm1697, %v1669
  %1735 = vst.msk [vmem:[%s3 + $0x128] sm:$0xff] %vm1697, %v1670
  %1736 = vst.msk [vmem:[%s3 + $0x130] sm:$0xff] %vm1697, %v1671
  %1737 = vst.msk [vmem:[%s3 + $0x138] sm:$0xff] %vm1697, %v1672
  %1738 = vst.msk [vmem:[%s3 + $0x140] sm:$0xff] %vm1697, %v1673
  %1739 = vst.msk [vmem:[%s3 + $0x148] sm:$0xff] %vm1697, %v1674
  %1740 = vst.msk [vmem:[%s3 + $0x150] sm:$0xff] %vm1697, %v1675
  %1741 = vst.msk [vmem:[%s3 + $0x158] sm:$0xff] %vm1697, %v1676
  %1742 = vst.msk [vmem:[%s3 + $0x160] sm:$0xff] %vm1697, %v1677
  %1743 = vst.msk [vmem:[%s3 + $0x168] sm:$0xff] %vm1697, %v1678
  %1744 = vst.msk [vmem:[%s3 + $0x170] sm:$0xff] %vm1697, %v1679
  %1745 = vst.msk [vmem:[%s3 + $0x178] sm:$0xff] %vm1697, %v1680
  %1746 = vst.msk [vmem:[%s3 + $0x180] sm:$0xff] %vm1697, %v1681
  %1747 = vst.msk [vmem:[%s3 + $0x188] sm:$0xff] %vm1697, %v1682
  %1748 = vst.msk [vmem:[%s3 + $0x190] sm:$0xff] %vm1697, %v1683
  %1749 = vst.msk [vmem:[%s3 + $0x198] sm:$0xff] %vm1697, %v1684
  %1750 = vst.msk [vmem:[%s3 + $0x1a0] sm:$0xff] %vm1697, %v1685
  %1751 = vst.msk [vmem:[%s3 + $0x1a8] sm:$0xff] %vm1697, %v1686
  %1752 = vst.msk [vmem:[%s3 + $0x1b0] sm:$0xff] %vm1697, %v1687
  %1753 = vst.msk [vmem:[%s3 + $0x1b8] sm:$0xff] %vm1697, %v1688
  %1754 = vst.msk [vmem:[%s3 + $0x1c0] sm:$0xff] %vm1697, %v1689
  %1755 = vst.msk [vmem:[%s3 + $0x1c8] sm:$0xff] %vm1697, %v1690
  %1756 = vst.msk [vmem:[%s3 + $0x1d0] sm:$0xff] %vm1697, %v1691
  %1757 = vst.msk [vmem:[%s3 + $0x1d8] sm:$0xff] %vm1697, %v1692
  %1758 = vst.msk [vmem:[%s3 + $0x1e0] sm:$0xff] %vm1697, %v1693
  %1759 = vst.msk [vmem:[%s3 + $0x1e8] sm:$0xff] %vm1697, %v1694
  %1760 = vst.msk [vmem:[%s3 + $0x1f0] sm:$0xff] %vm1697, %v1695
  %1761 = vst.msk [vmem:[%s3 + $0x1f8] sm:$0xff] %vm1697, %v1696
  // Predicated region
  $region14: #{global_generator_forward.37} parent=0 // pred_check
    _
  $region15: #{global_generator_forward.37} parent=0 // pred_check_branch
    %1763 = sbr.rel (0) target = $region17
  $region16: #{global_generator_forward.37} parent=0 // pred_region
    _
  $region17: #{global_generator_forward.37} parent=0 // pred_fallthru
    _
  // Predicated region
  $region18: #{global_generator_forward.37} parent=0 // pred_check
    _
  $region19: #{global_generator_forward.37} parent=0 // pred_check_branch
    %1765 = sbr.rel (0) target = $region21
  $region20: #{global_generator_forward.37} parent=0 // pred_region
    _
  $region21: #{global_generator_forward.37} parent=0 // pred_fallthru
    _

</llo_original>
